<compile_context>
chip_gen: v7x
topology: tpu7x:2x2x1
jax: 0.10.0
libtpu: 0.0.40
codegen_flags: <defaults>
</compile_context>

<pallas_src>
import jax
import jax.numpy as jnp
import numpy as np
from jax.experimental import pallas as pl
from jax.experimental.pallas import tpu as pltpu

MS_DILATIONS = (6, 12, 18)   # MSAtt dilated depthwise convs (padding == dilation)


def _round_up(v, m):
    return ((v + m - 1) // m) * m if m > 0 else v


def _build_taps(H, W):
    """Depthwise taps that can touch the image, per branch.

    Returns (sa_taps, ms_taps): lists of (dh, dw, weight_row).  Taps whose read
    window lies entirely in the zero halo (|dh| >= H or |dw| >= W) contribute
    exactly zero and are pruned at trace time.
    """
    sa_taps, ms_taps = [], []
    for kh in range(3):
        for kw in range(3):
            dh, dw = kh - 1, kw - 1
            if abs(dh) < H and abs(dw) < W:
                sa_taps.append((dh, dw, kh * 3 + kw))
    for di, d in enumerate(MS_DILATIONS):
        for kh in range(3):
            for kw in range(3):
                dh, dw = (kh - 1) * d, (kw - 1) * d
                if abs(dh) < H and abs(dw) < W:
                    ms_taps.append((dh, dw, di * 9 + kh * 3 + kw))
    return sa_taps, ms_taps


def _make_kernel(H, W, C, pad_t, padl_c, sa_taps, ms_taps):
    WC = W * C

    def dw_pass(ypad_ref, taps, w_all):
        """Shifted-window depthwise MACs in the flattened (H, W*C) layout.

        Taps are grouped by row offset (slab loaded once per group); the width
        shift is a static in-register lane slice of the loaded slab.
        """
        acc = jnp.zeros((H, WC), jnp.float32)
        by_dh = {}
        for t in taps:
            by_dh.setdefault(t[0], []).append(t)
        for dh in sorted(by_dh):
            slab = ypad_ref[pad_t + dh:pad_t + dh + H, :]        # (H, WPC)
            for (_, dw, row) in by_dh[dh]:
                l0 = padl_c + dw * C
                acc = acc + slab[:, l0:l0 + WC] * w_all[row:row + 1, :]
        return acc

    def kernel(x_ref, p1w_ref, p1b_ref, sadw_ref, sadwb_ref, sared_ref, sab_ref,
               msdw_ref, msc1_ref, msb_ref, p2w_ref, p2b_ref, o_ref, ypad_ref):
        # x_ref:    (1, H, W*C)      lane-dense input block (also the residual)
        # p1w_ref:  (W*C, W*C)       proj_1 1x1 conv as block-diag matmul weight
        # p1b_ref:  (1, W*C)         proj_1 bias tiled per pixel
        # sadw_ref: (9, W*C)         SA depthwise 3x3 weights, tiled per pixel
        # sadwb_ref:(1, W*C)         SA depthwise bias tiled
        # sared_ref:(W*C, W*C)       SA 1x1->1ch reduce + per-pixel broadcast matrix
        # sab_ref:  (1, W*C)         SA 1x1 bias broadcast
        # msdw_ref: (27, W*C)        MSAtt depthwise weights [d, kh, kw] tiled
        # msc1_ref: (W*C, W*C)       MSAtt 1x1 conv as block-diag matmul weight
        # msb_ref:  (1, W*C)         MSAtt 1x1 bias (dw biases folded in), tiled
        # p2w_ref:  (2*W*C, W*C)     proj_2 over the concat, block-diag halves stacked
        # p2b_ref:  (1, W*C)
        # o_ref:    (1, H, W*C)
        # ypad_ref: (Hp, WPC)        zero-padded post-ReLU activation (VMEM scratch)
        xin = x_ref[0].astype(jnp.float32)                       # (H, W*C), dense

        # ---- proj_1 (per-pixel 1x1 conv as block-diag MXU matmul) + ReLU.
        y = jnp.maximum(
            jnp.dot(xin, p1w_ref[...], preferred_element_type=jnp.float32)
            + p1b_ref[...], 0.0)

        # ---- Zero-padded activation lives only in the (dense) VMEM scratch.
        #      Re-zeroing the whole dense scratch is ~Hp*WPC/1024 vector stores
        #      per image (negligible) and keeps the halo valid on every core.
        ypad_ref[...] = jnp.zeros(ypad_ref.shape, jnp.float32)
        ypad_ref[pad_t:pad_t + H, padl_c:padl_c + WC] = y        # aligned interior

        # ---- Pass 1: SpatialAttention branch, consumed immediately.
        xd = dw_pass(ypad_ref, sa_taps, sadw_ref[...]) + sadwb_ref[...]
        logits = (jnp.dot(xd, sared_ref[...], preferred_element_type=jnp.float32)
                  + sab_ref[...])
        gate = pl.reciprocal(1.0 + jnp.exp(-logits), approx=True)
        xdw = xd * gate

        # ---- Pass 2: MSAtt branch (dilated depthwise sum -> 1x1 channel mix).
        acc_ms = dw_pass(ypad_ref, ms_taps, msdw_ref[...])
        attn = (jnp.dot(acc_ms, msc1_ref[...], preferred_element_type=jnp.float32)
                + msb_ref[...])
        y_int = ypad_ref[pad_t:pad_t + H, padl_c:padl_c + WC]    # aligned re-read of y
        xsg = y_int * attn

        # ---- proj_2 over concat([xdw, xsg]) as one fused matmul, + residual.
        cat = jnp.concatenate([xdw, xsg], axis=1)                # (H, 2*W*C)
        out = (jnp.dot(cat, p2w_ref[...], preferred_element_type=jnp.float32)
               + p2b_ref[...] + x_ref[0].astype(jnp.float32))
        o_ref[0] = out.astype(o_ref.dtype)                       # dense, unmasked store

    return kernel


def ssa_forward(x, params):
    """x: (N, H, W, C) float32 NHWC.  Returns (N, H, W, C)."""
    (p1w, p1b, sa_dw_w, sa_dw_b, sa_c1_w, sa_c1_b,
     ms_dw_w, ms_dw_b, ms_c1_w, ms_c1_b, p2w, p2b) = params
    N, H, W, C = x.shape
    WC = W * C
    f32 = jnp.float32

    # --- trace-time tap pruning / scratch geometry (aligned halos) ----------
    sa_taps, ms_taps = _build_taps(H, W)
    all_taps = sa_taps + ms_taps
    max_dh = max((abs(t[0]) for t in all_taps), default=0)
    max_dw = max((abs(t[1]) for t in all_taps), default=0)
    pad_t = _round_up(max_dh, 8)             # sublane-aligned interior row start
    pad_b = _round_up(max_dh, 8)
    padl_c = _round_up(max_dw * C, 128)      # lane-aligned interior window start
    padr_c = _round_up(max_dw * C, 128)
    Hp = pad_t + H + pad_b
    WPC = padl_c + WC + padr_c

    # --- host-side parameter folding (tiny, one-off) ------------------------
    eye = jnp.eye(W, dtype=f32)

    def bdiag(w_cc):                         # per-pixel 1x1 conv -> block-diag weight
        return jnp.kron(eye, w_cc.astype(f32))

    def tile_c(v_c):                         # per-channel vector -> per-lane row
        return jnp.tile(v_c.astype(f32).reshape(1, C), (1, W)).reshape(1, WC)

    p1w_bd = bdiag(p1w)                                               # (WC, WC)
    p1b_t = tile_c(p1b)
    sadw_t = jnp.tile(sa_dw_w.astype(f32).reshape(9, C), (1, W))      # (9, WC)
    sadwb_t = tile_c(sa_dw_b)
    # SA 1x1 -> 1 channel, fused with the per-pixel broadcast of the gate logit.
    sa_red = bdiag(jnp.outer(sa_c1_w.astype(f32), jnp.ones((C,), f32)))
    sab_t = jnp.full((1, WC), sa_c1_b, f32)
    msdw_t = jnp.tile(ms_dw_w.astype(f32).reshape(27, C), (1, W))     # (27, WC)
    msc1_bd = bdiag(ms_c1_w)
    ms_b_t = tile_c(ms_c1_b + ms_dw_b.sum(axis=0) @ ms_c1_w)          # fold dw biases
    p2w_bd = jnp.concatenate([bdiag(p2w[:C]), bdiag(p2w[C:])], axis=0)  # (2*WC, WC)
    p2b_t = tile_c(p2b)

    consts = (p1w_bd, p1b_t, sadw_t, sadwb_t, sa_red, sab_t,
              msdw_t, msc1_bd, ms_b_t, p2w_bd, p2b_t)

    def _const(a):
        nd = a.ndim
        return pl.BlockSpec(a.shape, lambda n, _nd=nd: (0,) * _nd)

    x_flat = x.reshape(N, H, WC)             # lane-dense HBM-facing layout (free)
    kernel = _make_kernel(H, W, C, pad_t, padl_c, sa_taps, ms_taps)

    out_flat = pl.pallas_call(
        kernel,
        out_shape=jax.ShapeDtypeStruct((N, H, WC), x.dtype),
        grid=(N,),
        in_specs=[pl.BlockSpec((1, H, WC), lambda n: (n, 0, 0))]
                 + [_const(a) for a in consts],
        out_specs=pl.BlockSpec((1, H, WC), lambda n: (n, 0, 0)),
        scratch_shapes=[pltpu.VMEM((Hp, WPC), jnp.float32)],
        compiler_params=pltpu.CompilerParams(dimension_semantics=("parallel",)),
    )(x_flat, *consts)
    return out_flat.reshape(N, H, W, C)


def ref_ssa(x, params):
    """Pure-JAX reference (NHWC) mirroring the PyTorch SSA forward."""
    (p1w, p1b, sa_dw_w, sa_dw_b, sa_c1_w, sa_c1_b,
     ms_dw_w, ms_dw_b, ms_c1_w, ms_c1_b, p2w, p2b) = params
    N, H, W, C = x.shape

    def dwconv(inp, k_hwc, dil):
        k = k_hwc.reshape(3, 3, 1, C)            # HWIO depthwise (groups=C)
        return jax.lax.conv_general_dilated(
            inp, k, window_strides=(1, 1), padding=[(dil, dil), (dil, dil)],
            rhs_dilation=(dil, dil),
            dimension_numbers=("NHWC", "HWIO", "NHWC"),
            feature_group_count=C)

    y = jnp.maximum(jnp.einsum("nhwc,cd->nhwd", x, p1w) + p1b, 0.0)

    # SpatialAttention
    xd = dwconv(y, sa_dw_w, 1) + sa_dw_b
    logits = jnp.einsum("nhwc,c->nhw", xd, sa_c1_w)[..., None] + sa_c1_b
    xdw = xd * jax.nn.sigmoid(logits)

    # MSAtt
    attn = jnp.zeros_like(y)
    for i, d in enumerate(MS_DILATIONS):
        attn = attn + dwconv(y, ms_dw_w[i], d) + ms_dw_b[i]
    attn = jnp.einsum("nhwc,cd->nhwd", attn, ms_c1_w) + ms_c1_b
    xsg = y * attn

    cat = jnp.concatenate([xdw, xsg], axis=-1)
    out = jnp.einsum("nhwc,cd->nhwd", cat, p2w) + p2b
    return out + x


if __name__ == "__main__":
    N, H, W, C = 2, 16, 16, 16   # d_model = 16, NHWC

    key = jax.random.PRNGKey(0)
    keys = jax.random.split(key, 13)
    s = 0.1

    x = jax.random.normal(keys[0], (N, H, W, C), dtype=jnp.float32)

    p1w = jax.random.normal(keys[1], (C, C), jnp.float32) * s          # proj_1 [cin, cout]
    p1b = jax.random.normal(keys[2], (C,), jnp.float32) * s
    sa_dw_w = jax.random.normal(keys[3], (3, 3, C), jnp.float32) * s   # SA depthwise
    sa_dw_b = jax.random.normal(keys[4], (C,), jnp.float32) * s
    sa_c1_w = jax.random.normal(keys[5], (C,), jnp.float32) * s        # SA 1x1 -> 1 channel
    sa_c1_b = jax.random.normal(keys[6], (), jnp.float32) * s
    ms_dw_w = jax.random.normal(keys[7], (3, 3, 3, C), jnp.float32) * s  # MSAtt depthwise
    ms_dw_b = jax.random.normal(keys[8], (3, C), jnp.float32) * s
    ms_c1_w = jax.random.normal(keys[9], (C, C), jnp.float32) * s      # MSAtt 1x1 [cin, cout]
    ms_c1_b = jax.random.normal(keys[10], (C,), jnp.float32) * s
    p2w = jax.random.normal(keys[11], (2 * C, C), jnp.float32) * s     # proj_2 [2*cin, cout]
    p2b = jax.random.normal(keys[12], (C,), jnp.float32) * s

    params = (p1w, p1b, sa_dw_w, sa_dw_b, sa_c1_w, sa_c1_b,
              ms_dw_w, ms_dw_b, ms_c1_w, ms_c1_b, p2w, p2b)

    out = jax.block_until_ready(ssa_forward(x, params))
    ref = jax.block_until_ready(ref_ssa(x, params))
    np.testing.assert_allclose(np.asarray(out), np.asarray(ref), rtol=1e-3, atol=1e-3)

    print("KERNEL_OK")
</pallas_src>

<mosaic_0001>
module attributes {stable_mosaic.version = 11 : i64} {
  func.func @kernel(%arg0: i32, %arg1: memref<1x16x256xf32, #tpu.memory_space<vmem>>, %arg2: memref<256x256xf32, #tpu.memory_space<vmem>>, %arg3: memref<1x256xf32, #tpu.memory_space<vmem>>, %arg4: memref<9x256xf32, #tpu.memory_space<vmem>>, %arg5: memref<1x256xf32, #tpu.memory_space<vmem>>, %arg6: memref<256x256xf32, #tpu.memory_space<vmem>>, %arg7: memref<1x256xf32, #tpu.memory_space<vmem>>, %arg8: memref<27x256xf32, #tpu.memory_space<vmem>>, %arg9: memref<256x256xf32, #tpu.memory_space<vmem>>, %arg10: memref<1x256xf32, #tpu.memory_space<vmem>>, %arg11: memref<512x256xf32, #tpu.memory_space<vmem>>, %arg12: memref<1x256xf32, #tpu.memory_space<vmem>>, %arg13: memref<1x16x256xf32, #tpu.memory_space<vmem>>, %arg14: memref<48x768xf32, #tpu.memory_space<vmem>>) attributes {dimension_semantics = [#tpu.dimension_semantics<parallel>], iteration_bounds = array<i64: 2>, scalar_prefetch = 0 : i64, scratch_operands = 1 : i64, tpu.core_type = #tpu.core_type<tc>, window_params = [{transform_indices = @transform_0, window_bounds = array<i64: 1, 16, 256>}, {pipeline_mode = #tpu.pipeline_mode<synchronous>, transform_indices = @transform_1, window_bounds = array<i64: 256, 256>}, {pipeline_mode = #tpu.pipeline_mode<synchronous>, transform_indices = @transform_2, window_bounds = array<i64: 1, 256>}, {pipeline_mode = #tpu.pipeline_mode<synchronous>, transform_indices = @transform_3, window_bounds = array<i64: 9, 256>}, {pipeline_mode = #tpu.pipeline_mode<synchronous>, transform_indices = @transform_4, window_bounds = array<i64: 1, 256>}, {pipeline_mode = #tpu.pipeline_mode<synchronous>, transform_indices = @transform_5, window_bounds = array<i64: 256, 256>}, {pipeline_mode = #tpu.pipeline_mode<synchronous>, transform_indices = @transform_6, window_bounds = array<i64: 1, 256>}, {pipeline_mode = #tpu.pipeline_mode<synchronous>, transform_indices = @transform_7, window_bounds = array<i64: 27, 256>}, {pipeline_mode = #tpu.pipeline_mode<synchronous>, transform_indices = @transform_8, window_bounds = array<i64: 256, 256>}, {pipeline_mode = #tpu.pipeline_mode<synchronous>, transform_indices = @transform_9, window_bounds = array<i64: 1, 256>}, {pipeline_mode = #tpu.pipeline_mode<synchronous>, transform_indices = @transform_10, window_bounds = array<i64: 512, 256>}, {pipeline_mode = #tpu.pipeline_mode<synchronous>, transform_indices = @transform_11, window_bounds = array<i64: 1, 256>}, {transform_indices = @transform_12, window_bounds = array<i64: 1, 16, 256>}]} {
    %c0 = arith.constant 0 : index
    %c0_0 = arith.constant 0 : index
    %c0_1 = arith.constant 0 : index
    %0 = vector.load %arg1[%c0, %c0_0, %c0_1] : memref<1x16x256xf32, #tpu.memory_space<vmem>>, vector<1x16x256xf32>
    %1 = vector.shape_cast %0 : vector<1x16x256xf32> to vector<16x256xf32>
    %c0_2 = arith.constant 0 : index
    %c0_3 = arith.constant 0 : index
    %2 = vector.load %arg2[%c0_2, %c0_3] : memref<256x256xf32, #tpu.memory_space<vmem>>, vector<256x256xf32>
    %cst = arith.constant dense<0.000000e+00> : vector<16x256xf32>
    %3 = tpu.matmul %1, %2, %cst {dimension_numbers = #tpu.dot_dimension_numbers<[1], [0], [0], [1], [0, 0, 1, 1], [], []>} : vector<16x256xf32>, vector<256x256xf32>, vector<16x256xf32> -> vector<16x256xf32>
    %c0_4 = arith.constant 0 : index
    %c0_5 = arith.constant 0 : index
    %4 = vector.load %arg3[%c0_4, %c0_5] : memref<1x256xf32, #tpu.memory_space<vmem>>, vector<1x256xf32>
    %5 = vector.broadcast %4 : vector<1x256xf32> to vector<16x256xf32>
    %6 = arith.addf %3, %5 : vector<16x256xf32>
    %cst_6 = arith.constant 0.000000e+00 : f32
    %7 = vector.broadcast %cst_6 : f32 to vector<16x256xf32>
    %8 = arith.maximumf %6, %7 : vector<16x256xf32>
    %cst_7 = arith.constant 0.000000e+00 : f32
    %9 = vector.broadcast %cst_7 : f32 to vector<48x768xf32>
    %c0_8 = arith.constant 0 : index
    %c0_9 = arith.constant 0 : index
    %10 = vector.load %arg14[%c0_8, %c0_9] : memref<48x768xf32, #tpu.memory_space<vmem>>, vector<48x768xf32>
    tpu.vector_store %arg14[%c0_8, %c0_9], %9 {strides = array<i32>} : memref<48x768xf32, #tpu.memory_space<vmem>>, vector<48x768xf32>,
    %c16 = arith.constant 16 : index
    %c256 = arith.constant 256 : index
    %11 = vector.load %arg14[%c16, %c256] : memref<48x768xf32, #tpu.memory_space<vmem>>, vector<16x256xf32>
    tpu.vector_store %arg14[%c16, %c256], %8 {strides = array<i32>} : memref<48x768xf32, #tpu.memory_space<vmem>>, vector<16x256xf32>,
    %c0_10 = arith.constant 0 : index
    %c0_11 = arith.constant 0 : index
    %12 = vector.load %arg4[%c0_10, %c0_11] : memref<9x256xf32, #tpu.memory_space<vmem>>, vector<9x256xf32>
    %cst_12 = arith.constant 0.000000e+00 : f32
    %13 = vector.broadcast %cst_12 : f32 to vector<16x256xf32>
    %c15 = arith.constant 15 : index
    %c0_13 = arith.constant 0 : index
    %14 = vector.load %arg14[%c15, %c0_13] : memref<48x768xf32, #tpu.memory_space<vmem>>, vector<16x768xf32>
    %15 = vector.extract_strided_slice %14 {offsets = [0, 240], sizes = [16, 256], strides = [1, 1]} : vector<16x768xf32> to vector<16x256xf32>
    %16 = vector.extract_strided_slice %12 {offsets = [0, 0], sizes = [1, 256], strides = [1, 1]} : vector<9x256xf32> to vector<1x256xf32>
    %17 = vector.broadcast %16 : vector<1x256xf32> to vector<16x256xf32>
    %18 = arith.mulf %15, %17 : vector<16x256xf32>
    %19 = arith.addf %13, %18 : vector<16x256xf32>
    %20 = vector.extract_strided_slice %14 {offsets = [0, 256], sizes = [16, 256], strides = [1, 1]} : vector<16x768xf32> to vector<16x256xf32>
    %21 = vector.extract_strided_slice %12 {offsets = [1, 0], sizes = [1, 256], strides = [1, 1]} : vector<9x256xf32> to vector<1x256xf32>
    %22 = vector.broadcast %21 : vector<1x256xf32> to vector<16x256xf32>
    %23 = arith.mulf %20, %22 : vector<16x256xf32>
    %24 = arith.addf %19, %23 : vector<16x256xf32>
    %25 = vector.extract_strided_slice %14 {offsets = [0, 272], sizes = [16, 256], strides = [1, 1]} : vector<16x768xf32> to vector<16x256xf32>
    %26 = vector.extract_strided_slice %12 {offsets = [2, 0], sizes = [1, 256], strides = [1, 1]} : vector<9x256xf32> to vector<1x256xf32>
    %27 = vector.broadcast %26 : vector<1x256xf32> to vector<16x256xf32>
    %28 = arith.mulf %25, %27 : vector<16x256xf32>
    %29 = arith.addf %24, %28 : vector<16x256xf32>
    %c16_14 = arith.constant 16 : index
    %c0_15 = arith.constant 0 : index
    %30 = vector.load %arg14[%c16_14, %c0_15] : memref<48x768xf32, #tpu.memory_space<vmem>>, vector<16x768xf32>
    %31 = vector.extract_strided_slice %30 {offsets = [0, 240], sizes = [16, 256], strides = [1, 1]} : vector<16x768xf32> to vector<16x256xf32>
    %32 = vector.extract_strided_slice %12 {offsets = [3, 0], sizes = [1, 256], strides = [1, 1]} : vector<9x256xf32> to vector<1x256xf32>
    %33 = vector.broadcast %32 : vector<1x256xf32> to vector<16x256xf32>
    %34 = arith.mulf %31, %33 : vector<16x256xf32>
    %35 = arith.addf %29, %34 : vector<16x256xf32>
    %36 = vector.extract_strided_slice %30 {offsets = [0, 256], sizes = [16, 256], strides = [1, 1]} : vector<16x768xf32> to vector<16x256xf32>
    %37 = vector.extract_strided_slice %12 {offsets = [4, 0], sizes = [1, 256], strides = [1, 1]} : vector<9x256xf32> to vector<1x256xf32>
    %38 = vector.broadcast %37 : vector<1x256xf32> to vector<16x256xf32>
    %39 = arith.mulf %36, %38 : vector<16x256xf32>
    %40 = arith.addf %35, %39 : vector<16x256xf32>
    %41 = vector.extract_strided_slice %30 {offsets = [0, 272], sizes = [16, 256], strides = [1, 1]} : vector<16x768xf32> to vector<16x256xf32>
    %42 = vector.extract_strided_slice %12 {offsets = [5, 0], sizes = [1, 256], strides = [1, 1]} : vector<9x256xf32> to vector<1x256xf32>
    %43 = vector.broadcast %42 : vector<1x256xf32> to vector<16x256xf32>
    %44 = arith.mulf %41, %43 : vector<16x256xf32>
    %45 = arith.addf %40, %44 : vector<16x256xf32>
    %c17 = arith.constant 17 : index
    %c0_16 = arith.constant 0 : index
    %46 = vector.load %arg14[%c17, %c0_16] : memref<48x768xf32, #tpu.memory_space<vmem>>, vector<16x768xf32>
    %47 = vector.extract_strided_slice %46 {offsets = [0, 240], sizes = [16, 256], strides = [1, 1]} : vector<16x768xf32> to vector<16x256xf32>
    %48 = vector.extract_strided_slice %12 {offsets = [6, 0], sizes = [1, 256], strides = [1, 1]} : vector<9x256xf32> to vector<1x256xf32>
    %49 = vector.broadcast %48 : vector<1x256xf32> to vector<16x256xf32>
    %50 = arith.mulf %47, %49 : vector<16x256xf32>
    %51 = arith.addf %45, %50 : vector<16x256xf32>
    %52 = vector.extract_strided_slice %46 {offsets = [0, 256], sizes = [16, 256], strides = [1, 1]} : vector<16x768xf32> to vector<16x256xf32>
    %53 = vector.extract_strided_slice %12 {offsets = [7, 0], sizes = [1, 256], strides = [1, 1]} : vector<9x256xf32> to vector<1x256xf32>
    %54 = vector.broadcast %53 : vector<1x256xf32> to vector<16x256xf32>
    %55 = arith.mulf %52, %54 : vector<16x256xf32>
    %56 = arith.addf %51, %55 : vector<16x256xf32>
    %57 = vector.extract_strided_slice %46 {offsets = [0, 272], sizes = [16, 256], strides = [1, 1]} : vector<16x768xf32> to vector<16x256xf32>
    %58 = vector.extract_strided_slice %12 {offsets = [8, 0], sizes = [1, 256], strides = [1, 1]} : vector<9x256xf32> to vector<1x256xf32>
    %59 = vector.broadcast %58 : vector<1x256xf32> to vector<16x256xf32>
    %60 = arith.mulf %57, %59 : vector<16x256xf32>
    %61 = arith.addf %56, %60 : vector<16x256xf32>
    %c0_17 = arith.constant 0 : index
    %c0_18 = arith.constant 0 : index
    %62 = vector.load %arg5[%c0_17, %c0_18] : memref<1x256xf32, #tpu.memory_space<vmem>>, vector<1x256xf32>
    %63 = vector.broadcast %62 : vector<1x256xf32> to vector<16x256xf32>
    %64 = arith.addf %61, %63 : vector<16x256xf32>
    %c0_19 = arith.constant 0 : index
    %c0_20 = arith.constant 0 : index
    %65 = vector.load %arg6[%c0_19, %c0_20] : memref<256x256xf32, #tpu.memory_space<vmem>>, vector<256x256xf32>
    %cst_21 = arith.constant dense<0.000000e+00> : vector<16x256xf32>
    %66 = tpu.matmul %64, %65, %cst_21 {dimension_numbers = #tpu.dot_dimension_numbers<[1], [0], [0], [1], [0, 0, 1, 1], [], []>} : vector<16x256xf32>, vector<256x256xf32>, vector<16x256xf32> -> vector<16x256xf32>
    %c0_22 = arith.constant 0 : index
    %c0_23 = arith.constant 0 : index
    %67 = vector.load %arg7[%c0_22, %c0_23] : memref<1x256xf32, #tpu.memory_space<vmem>>, vector<1x256xf32>
    %68 = vector.broadcast %67 : vector<1x256xf32> to vector<16x256xf32>
    %69 = arith.addf %66, %68 : vector<16x256xf32>
    %cst_24 = arith.constant 0.000000e+00 : f32
    %70 = vector.broadcast %cst_24 : f32 to vector<16x256xf32>
    %71 = arith.subf %70, %69 : vector<16x256xf32>
    %72 = math.exp %71 : vector<16x256xf32>
    %cst_25 = arith.constant 1.000000e+00 : f32
    %73 = vector.broadcast %cst_25 : f32 to vector<16x256xf32>
    %74 = arith.addf %73, %72 : vector<16x256xf32>
    %75 = tpu.reciprocal %74 {approx = true} : vector<16x256xf32> -> vector<16x256xf32>
    %76 = arith.mulf %64, %75 : vector<16x256xf32>
    %c0_26 = arith.constant 0 : index
    %c0_27 = arith.constant 0 : index
    %77 = vector.load %arg8[%c0_26, %c0_27] : memref<27x256xf32, #tpu.memory_space<vmem>>, vector<27x256xf32>
    %cst_28 = arith.constant 0.000000e+00 : f32
    %78 = vector.broadcast %cst_28 : f32 to vector<16x256xf32>
    %c4 = arith.constant 4 : index
    %c0_29 = arith.constant 0 : index
    %79 = vector.load %arg14[%c4, %c0_29] : memref<48x768xf32, #tpu.memory_space<vmem>>, vector<16x768xf32>
    %80 = vector.extract_strided_slice %79 {offsets = [0, 64], sizes = [16, 256], strides = [1, 1]} : vector<16x768xf32> to vector<16x256xf32>
    %81 = vector.extract_strided_slice %77 {offsets = [9, 0], sizes = [1, 256], strides = [1, 1]} : vector<27x256xf32> to vector<1x256xf32>
    %82 = vector.broadcast %81 : vector<1x256xf32> to vector<16x256xf32>
    %83 = arith.mulf %80, %82 : vector<16x256xf32>
    %84 = arith.addf %78, %83 : vector<16x256xf32>
    %85 = vector.extract_strided_slice %79 {offsets = [0, 256], sizes = [16, 256], strides = [1, 1]} : vector<16x768xf32> to vector<16x256xf32>
    %86 = vector.extract_strided_slice %77 {offsets = [10, 0], sizes = [1, 256], strides = [1, 1]} : vector<27x256xf32> to vector<1x256xf32>
    %87 = vector.broadcast %86 : vector<1x256xf32> to vector<16x256xf32>
    %88 = arith.mulf %85, %87 : vector<16x256xf32>
    %89 = arith.addf %84, %88 : vector<16x256xf32>
    %90 = vector.extract_strided_slice %79 {offsets = [0, 448], sizes = [16, 256], strides = [1, 1]} : vector<16x768xf32> to vector<16x256xf32>
    %91 = vector.extract_strided_slice %77 {offsets = [11, 0], sizes = [1, 256], strides = [1, 1]} : vector<27x256xf32> to vector<1x256xf32>
    %92 = vector.broadcast %91 : vector<1x256xf32> to vector<16x256xf32>
    %93 = arith.mulf %90, %92 : vector<16x256xf32>
    %94 = arith.addf %89, %93 : vector<16x256xf32>
    %c10 = arith.constant 10 : index
    %c0_30 = arith.constant 0 : index
    %95 = vector.load %arg14[%c10, %c0_30] : memref<48x768xf32, #tpu.memory_space<vmem>>, vector<16x768xf32>
    %96 = vector.extract_strided_slice %95 {offsets = [0, 160], sizes = [16, 256], strides = [1, 1]} : vector<16x768xf32> to vector<16x256xf32>
    %97 = vector.extract_strided_slice %77 {offsets = [0, 0], sizes = [1, 256], strides = [1, 1]} : vector<27x256xf32> to vector<1x256xf32>
    %98 = vector.broadcast %97 : vector<1x256xf32> to vector<16x256xf32>
    %99 = arith.mulf %96, %98 : vector<16x256xf32>
    %100 = arith.addf %94, %99 : vector<16x256xf32>
    %101 = vector.extract_strided_slice %95 {offsets = [0, 256], sizes = [16, 256], strides = [1, 1]} : vector<16x768xf32> to vector<16x256xf32>
    %102 = vector.extract_strided_slice %77 {offsets = [1, 0], sizes = [1, 256], strides = [1, 1]} : vector<27x256xf32> to vector<1x256xf32>
    %103 = vector.broadcast %102 : vector<1x256xf32> to vector<16x256xf32>
    %104 = arith.mulf %101, %103 : vector<16x256xf32>
    %105 = arith.addf %100, %104 : vector<16x256xf32>
    %106 = vector.extract_strided_slice %95 {offsets = [0, 352], sizes = [16, 256], strides = [1, 1]} : vector<16x768xf32> to vector<16x256xf32>
    %107 = vector.extract_strided_slice %77 {offsets = [2, 0], sizes = [1, 256], strides = [1, 1]} : vector<27x256xf32> to vector<1x256xf32>
    %108 = vector.broadcast %107 : vector<1x256xf32> to vector<16x256xf32>
    %109 = arith.mulf %106, %108 : vector<16x256xf32>
    %110 = arith.addf %105, %109 : vector<16x256xf32>
    %c16_31 = arith.constant 16 : index
    %c0_32 = arith.constant 0 : index
    %111 = vector.load %arg14[%c16_31, %c0_32] : memref<48x768xf32, #tpu.memory_space<vmem>>, vector<16x768xf32>
    %112 = vector.extract_strided_slice %111 {offsets = [0, 160], sizes = [16, 256], strides = [1, 1]} : vector<16x768xf32> to vector<16x256xf32>
    %113 = vector.extract_strided_slice %77 {offsets = [3, 0], sizes = [1, 256], strides = [1, 1]} : vector<27x256xf32> to vector<1x256xf32>
    %114 = vector.broadcast %113 : vector<1x256xf32> to vector<16x256xf32>
    %115 = arith.mulf %112, %114 : vector<16x256xf32>
    %116 = arith.addf %110, %115 : vector<16x256xf32>
    %117 = vector.extract_strided_slice %111 {offsets = [0, 256], sizes = [16, 256], strides = [1, 1]} : vector<16x768xf32> to vector<16x256xf32>
    %118 = vector.extract_strided_slice %77 {offsets = [4, 0], sizes = [1, 256], strides = [1, 1]} : vector<27x256xf32> to vector<1x256xf32>
    %119 = vector.broadcast %118 : vector<1x256xf32> to vector<16x256xf32>
    %120 = arith.mulf %117, %119 : vector<16x256xf32>
    %121 = arith.addf %116, %120 : vector<16x256xf32>
    %122 = vector.extract_strided_slice %111 {offsets = [0, 352], sizes = [16, 256], strides = [1, 1]} : vector<16x768xf32> to vector<16x256xf32>
    %123 = vector.extract_strided_slice %77 {offsets = [5, 0], sizes = [1, 256], strides = [1, 1]} : vector<27x256xf32> to vector<1x256xf32>
    %124 = vector.broadcast %123 : vector<1x256xf32> to vector<16x256xf32>
    %125 = arith.mulf %122, %124 : vector<16x256xf32>
    %126 = arith.addf %121, %125 : vector<16x256xf32>
    %127 = vector.extract_strided_slice %111 {offsets = [0, 64], sizes = [16, 256], strides = [1, 1]} : vector<16x768xf32> to vector<16x256xf32>
    %128 = vector.extract_strided_slice %77 {offsets = [12, 0], sizes = [1, 256], strides = [1, 1]} : vector<27x256xf32> to vector<1x256xf32>
    %129 = vector.broadcast %128 : vector<1x256xf32> to vector<16x256xf32>
    %130 = arith.mulf %127, %129 : vector<16x256xf32>
    %131 = arith.addf %126, %130 : vector<16x256xf32>
    %132 = vector.extract_strided_slice %111 {offsets = [0, 256], sizes = [16, 256], strides = [1, 1]} : vector<16x768xf32> to vector<16x256xf32>
    %133 = vector.extract_strided_slice %77 {offsets = [13, 0], sizes = [1, 256], strides = [1, 1]} : vector<27x256xf32> to vector<1x256xf32>
    %134 = vector.broadcast %133 : vector<1x256xf32> to vector<16x256xf32>
    %135 = arith.mulf %132, %134 : vector<16x256xf32>
    %136 = arith.addf %131, %135 : vector<16x256xf32>
    %137 = vector.extract_strided_slice %111 {offsets = [0, 448], sizes = [16, 256], strides = [1, 1]} : vector<16x768xf32> to vector<16x256xf32>
    %138 = vector.extract_strided_slice %77 {offsets = [14, 0], sizes = [1, 256], strides = [1, 1]} : vector<27x256xf32> to vector<1x256xf32>
    %139 = vector.broadcast %138 : vector<1x256xf32> to vector<16x256xf32>
    %140 = arith.mulf %137, %139 : vector<16x256xf32>
    %141 = arith.addf %136, %140 : vector<16x256xf32>
    %142 = vector.extract_strided_slice %111 {offsets = [0, 256], sizes = [16, 256], strides = [1, 1]} : vector<16x768xf32> to vector<16x256xf32>
    %143 = vector.extract_strided_slice %77 {offsets = [22, 0], sizes = [1, 256], strides = [1, 1]} : vector<27x256xf32> to vector<1x256xf32>
    %144 = vector.broadcast %143 : vector<1x256xf32> to vector<16x256xf32>
    %145 = arith.mulf %142, %144 : vector<16x256xf32>
    %146 = arith.addf %141, %145 : vector<16x256xf32>
    %c22 = arith.constant 22 : index
    %c0_33 = arith.constant 0 : index
    %147 = vector.load %arg14[%c22, %c0_33] : memref<48x768xf32, #tpu.memory_space<vmem>>, vector<16x768xf32>
    %148 = vector.extract_strided_slice %147 {offsets = [0, 160], sizes = [16, 256], strides = [1, 1]} : vector<16x768xf32> to vector<16x256xf32>
    %149 = vector.extract_strided_slice %77 {offsets = [6, 0], sizes = [1, 256], strides = [1, 1]} : vector<27x256xf32> to vector<1x256xf32>
    %150 = vector.broadcast %149 : vector<1x256xf32> to vector<16x256xf32>
    %151 = arith.mulf %148, %150 : vector<16x256xf32>
    %152 = arith.addf %146, %151 : vector<16x256xf32>
    %153 = vector.extract_strided_slice %147 {offsets = [0, 256], sizes = [16, 256], strides = [1, 1]} : vector<16x768xf32> to vector<16x256xf32>
    %154 = vector.extract_strided_slice %77 {offsets = [7, 0], sizes = [1, 256], strides = [1, 1]} : vector<27x256xf32> to vector<1x256xf32>
    %155 = vector.broadcast %154 : vector<1x256xf32> to vector<16x256xf32>
    %156 = arith.mulf %153, %155 : vector<16x256xf32>
    %157 = arith.addf %152, %156 : vector<16x256xf32>
    %158 = vector.extract_strided_slice %147 {offsets = [0, 352], sizes = [16, 256], strides = [1, 1]} : vector<16x768xf32> to vector<16x256xf32>
    %159 = vector.extract_strided_slice %77 {offsets = [8, 0], sizes = [1, 256], strides = [1, 1]} : vector<27x256xf32> to vector<1x256xf32>
    %160 = vector.broadcast %159 : vector<1x256xf32> to vector<16x256xf32>
    %161 = arith.mulf %158, %160 : vector<16x256xf32>
    %162 = arith.addf %157, %161 : vector<16x256xf32>
    %c28 = arith.constant 28 : index
    %c0_34 = arith.constant 0 : index
    %163 = vector.load %arg14[%c28, %c0_34] : memref<48x768xf32, #tpu.memory_space<vmem>>, vector<16x768xf32>
    %164 = vector.extract_strided_slice %163 {offsets = [0, 64], sizes = [16, 256], strides = [1, 1]} : vector<16x768xf32> to vector<16x256xf32>
    %165 = vector.extract_strided_slice %77 {offsets = [15, 0], sizes = [1, 256], strides = [1, 1]} : vector<27x256xf32> to vector<1x256xf32>
    %166 = vector.broadcast %165 : vector<1x256xf32> to vector<16x256xf32>
    %167 = arith.mulf %164, %166 : vector<16x256xf32>
    %168 = arith.addf %162, %167 : vector<16x256xf32>
    %169 = vector.extract_strided_slice %163 {offsets = [0, 256], sizes = [16, 256], strides = [1, 1]} : vector<16x768xf32> to vector<16x256xf32>
    %170 = vector.extract_strided_slice %77 {offsets = [16, 0], sizes = [1, 256], strides = [1, 1]} : vector<27x256xf32> to vector<1x256xf32>
    %171 = vector.broadcast %170 : vector<1x256xf32> to vector<16x256xf32>
    %172 = arith.mulf %169, %171 : vector<16x256xf32>
    %173 = arith.addf %168, %172 : vector<16x256xf32>
    %174 = vector.extract_strided_slice %163 {offsets = [0, 448], sizes = [16, 256], strides = [1, 1]} : vector<16x768xf32> to vector<16x256xf32>
    %175 = vector.extract_strided_slice %77 {offsets = [17, 0], sizes = [1, 256], strides = [1, 1]} : vector<27x256xf32> to vector<1x256xf32>
    %176 = vector.broadcast %175 : vector<1x256xf32> to vector<16x256xf32>
    %177 = arith.mulf %174, %176 : vector<16x256xf32>
    %178 = arith.addf %173, %177 : vector<16x256xf32>
    %c0_35 = arith.constant 0 : index
    %c0_36 = arith.constant 0 : index
    %179 = vector.load %arg9[%c0_35, %c0_36] : memref<256x256xf32, #tpu.memory_space<vmem>>, vector<256x256xf32>
    %cst_37 = arith.constant dense<0.000000e+00> : vector<16x256xf32>
    %180 = tpu.matmul %178, %179, %cst_37 {dimension_numbers = #tpu.dot_dimension_numbers<[1], [0], [0], [1], [0, 0, 1, 1], [], []>} : vector<16x256xf32>, vector<256x256xf32>, vector<16x256xf32> -> vector<16x256xf32>
    %c0_38 = arith.constant 0 : index
    %c0_39 = arith.constant 0 : index
    %181 = vector.load %arg10[%c0_38, %c0_39] : memref<1x256xf32, #tpu.memory_space<vmem>>, vector<1x256xf32>
    %182 = vector.broadcast %181 : vector<1x256xf32> to vector<16x256xf32>
    %183 = arith.addf %180, %182 : vector<16x256xf32>
    %c16_40 = arith.constant 16 : index
    %c256_41 = arith.constant 256 : index
    %184 = vector.load %arg14[%c16_40, %c256_41] : memref<48x768xf32, #tpu.memory_space<vmem>>, vector<16x256xf32>
    %185 = arith.mulf %184, %183 : vector<16x256xf32>
    %186 = tpu.concatenate %76, %185 in 1 : vector<16x256xf32>, vector<16x256xf32> -> vector<16x512xf32>
    %c0_42 = arith.constant 0 : index
    %c0_43 = arith.constant 0 : index
    %187 = vector.load %arg11[%c0_42, %c0_43] : memref<512x256xf32, #tpu.memory_space<vmem>>, vector<512x256xf32>
    %cst_44 = arith.constant dense<0.000000e+00> : vector<16x256xf32>
    %188 = tpu.matmul %186, %187, %cst_44 {dimension_numbers = #tpu.dot_dimension_numbers<[1], [0], [0], [1], [0, 0, 1, 1], [], []>} : vector<16x512xf32>, vector<512x256xf32>, vector<16x256xf32> -> vector<16x256xf32>
    %c0_45 = arith.constant 0 : index
    %c0_46 = arith.constant 0 : index
    %189 = vector.load %arg12[%c0_45, %c0_46] : memref<1x256xf32, #tpu.memory_space<vmem>>, vector<1x256xf32>
    %190 = vector.broadcast %189 : vector<1x256xf32> to vector<16x256xf32>
    %191 = arith.addf %188, %190 : vector<16x256xf32>
    %c0_47 = arith.constant 0 : index
    %c0_48 = arith.constant 0 : index
    %c0_49 = arith.constant 0 : index
    %192 = vector.load %arg1[%c0_47, %c0_48, %c0_49] : memref<1x16x256xf32, #tpu.memory_space<vmem>>, vector<1x16x256xf32>
    %193 = vector.shape_cast %192 : vector<1x16x256xf32> to vector<16x256xf32>
    %194 = arith.addf %191, %193 : vector<16x256xf32>
    %c0_50 = arith.constant 0 : index
    %c0_51 = arith.constant 0 : index
    %c0_52 = arith.constant 0 : index
    %195 = vector.load %arg13[%c0_50, %c0_51, %c0_52] : memref<1x16x256xf32, #tpu.memory_space<vmem>>, vector<1x16x256xf32>
    %196 = vector.shape_cast %195 : vector<1x16x256xf32> to vector<16x256xf32>
    %197 = vector.shape_cast %194 : vector<16x256xf32> to vector<1x16x256xf32>
    tpu.vector_store %arg13[%c0_50, %c0_51, %c0_52], %197 {strides = array<i32>} : memref<1x16x256xf32, #tpu.memory_space<vmem>>, vector<1x16x256xf32>,
    return
  }
  func.func @transform_0(%arg0: i32) -> (i32, i32, i32) {
    %c0_i32 = arith.constant 0 : i32
    %c0_i32_0 = arith.constant 0 : i32
    %c0_i32_1 = arith.constant 0 : i32
    return %arg0, %c0_i32, %c0_i32_0 : i32, i32, i32
  }
  func.func @transform_1(%arg0: i32) -> (i32, i32) {
    %c0_i32 = arith.constant 0 : i32
    %c0_i32_0 = arith.constant 0 : i32
    %c0_i32_1 = arith.constant 0 : i32
    return %c0_i32, %c0_i32_0 : i32, i32
  }
  func.func @transform_2(%arg0: i32) -> (i32, i32) {
    %c0_i32 = arith.constant 0 : i32
    %c0_i32_0 = arith.constant 0 : i32
    %c0_i32_1 = arith.constant 0 : i32
    return %c0_i32, %c0_i32_0 : i32, i32
  }
  func.func @transform_3(%arg0: i32) -> (i32, i32) {
    %c0_i32 = arith.constant 0 : i32
    %c0_i32_0 = arith.constant 0 : i32
    %c0_i32_1 = arith.constant 0 : i32
    return %c0_i32, %c0_i32_0 : i32, i32
  }
  func.func @transform_4(%arg0: i32) -> (i32, i32) {
    %c0_i32 = arith.constant 0 : i32
    %c0_i32_0 = arith.constant 0 : i32
    %c0_i32_1 = arith.constant 0 : i32
    return %c0_i32, %c0_i32_0 : i32, i32
  }
  func.func @transform_5(%arg0: i32) -> (i32, i32) {
    %c0_i32 = arith.constant 0 : i32
    %c0_i32_0 = arith.constant 0 : i32
    %c0_i32_1 = arith.constant 0 : i32
    return %c0_i32, %c0_i32_0 : i32, i32
  }
  func.func @transform_6(%arg0: i32) -> (i32, i32) {
    %c0_i32 = arith.constant 0 : i32
    %c0_i32_0 = arith.constant 0 : i32
    %c0_i32_1 = arith.constant 0 : i32
    return %c0_i32, %c0_i32_0 : i32, i32
  }
  func.func @transform_7(%arg0: i32) -> (i32, i32) {
    %c0_i32 = arith.constant 0 : i32
    %c0_i32_0 = arith.constant 0 : i32
    %c0_i32_1 = arith.constant 0 : i32
    return %c0_i32, %c0_i32_0 : i32, i32
  }
  func.func @transform_8(%arg0: i32) -> (i32, i32) {
    %c0_i32 = arith.constant 0 : i32
    %c0_i32_0 = arith.constant 0 : i32
    %c0_i32_1 = arith.constant 0 : i32
    return %c0_i32, %c0_i32_0 : i32, i32
  }
  func.func @transform_9(%arg0: i32) -> (i32, i32) {
    %c0_i32 = arith.constant 0 : i32
    %c0_i32_0 = arith.constant 0 : i32
    %c0_i32_1 = arith.constant 0 : i32
    return %c0_i32, %c0_i32_0 : i32, i32
  }
  func.func @transform_10(%arg0: i32) -> (i32, i32) {
    %c0_i32 = arith.constant 0 : i32
    %c0_i32_0 = arith.constant 0 : i32
    %c0_i32_1 = arith.constant 0 : i32
    return %c0_i32, %c0_i32_0 : i32, i32
  }
  func.func @transform_11(%arg0: i32) -> (i32, i32) {
    %c0_i32 = arith.constant 0 : i32
    %c0_i32_0 = arith.constant 0 : i32
    %c0_i32_1 = arith.constant 0 : i32
    return %c0_i32, %c0_i32_0 : i32, i32
  }
  func.func @transform_12(%arg0: i32) -> (i32, i32, i32) {
    %c0_i32 = arith.constant 0 : i32
    %c0_i32_0 = arith.constant 0 : i32
    %c0_i32_1 = arith.constant 0 : i32
    return %arg0, %c0_i32, %c0_i32_0 : i32, i32, i32
  }
}

</mosaic_0001>

<llo_original>
// kernel: tpu_custom_call.1
$region0: #{tpu_custom_call.1}
  #allocation0 [shape = 'u32[]', space=smem, size = 0x4, offset = 0x4, fixed_abs, tag = 'smem constant byte address 0x4 - core index']
  #allocation1 [shape = 'u32[144,128]{1,0:T(1,128)}', space=vmem, size = 0x12000, scoped, tag = 'internal scratch']
  #allocation2 [shape = 'f32[48,768]{1,0:T(8,128)}', space=vmem, size = 0x24000, scoped, tag = 'scratch operand']
  %s0 = inlined_call_operand.hbm [shape: f32[2,16,256], index: 0, kind: input, shape index: {}]
  %s1 = inlined_call_operand.hbm [shape: f32[256,256], index: 1, kind: input, shape index: {}]
  %s2 = inlined_call_operand.vmem [shape: f32[1,256], index: 2, kind: input, shape index: {}]
  %s3 = inlined_call_operand.hbm [shape: f32[9,256], index: 3, kind: input, shape index: {}]
  %s4 = inlined_call_operand.vmem [shape: f32[1,256], index: 4, kind: input, shape index: {}]
  %s5 = inlined_call_operand.hbm [shape: f32[256,256], index: 5, kind: input, shape index: {}]
  %s6 = inlined_call_operand.vmem [shape: f32[1,256], index: 6, kind: input, shape index: {}]
  %s7 = inlined_call_operand.hbm [shape: f32[27,256], index: 7, kind: input, shape index: {}]
  %s8 = inlined_call_operand.hbm [shape: f32[256,256], index: 8, kind: input, shape index: {}]
  %s9 = inlined_call_operand.vmem [shape: f32[1,256], index: 9, kind: input, shape index: {}]
  %s10 = inlined_call_operand.hbm [shape: f32[512,256], index: 10, kind: input, shape index: {}]
  %s11 = inlined_call_operand.vmem [shape: f32[1,256], index: 11, kind: input, shape index: {}]
  %s12 = inlined_call_operand.hbm [shape: f32[2,16,256], index: 12, kind: output, shape index: {}]
  %s13 = sld [smem:[#allocation0]]
  $region109: #{tpu_custom_call.1} parent=0
    _
  %s15 = ssub.s32 1, %s13
  %s16 = scalar_select 0, %s15, %s13
  $region1: #{tpu_custom_call.1} parent=0
    #allocation3 [shape = 'u8[32768]{0}', space=vmem, size = 0x8000, scoped, tag = 'input window, operand 0']
    #allocation4 [shape = 's32[2]{0}', space=sflag, size = 0x8, scoped, tag = 'scoped memory for tpu_custom_call.1']
    #allocation5 [shape = 's32[2]{0}', space=sflag, size = 0x8, scoped, tag = 'scoped memory for tpu_custom_call.1']
    #allocation6 [shape = 'u8[262144]{0}', space=vmem, size = 0x40000, scoped, tag = 'input window, operand 1, single buffered']
    #allocation7 [shape = 's32[1]{0}', space=sflag, size = 0x4, scoped, tag = 'scoped memory for tpu_custom_call.1']
    #allocation8 [shape = 'u8[16384]{0}', space=vmem, size = 0x4000, scoped, tag = 'input window, operand 3, single buffered']
    #allocation9 [shape = 'u8[262144]{0}', space=vmem, size = 0x40000, scoped, tag = 'input window, operand 5, single buffered']
    #allocation10 [shape = 's32[1]{0}', space=sflag, size = 0x4, scoped, tag = 'scoped memory for tpu_custom_call.1']
    #allocation11 [shape = 'u8[32768]{0}', space=vmem, size = 0x8000, scoped, tag = 'input window, operand 7, single buffered']
    #allocation12 [shape = 'u8[262144]{0}', space=vmem, size = 0x40000, scoped, tag = 'input window, operand 8, single buffered']
    #allocation13 [shape = 's32[1]{0}', space=sflag, size = 0x4, scoped, tag = 'scoped memory for tpu_custom_call.1']
    #allocation14 [shape = 'u8[524288]{0}', space=vmem, size = 0x80000, scoped, tag = 'input window, operand 10, single buffered']
    #allocation15 [shape = 'u8[32768]{0}', space=vmem, size = 0x8000, scoped, tag = 'output window, operand 0']
    %17 = vsyncpa [#allocation4], 0
    %s18 = scalar_lea.sflag [#allocation4], 1
    %19 = vsyncpa %s18, 0
    %20 = vsyncpa [#allocation7], 0
    %21 = vsyncpa [#allocation10], 0
    %22 = vsyncpa [#allocation13], 0
    %23 = vsyncpa [#allocation5], 0
    %s24 = scalar_lea.sflag [#allocation5], 1
    %25 = vsyncpa %s24, 0
    loop: start=0, step=1, limit=4
    $region2: #{tpu_custom_call.1} parent=1 // loop_pre_header
      _
    $region3: #{tpu_custom_call.1} parent=1 // loop_header
      %s27 = sphi 0, %s31
      %p28 = scmp.ge.s32.totalorder %s27, 4
      %s37 = sphi 0, %s39
      %s40 = sphi 0, %s37
      %s41 = sphi 0, %s40
      %s57 = sphi 0, %s41
      %s61 = sphi 0, %s61
      %s63 = sphi 0, %s61
      %s64 = sphi 0, %s63
      %s78 = sphi 0, %s64
      %s82 = sphi 0, %s82
      %s84 = sphi 0, %s82
      %s85 = sphi 0, %s84
      %s99 = sphi 0, %s85
      %s103 = sphi 0, %s103
      %s105 = sphi 0, %s103
      %s106 = sphi 0, %s105
      %s120 = sphi 0, %s106
      %s124 = sphi 0, %s124
      %s126 = sphi 0, %s124
      %s127 = sphi 0, %s126
      %s141 = sphi 0, %s127
      %s145 = sphi 0, %s145
      %s147 = sphi 0, %s145
      %s148 = sphi 0, %s147
      %s162 = sphi 0, %s148
      %s166 = sphi 0, %s166
      %s168 = sphi 0, %s166
      %s169 = sphi 0, %s168
      %s183 = sphi 0, %s169
      %s187 = sphi 0, %s187
      %s189 = sphi 0, %s187
      %s190 = sphi 0, %s189
      %s204 = sphi 0, %s190
      %s208 = sphi 0, %s208
      %s210 = sphi 0, %s208
      %s211 = sphi 0, %s210
      %s225 = sphi 0, %s211
      %s229 = sphi 0, %s229
      %s231 = sphi 0, %s229
      %s232 = sphi 0, %s231
      %s246 = sphi 0, %s232
      %s250 = sphi 0, %s250
      %s252 = sphi 0, %s250
      %s253 = sphi 0, %s252
      %s267 = sphi 0, %s253
      %s271 = sphi 0, %s271
      %s273 = sphi 0, %s271
      %s274 = sphi 0, %s273
      %s288 = sphi 0, %s274
      %s294 = sphi 0, %s296
      %s297 = sphi 0, %s294
      %s298 = sphi 0, %s297
      %s314 = sphi 0, %s298
    $region4: #{tpu_custom_call.1} parent=1 // loop_header_branch
      %30 = sbr.rel (%p28) target = $region8
    $region5: #{tpu_custom_call.1} parent=1 // loop_body
      %s32 = ssub.s32 %s27, 1
      %s33 = ssub.s32 %s27, 2
      %s34 = sadd.s32 %s27, 1
      %s35 = ssub.s32 %s27, %s34
      %p36 = scmp.eq.s32.totalorder %s35, 0
      %s38 = sadd.s32 %s37, 1
      %s39 = scalar_select %p36, %s37, %s38
      %p42 = pneg %p36
      %p43 = scmp.eq.s32.totalorder %s27, 1
      %p44 = por %p42, %p43
      %p45 = scmp.ne.s32.totalorder %s37, %s40
      %p46 = scmp.eq.s32.totalorder %s27, 0
      %p47 = por %p45, %p46
      %p48 = scmp.ne.s32.totalorder %s37, %s40
      %p49 = scmp.eq.s32.totalorder %s32, 1
      %p50 = por %p48, %p49
      %p51 = scmp.ne.s32.totalorder %s40, %s41
      %p52 = scmp.eq.s32.totalorder %s32, 0
      %p53 = por %p51, %p52
      %p54 = scmp.ne.s32.totalorder %s40, %s41
      %p55 = scmp.eq.s32.totalorder %s33, 1
      %p56 = por %p54, %p55
      %p58 = scmp.ne.s32.totalorder %s41, %s57
      %p59 = scmp.eq.s32.totalorder %s33, 0
      %p60 = por %p58, %p59
      %s62 = sadd.s32 %s61, 1
      %p65 = scmp.eq.s32.totalorder %s27, 1
      %p66 = scmp.ne.s32.totalorder %s61, %s63
      %p67 = scmp.eq.s32.totalorder %s27, 0
      %p68 = por %p66, %p67
      %p69 = scmp.ne.s32.totalorder %s61, %s63
      %p70 = scmp.eq.s32.totalorder %s32, 1
      %p71 = por %p69, %p70
      %p72 = scmp.ne.s32.totalorder %s63, %s64
      %p73 = scmp.eq.s32.totalorder %s32, 0
      %p74 = por %p72, %p73
      %p75 = scmp.ne.s32.totalorder %s63, %s64
      %p76 = scmp.eq.s32.totalorder %s33, 1
      %p77 = por %p75, %p76
      %p79 = scmp.ne.s32.totalorder %s64, %s78
      %p80 = scmp.eq.s32.totalorder %s33, 0
      %p81 = por %p79, %p80
      %s83 = sadd.s32 %s82, 1
      %p86 = scmp.eq.s32.totalorder %s27, 1
      %p87 = scmp.ne.s32.totalorder %s82, %s84
      %p88 = scmp.eq.s32.totalorder %s27, 0
      %p89 = por %p87, %p88
      %p90 = scmp.ne.s32.totalorder %s82, %s84
      %p91 = scmp.eq.s32.totalorder %s32, 1
      %p92 = por %p90, %p91
      %p93 = scmp.ne.s32.totalorder %s84, %s85
      %p94 = scmp.eq.s32.totalorder %s32, 0
      %p95 = por %p93, %p94
      %p96 = scmp.ne.s32.totalorder %s84, %s85
      %p97 = scmp.eq.s32.totalorder %s33, 1
      %p98 = por %p96, %p97
      %p100 = scmp.ne.s32.totalorder %s85, %s99
      %p101 = scmp.eq.s32.totalorder %s33, 0
      %p102 = por %p100, %p101
      %s104 = sadd.s32 %s103, 1
      %p107 = scmp.eq.s32.totalorder %s27, 1
      %p108 = scmp.ne.s32.totalorder %s103, %s105
      %p109 = scmp.eq.s32.totalorder %s27, 0
      %p110 = por %p108, %p109
      %p111 = scmp.ne.s32.totalorder %s103, %s105
      %p112 = scmp.eq.s32.totalorder %s32, 1
      %p113 = por %p111, %p112
      %p114 = scmp.ne.s32.totalorder %s105, %s106
      %p115 = scmp.eq.s32.totalorder %s32, 0
      %p116 = por %p114, %p115
      %p117 = scmp.ne.s32.totalorder %s105, %s106
      %p118 = scmp.eq.s32.totalorder %s33, 1
      %p119 = por %p117, %p118
      %p121 = scmp.ne.s32.totalorder %s106, %s120
      %p122 = scmp.eq.s32.totalorder %s33, 0
      %p123 = por %p121, %p122
      %s125 = sadd.s32 %s124, 1
      %p128 = scmp.eq.s32.totalorder %s27, 1
      %p129 = scmp.ne.s32.totalorder %s124, %s126
      %p130 = scmp.eq.s32.totalorder %s27, 0
      %p131 = por %p129, %p130
      %p132 = scmp.ne.s32.totalorder %s124, %s126
      %p133 = scmp.eq.s32.totalorder %s32, 1
      %p134 = por %p132, %p133
      %p135 = scmp.ne.s32.totalorder %s126, %s127
      %p136 = scmp.eq.s32.totalorder %s32, 0
      %p137 = por %p135, %p136
      %p138 = scmp.ne.s32.totalorder %s126, %s127
      %p139 = scmp.eq.s32.totalorder %s33, 1
      %p140 = por %p138, %p139
      %p142 = scmp.ne.s32.totalorder %s127, %s141
      %p143 = scmp.eq.s32.totalorder %s33, 0
      %p144 = por %p142, %p143
      %s146 = sadd.s32 %s145, 1
      %p149 = scmp.eq.s32.totalorder %s27, 1
      %p150 = scmp.ne.s32.totalorder %s145, %s147
      %p151 = scmp.eq.s32.totalorder %s27, 0
      %p152 = por %p150, %p151
      %p153 = scmp.ne.s32.totalorder %s145, %s147
      %p154 = scmp.eq.s32.totalorder %s32, 1
      %p155 = por %p153, %p154
      %p156 = scmp.ne.s32.totalorder %s147, %s148
      %p157 = scmp.eq.s32.totalorder %s32, 0
      %p158 = por %p156, %p157
      %p159 = scmp.ne.s32.totalorder %s147, %s148
      %p160 = scmp.eq.s32.totalorder %s33, 1
      %p161 = por %p159, %p160
      %p163 = scmp.ne.s32.totalorder %s148, %s162
      %p164 = scmp.eq.s32.totalorder %s33, 0
      %p165 = por %p163, %p164
      %s167 = sadd.s32 %s166, 1
      %p170 = scmp.eq.s32.totalorder %s27, 1
      %p171 = scmp.ne.s32.totalorder %s166, %s168
      %p172 = scmp.eq.s32.totalorder %s27, 0
      %p173 = por %p171, %p172
      %p174 = scmp.ne.s32.totalorder %s166, %s168
      %p175 = scmp.eq.s32.totalorder %s32, 1
      %p176 = por %p174, %p175
      %p177 = scmp.ne.s32.totalorder %s168, %s169
      %p178 = scmp.eq.s32.totalorder %s32, 0
      %p179 = por %p177, %p178
      %p180 = scmp.ne.s32.totalorder %s168, %s169
      %p181 = scmp.eq.s32.totalorder %s33, 1
      %p182 = por %p180, %p181
      %p184 = scmp.ne.s32.totalorder %s169, %s183
      %p185 = scmp.eq.s32.totalorder %s33, 0
      %p186 = por %p184, %p185
      %s188 = sadd.s32 %s187, 1
      %p191 = scmp.eq.s32.totalorder %s27, 1
      %p192 = scmp.ne.s32.totalorder %s187, %s189
      %p193 = scmp.eq.s32.totalorder %s27, 0
      %p194 = por %p192, %p193
      %p195 = scmp.ne.s32.totalorder %s187, %s189
      %p196 = scmp.eq.s32.totalorder %s32, 1
      %p197 = por %p195, %p196
      %p198 = scmp.ne.s32.totalorder %s189, %s190
      %p199 = scmp.eq.s32.totalorder %s32, 0
      %p200 = por %p198, %p199
      %p201 = scmp.ne.s32.totalorder %s189, %s190
      %p202 = scmp.eq.s32.totalorder %s33, 1
      %p203 = por %p201, %p202
      %p205 = scmp.ne.s32.totalorder %s190, %s204
      %p206 = scmp.eq.s32.totalorder %s33, 0
      %p207 = por %p205, %p206
      %s209 = sadd.s32 %s208, 1
      %p212 = scmp.eq.s32.totalorder %s27, 1
      %p213 = scmp.ne.s32.totalorder %s208, %s210
      %p214 = scmp.eq.s32.totalorder %s27, 0
      %p215 = por %p213, %p214
      %p216 = scmp.ne.s32.totalorder %s208, %s210
      %p217 = scmp.eq.s32.totalorder %s32, 1
      %p218 = por %p216, %p217
      %p219 = scmp.ne.s32.totalorder %s210, %s211
      %p220 = scmp.eq.s32.totalorder %s32, 0
      %p221 = por %p219, %p220
      %p222 = scmp.ne.s32.totalorder %s210, %s211
      %p223 = scmp.eq.s32.totalorder %s33, 1
      %p224 = por %p222, %p223
      %p226 = scmp.ne.s32.totalorder %s211, %s225
      %p227 = scmp.eq.s32.totalorder %s33, 0
      %p228 = por %p226, %p227
      %s230 = sadd.s32 %s229, 1
      %p233 = scmp.eq.s32.totalorder %s27, 1
      %p234 = scmp.ne.s32.totalorder %s229, %s231
      %p235 = scmp.eq.s32.totalorder %s27, 0
      %p236 = por %p234, %p235
      %p237 = scmp.ne.s32.totalorder %s229, %s231
      %p238 = scmp.eq.s32.totalorder %s32, 1
      %p239 = por %p237, %p238
      %p240 = scmp.ne.s32.totalorder %s231, %s232
      %p241 = scmp.eq.s32.totalorder %s32, 0
      %p242 = por %p240, %p241
      %p243 = scmp.ne.s32.totalorder %s231, %s232
      %p244 = scmp.eq.s32.totalorder %s33, 1
      %p245 = por %p243, %p244
      %p247 = scmp.ne.s32.totalorder %s232, %s246
      %p248 = scmp.eq.s32.totalorder %s33, 0
      %p249 = por %p247, %p248
      %s251 = sadd.s32 %s250, 1
      %p254 = scmp.eq.s32.totalorder %s27, 1
      %p255 = scmp.ne.s32.totalorder %s250, %s252
      %p256 = scmp.eq.s32.totalorder %s27, 0
      %p257 = por %p255, %p256
      %p258 = scmp.ne.s32.totalorder %s250, %s252
      %p259 = scmp.eq.s32.totalorder %s32, 1
      %p260 = por %p258, %p259
      %p261 = scmp.ne.s32.totalorder %s252, %s253
      %p262 = scmp.eq.s32.totalorder %s32, 0
      %p263 = por %p261, %p262
      %p264 = scmp.ne.s32.totalorder %s252, %s253
      %p265 = scmp.eq.s32.totalorder %s33, 1
      %p266 = por %p264, %p265
      %p268 = scmp.ne.s32.totalorder %s253, %s267
      %p269 = scmp.eq.s32.totalorder %s33, 0
      %p270 = por %p268, %p269
      %s272 = sadd.s32 %s271, 1
      %p275 = scmp.eq.s32.totalorder %s27, 1
      %p276 = scmp.ne.s32.totalorder %s271, %s273
      %p277 = scmp.eq.s32.totalorder %s27, 0
      %p278 = por %p276, %p277
      %p279 = scmp.ne.s32.totalorder %s271, %s273
      %p280 = scmp.eq.s32.totalorder %s32, 1
      %p281 = por %p279, %p280
      %p282 = scmp.ne.s32.totalorder %s273, %s274
      %p283 = scmp.eq.s32.totalorder %s32, 0
      %p284 = por %p282, %p283
      %p285 = scmp.ne.s32.totalorder %s273, %s274
      %p286 = scmp.eq.s32.totalorder %s33, 1
      %p287 = por %p285, %p286
      %p289 = scmp.ne.s32.totalorder %s274, %s288
      %p290 = scmp.eq.s32.totalorder %s33, 0
      %p291 = por %p289, %p290
      %s292 = ssub.s32 %s27, %s34
      %p293 = scmp.eq.s32.totalorder %s292, 0
      %s295 = sadd.s32 %s294, 1
      %s296 = scalar_select %p293, %s294, %s295
      %p299 = pneg %p293
      %p300 = scmp.eq.s32.totalorder %s27, 1
      %p301 = por %p299, %p300
      %p302 = scmp.ne.s32.totalorder %s294, %s297
      %p303 = scmp.eq.s32.totalorder %s27, 0
      %p304 = por %p302, %p303
      %p305 = scmp.ne.s32.totalorder %s294, %s297
      %p306 = scmp.eq.s32.totalorder %s32, 1
      %p307 = por %p305, %p306
      %p308 = scmp.ne.s32.totalorder %s297, %s298
      %p309 = scmp.eq.s32.totalorder %s32, 0
      %p310 = por %p308, %p309
      %p311 = scmp.ne.s32.totalorder %s297, %s298
      %p312 = scmp.eq.s32.totalorder %s33, 1
      %p313 = por %p311, %p312
      %p315 = scmp.ne.s32.totalorder %s298, %s314
      %p316 = scmp.eq.s32.totalorder %s33, 0
      %p317 = por %p315, %p316
      %p318 = scmp.le.s32.totalorder 1, %s27
      %p319 = scmp.lt.s32.totalorder %s27, 3
      %p320 = pnand %p318, %p319
      %p321 = pneg %p320
      // Predicated region
      $region9: #{tpu_custom_call.1} parent=5 // pred_check
        _
      $region10: #{tpu_custom_call.1} parent=5 // pred_check_branch
        %323 = sbr.rel (%p320) target = $region12
      $region11: #{tpu_custom_call.1} parent=5 // pred_region
        %s324 = ssub.s32 %s27, 1
        // Predicated region
        $region13: #{tpu_custom_call.1} parent=11 // pred_check
          %p325 = pneg %p74
        $region14: #{tpu_custom_call.1} parent=11 // pred_check_branch
          %327 = sbr.rel (%p325) target = $region16
        $region15: #{tpu_custom_call.1} parent=11 // pred_region
          %s329 = ssub.s32 8192, 8192
          %330 = vsyncadd [#allocation7], %s329
          %s331 = sshll.u32 [#allocation6], 4
          %s332 = int_to_ptr.vmem [resolvable:$true] %s331
          %337 = dma.hbm_to_vmem [thread:$0]  %s1, 8192, %s332, [#allocation7], 256, 256, 16
        $region16: #{tpu_custom_call.1} parent=11 // pred_fallthru
          _
        // Predicated region
        $region17: #{tpu_custom_call.1} parent=11 // pred_check
          %p338 = pneg %p95
        $region18: #{tpu_custom_call.1} parent=11 // pred_check_branch
          %340 = sbr.rel (%p338) target = $region20
        $region19: #{tpu_custom_call.1} parent=11 // pred_region
          _
        $region20: #{tpu_custom_call.1} parent=11 // pred_fallthru
          _
        // Predicated region
        $region21: #{tpu_custom_call.1} parent=11 // pred_check
          %p341 = pneg %p116
        $region22: #{tpu_custom_call.1} parent=11 // pred_check_branch
          %343 = sbr.rel (%p341) target = $region24
        $region23: #{tpu_custom_call.1} parent=11 // pred_region
          %s345 = ssub.s32 512, 512
          %346 = vsyncadd [#allocation7], %s345
          %s347 = sshll.u32 [#allocation8], 4
          %s348 = int_to_ptr.vmem [resolvable:$true] %s347
          %353 = dma.hbm_to_vmem [thread:$0]  %s3, 512, %s348, [#allocation7], 256, 256, 16
        $region24: #{tpu_custom_call.1} parent=11 // pred_fallthru
          _
        // Predicated region
        $region25: #{tpu_custom_call.1} parent=11 // pred_check
          %p354 = pneg %p137
        $region26: #{tpu_custom_call.1} parent=11 // pred_check_branch
          %356 = sbr.rel (%p354) target = $region28
        $region27: #{tpu_custom_call.1} parent=11 // pred_region
          _
        $region28: #{tpu_custom_call.1} parent=11 // pred_fallthru
          _
        // Predicated region
        $region29: #{tpu_custom_call.1} parent=11 // pred_check
          %p357 = pneg %p158
        $region30: #{tpu_custom_call.1} parent=11 // pred_check_branch
          %359 = sbr.rel (%p357) target = $region32
        $region31: #{tpu_custom_call.1} parent=11 // pred_region
          %s361 = ssub.s32 8192, 8192
          %362 = vsyncadd [#allocation10], %s361
          %s363 = sshll.u32 [#allocation9], 4
          %s364 = int_to_ptr.vmem [resolvable:$true] %s363
          %369 = dma.hbm_to_vmem [thread:$0]  %s5, 8192, %s364, [#allocation10], 256, 256, 16
        $region32: #{tpu_custom_call.1} parent=11 // pred_fallthru
          _
        // Predicated region
        $region33: #{tpu_custom_call.1} parent=11 // pred_check
          %p370 = pneg %p179
        $region34: #{tpu_custom_call.1} parent=11 // pred_check_branch
          %372 = sbr.rel (%p370) target = $region36
        $region35: #{tpu_custom_call.1} parent=11 // pred_region
          _
        $region36: #{tpu_custom_call.1} parent=11 // pred_fallthru
          _
        // Predicated region
        $region37: #{tpu_custom_call.1} parent=11 // pred_check
          %p373 = pneg %p200
        $region38: #{tpu_custom_call.1} parent=11 // pred_check_branch
          %375 = sbr.rel (%p373) target = $region40
        $region39: #{tpu_custom_call.1} parent=11 // pred_region
          %s377 = ssub.s32 1024, 1024
          %378 = vsyncadd [#allocation10], %s377
          %s379 = sshll.u32 [#allocation11], 4
          %s380 = int_to_ptr.vmem [resolvable:$true] %s379
          %385 = dma.hbm_to_vmem [thread:$0]  %s7, 1024, %s380, [#allocation10], 256, 256, 16
        $region40: #{tpu_custom_call.1} parent=11 // pred_fallthru
          _
        // Predicated region
        $region41: #{tpu_custom_call.1} parent=11 // pred_check
          %p386 = pneg %p221
        $region42: #{tpu_custom_call.1} parent=11 // pred_check_branch
          %388 = sbr.rel (%p386) target = $region44
        $region43: #{tpu_custom_call.1} parent=11 // pred_region
          %s390 = ssub.s32 8192, 8192
          %391 = vsyncadd [#allocation13], %s390
          %s392 = sshll.u32 [#allocation12], 4
          %s393 = int_to_ptr.vmem [resolvable:$true] %s392
          %398 = dma.hbm_to_vmem [thread:$0]  %s8, 8192, %s393, [#allocation13], 256, 256, 16
        $region44: #{tpu_custom_call.1} parent=11 // pred_fallthru
          _
        // Predicated region
        $region45: #{tpu_custom_call.1} parent=11 // pred_check
          %p399 = pneg %p242
        $region46: #{tpu_custom_call.1} parent=11 // pred_check_branch
          %401 = sbr.rel (%p399) target = $region48
        $region47: #{tpu_custom_call.1} parent=11 // pred_region
          _
        $region48: #{tpu_custom_call.1} parent=11 // pred_fallthru
          _
        // Predicated region
        $region49: #{tpu_custom_call.1} parent=11 // pred_check
          %p402 = pneg %p263
        $region50: #{tpu_custom_call.1} parent=11 // pred_check_branch
          %404 = sbr.rel (%p402) target = $region52
        $region51: #{tpu_custom_call.1} parent=11 // pred_region
          %s406 = ssub.s32 16384, 16384
          %407 = vsyncadd [#allocation13], %s406
          %s408 = sshll.u32 [#allocation14], 4
          %s409 = int_to_ptr.vmem [resolvable:$true] %s408
          %414 = dma.hbm_to_vmem [thread:$0]  %s10, 16384, %s409, [#allocation13], 256, 256, 16
        $region52: #{tpu_custom_call.1} parent=11 // pred_fallthru
          _
        // Predicated region
        $region53: #{tpu_custom_call.1} parent=11 // pred_check
          %p415 = pneg %p284
        $region54: #{tpu_custom_call.1} parent=11 // pred_check_branch
          %417 = sbr.rel (%p415) target = $region56
        $region55: #{tpu_custom_call.1} parent=11 // pred_region
          _
        $region56: #{tpu_custom_call.1} parent=11 // pred_fallthru
          _
      $region12: #{tpu_custom_call.1} parent=5 // pred_fallthru
        _
      %p418 = scmp.lt.s32.totalorder %s27, 2
      // Predicated region
      $region57: #{tpu_custom_call.1} parent=5 // pred_check
        %p419 = pneg %p418
      $region58: #{tpu_custom_call.1} parent=5 // pred_check_branch
        %421 = sbr.rel (%p419) target = $region60
      $region59: #{tpu_custom_call.1} parent=5 // pred_region
        // Predicated region
        $region61: #{tpu_custom_call.1} parent=59 // pred_check
          %p422 = pneg %p47
        $region62: #{tpu_custom_call.1} parent=59 // pred_check_branch
          %424 = sbr.rel (%p422) target = $region64
        $region63: #{tpu_custom_call.1} parent=59 // pred_region
          %s425 = sand.u32 %s37, 1
          %s426 = scalar_lea.sflag [#allocation4], %s425
          %s427 = sand.u32 %s37, 1
          %s428 = smul.addr %s427, 32
          %s429 = scalar_lea.vmem [#allocation3], %s428
          %s431 = ssub.s32 512, 512
          %432 = vsyncadd %s426, %s431
          %s433 = smul.addr %s27, 4
          %s434 = smul.addr %s433, 128
          %s435 = scalar_lea.hbm %s0, %s434
          %s436 = sshll.u32 %s429, 4
          %s437 = int_to_ptr.vmem [resolvable:$true] %s436
          %442 = dma.hbm_to_vmem [thread:$0]  %s435, 512, %s437, %s426, 256, 256, 16
        $region64: #{tpu_custom_call.1} parent=59 // pred_fallthru
          _
      $region60: #{tpu_custom_call.1} parent=5 // pred_fallthru
        _
      %p443 = scmp.le.s32.totalorder 1, %s27
      %p444 = scmp.lt.s32.totalorder %s27, 3
      %p445 = pnand %p443, %p444
      %p446 = pneg %p445
      // Predicated region
      $region65: #{tpu_custom_call.1} parent=5 // pred_check
        _
      $region66: #{tpu_custom_call.1} parent=5 // pred_check_branch
        %448 = sbr.rel (%p445) target = $region68
      $region67: #{tpu_custom_call.1} parent=5 // pred_region
        %s449 = ssub.s32 %s27, 1
        %s450 = sand.u32 %s40, 1
        %s451 = scalar_lea.sflag [#allocation4], %s450
        %s452 = sand.u32 %s40, 1
        %s453 = smul.addr %s452, 32
        %s454 = scalar_lea.vmem [#allocation3], %s453
        // Predicated region
        $region69: #{tpu_custom_call.1} parent=67 // pred_check
          %p455 = pneg %p53
        $region70: #{tpu_custom_call.1} parent=67 // pred_check_branch
          %457 = sbr.rel (%p455) target = $region72
        $region71: #{tpu_custom_call.1} parent=67 // pred_region
          %458 = dma.done %s451, 512
        $region72: #{tpu_custom_call.1} parent=67 // pred_fallthru
          _
        // Predicated region
        $region73: #{tpu_custom_call.1} parent=67 // pred_check
          %p459 = pneg %p74
        $region74: #{tpu_custom_call.1} parent=67 // pred_check_branch
          %461 = sbr.rel (%p459) target = $region76
        $region75: #{tpu_custom_call.1} parent=67 // pred_region
          %462 = dma.done [#allocation7], 8192
        $region76: #{tpu_custom_call.1} parent=67 // pred_fallthru
          _
        // Predicated region
        $region77: #{tpu_custom_call.1} parent=67 // pred_check
          %p463 = pneg %p116
        $region78: #{tpu_custom_call.1} parent=67 // pred_check_branch
          %465 = sbr.rel (%p463) target = $region80
        $region79: #{tpu_custom_call.1} parent=67 // pred_region
          %466 = dma.done [#allocation7], 512
        $region80: #{tpu_custom_call.1} parent=67 // pred_fallthru
          _
        // Predicated region
        $region81: #{tpu_custom_call.1} parent=67 // pred_check
          %p467 = pneg %p158
        $region82: #{tpu_custom_call.1} parent=67 // pred_check_branch
          %469 = sbr.rel (%p467) target = $region84
        $region83: #{tpu_custom_call.1} parent=67 // pred_region
          %470 = dma.done [#allocation10], 8192
        $region84: #{tpu_custom_call.1} parent=67 // pred_fallthru
          _
        // Predicated region
        $region85: #{tpu_custom_call.1} parent=67 // pred_check
          %p471 = pneg %p200
        $region86: #{tpu_custom_call.1} parent=67 // pred_check_branch
          %473 = sbr.rel (%p471) target = $region88
        $region87: #{tpu_custom_call.1} parent=67 // pred_region
          %474 = dma.done [#allocation10], 1024
        $region88: #{tpu_custom_call.1} parent=67 // pred_fallthru
          _
        // Predicated region
        $region89: #{tpu_custom_call.1} parent=67 // pred_check
          %p475 = pneg %p221
        $region90: #{tpu_custom_call.1} parent=67 // pred_check_branch
          %477 = sbr.rel (%p475) target = $region92
        $region91: #{tpu_custom_call.1} parent=67 // pred_region
          %478 = dma.done [#allocation13], 8192
        $region92: #{tpu_custom_call.1} parent=67 // pred_fallthru
          _
        // Predicated region
        $region93: #{tpu_custom_call.1} parent=67 // pred_check
          %p479 = pneg %p263
        $region94: #{tpu_custom_call.1} parent=67 // pred_check_branch
          %481 = sbr.rel (%p479) target = $region96
        $region95: #{tpu_custom_call.1} parent=67 // pred_region
          %482 = dma.done [#allocation13], 16384
        $region96: #{tpu_custom_call.1} parent=67 // pred_fallthru
          _
        %s483 = sand.u32 %s40, 1
        %s484 = scalar_lea.sflag [#allocation4], %s483
        %s485 = sand.u32 %s40, 1
        %s486 = smul.addr %s485, 32
        %s487 = scalar_lea.vmem [#allocation3], %s486
        %p488 = pneg %p53
        %p489 = pneg %p50
        %p490 = pneg %p74
        %p491 = pneg %p71
        %p492 = pneg %p95
        %p493 = pneg %p92
        %p494 = pneg %p116
        %p495 = pneg %p113
        %p496 = pneg %p137
        %p497 = pneg %p134
        %p498 = pneg %p158
        %p499 = pneg %p155
        %p500 = pneg %p179
        %p501 = pneg %p176
        %p502 = pneg %p200
        %p503 = pneg %p197
        %p504 = pneg %p221
        %p505 = pneg %p218
        %p506 = pneg %p242
        %p507 = pneg %p239
        %p508 = pneg %p263
        %p509 = pneg %p260
        %p510 = pneg %p284
        %p511 = pneg %p281
        %p512 = pneg %p310
        %p513 = pneg %p307
        %s514 = sand.u32 %s297, 1
        %s515 = scalar_lea.sflag [#allocation5], %s514
        %s516 = sand.u32 %s297, 1
        %s517 = smul.addr %s516, 32
        %s518 = scalar_lea.vmem [#allocation15], %s517
        %v519 = vld [vmem:[%s454] sm:$0xff]
        %v520 = vld [vmem:[%s454 + $0x8] sm:$0xff]
        %v521 = vld [vmem:[%s454 + $0x10] sm:$0xff]
        %v522 = vld [vmem:[%s454 + $0x18] sm:$0xff]
        %v523 = vld [vmem:[#allocation6] sm:$0xff]
        %v524 = vld [vmem:[#allocation6 + $0x8] sm:$0xff]
        %v525 = vld [vmem:[#allocation6 + $0x10] sm:$0xff]
        %v526 = vld [vmem:[#allocation6 + $0x18] sm:$0xff]
        %v527 = vld [vmem:[#allocation6 + $0x20] sm:$0xff]
        %v528 = vld [vmem:[#allocation6 + $0x28] sm:$0xff]
        %v529 = vld [vmem:[#allocation6 + $0x30] sm:$0xff]
        %v530 = vld [vmem:[#allocation6 + $0x38] sm:$0xff]
        %v531 = vld [vmem:[#allocation6 + $0x40] sm:$0xff]
        %v532 = vld [vmem:[#allocation6 + $0x48] sm:$0xff]
        %v533 = vld [vmem:[#allocation6 + $0x50] sm:$0xff]
        %v534 = vld [vmem:[#allocation6 + $0x58] sm:$0xff]
        %v535 = vld [vmem:[#allocation6 + $0x60] sm:$0xff]
        %v536 = vld [vmem:[#allocation6 + $0x68] sm:$0xff]
        %v537 = vld [vmem:[#allocation6 + $0x70] sm:$0xff]
        %v538 = vld [vmem:[#allocation6 + $0x78] sm:$0xff]
        %v539 = vld [vmem:[#allocation6 + $0x80] sm:$0xff]
        %v540 = vld [vmem:[#allocation6 + $0x88] sm:$0xff]
        %v541 = vld [vmem:[#allocation6 + $0x90] sm:$0xff]
        %v542 = vld [vmem:[#allocation6 + $0x98] sm:$0xff]
        %v543 = vld [vmem:[#allocation6 + $0xa0] sm:$0xff]
        %v544 = vld [vmem:[#allocation6 + $0xa8] sm:$0xff]
        %v545 = vld [vmem:[#allocation6 + $0xb0] sm:$0xff]
        %v546 = vld [vmem:[#allocation6 + $0xb8] sm:$0xff]
        %v547 = vld [vmem:[#allocation6 + $0xc0] sm:$0xff]
        %v548 = vld [vmem:[#allocation6 + $0xc8] sm:$0xff]
        %v549 = vld [vmem:[#allocation6 + $0xd0] sm:$0xff]
        %v550 = vld [vmem:[#allocation6 + $0xd8] sm:$0xff]
        %v551 = vld [vmem:[#allocation6 + $0xe0] sm:$0xff]
        %v552 = vld [vmem:[#allocation6 + $0xe8] sm:$0xff]
        %v553 = vld [vmem:[#allocation6 + $0xf0] sm:$0xff]
        %v554 = vld [vmem:[#allocation6 + $0xf8] sm:$0xff]
        %v555 = vld [vmem:[#allocation6 + $0x100] sm:$0xff]
        %v556 = vld [vmem:[#allocation6 + $0x108] sm:$0xff]
        %v557 = vld [vmem:[#allocation6 + $0x110] sm:$0xff]
        %v558 = vld [vmem:[#allocation6 + $0x118] sm:$0xff]
        %v559 = vld [vmem:[#allocation6 + $0x120] sm:$0xff]
        %v560 = vld [vmem:[#allocation6 + $0x128] sm:$0xff]
        %v561 = vld [vmem:[#allocation6 + $0x130] sm:$0xff]
        %v562 = vld [vmem:[#allocation6 + $0x138] sm:$0xff]
        %v563 = vld [vmem:[#allocation6 + $0x140] sm:$0xff]
        %v564 = vld [vmem:[#allocation6 + $0x148] sm:$0xff]
        %v565 = vld [vmem:[#allocation6 + $0x150] sm:$0xff]
        %v566 = vld [vmem:[#allocation6 + $0x158] sm:$0xff]
        %v567 = vld [vmem:[#allocation6 + $0x160] sm:$0xff]
        %v568 = vld [vmem:[#allocation6 + $0x168] sm:$0xff]
        %v569 = vld [vmem:[#allocation6 + $0x170] sm:$0xff]
        %v570 = vld [vmem:[#allocation6 + $0x178] sm:$0xff]
        %v571 = vld [vmem:[#allocation6 + $0x180] sm:$0xff]
        %v572 = vld [vmem:[#allocation6 + $0x188] sm:$0xff]
        %v573 = vld [vmem:[#allocation6 + $0x190] sm:$0xff]
        %v574 = vld [vmem:[#allocation6 + $0x198] sm:$0xff]
        %v575 = vld [vmem:[#allocation6 + $0x1a0] sm:$0xff]
        %v576 = vld [vmem:[#allocation6 + $0x1a8] sm:$0xff]
        %v577 = vld [vmem:[#allocation6 + $0x1b0] sm:$0xff]
        %v578 = vld [vmem:[#allocation6 + $0x1b8] sm:$0xff]
        %v579 = vld [vmem:[#allocation6 + $0x1c0] sm:$0xff]
        %v580 = vld [vmem:[#allocation6 + $0x1c8] sm:$0xff]
        %v581 = vld [vmem:[#allocation6 + $0x1d0] sm:$0xff]
        %v582 = vld [vmem:[#allocation6 + $0x1d8] sm:$0xff]
        %v583 = vld [vmem:[#allocation6 + $0x1e0] sm:$0xff]
        %v584 = vld [vmem:[#allocation6 + $0x1e8] sm:$0xff]
        %v585 = vld [vmem:[#allocation6 + $0x1f0] sm:$0xff]
        %v586 = vld [vmem:[#allocation6 + $0x1f8] sm:$0xff]
        %v587 = vld [vmem:[%s2] sm:$0x3]
        %v589 = vlaneseq
        %v590 = vshrl.u32 %v589, 7
        %v591 = vsub.s32 0, %v590
        %v592 = vrot.slane %v587, %v591
        %v593 = vlaneseq
        %v594 = vshrl.u32 %v593, 7
        %v595 = vsub.s32 1, %v594
        %v596 = vrot.slane %v587, %v595
        %599 = vmatprep.subr.mxu0 %v524
        %600 = vmatpush1.msra.mxu0 %v523
        %601 = vmatprep.subr.mxu0 %v526
        %602 = vmatpush1.msra.mxu0 %v525
        %603 = vmatprep.subr.mxu0 %v528
        %604 = vmatpush1.msra.mxu0 %v527
        %605 = vmatprep.subr.mxu0 %v530
        %606 = vmatpush1.msra.mxu0 %v529
        %607 = vmatprep.subr.mxu0 %v532
        %608 = vmatpush1.msra.mxu0 %v531
        %609 = vmatprep.subr.mxu0 %v534
        %610 = vmatpush1.msra.mxu0 %v533
        %611 = vmatprep.subr.mxu0 %v536
        %612 = vmatpush1.msra.mxu0 %v535
        %613 = vmatprep.subr.mxu0 %v538
        %614 = vmatpush1.msra.mxu0 %v537
        %615 = vmatprep.subr.mxu0 %v540
        %616 = vmatpush1.msra.mxu0 %v539
        %617 = vmatprep.subr.mxu0 %v542
        %618 = vmatpush1.msra.mxu0 %v541
        %619 = vmatprep.subr.mxu0 %v544
        %620 = vmatpush1.msra.mxu0 %v543
        %621 = vmatprep.subr.mxu0 %v546
        %622 = vmatpush1.msra.mxu0 %v545
        %623 = vmatprep.subr.mxu0 %v548
        %624 = vmatpush1.msra.mxu0 %v547
        %625 = vmatprep.subr.mxu0 %v550
        %626 = vmatpush1.msra.mxu0 %v549
        %627 = vmatprep.subr.mxu0 %v552
        %628 = vmatpush1.msra.mxu0 %v551
        %629 = vmatprep.subr.mxu0 %v554
        %630 = vmatpush1.msra.mxu0 %v553
        %631 = vmatprep.subr.mxu0 %v556
        %632 = vmatpush1.msra.mxu0 %v555
        %633 = vmatprep.subr.mxu0 %v558
        %634 = vmatpush1.msra.mxu0 %v557
        %635 = vmatprep.subr.mxu0 %v560
        %636 = vmatpush1.msra.mxu0 %v559
        %637 = vmatprep.subr.mxu0 %v562
        %638 = vmatpush1.msra.mxu0 %v561
        %639 = vmatprep.subr.mxu0 %v564
        %640 = vmatpush1.msra.mxu0 %v563
        %641 = vmatprep.subr.mxu0 %v566
        %642 = vmatpush1.msra.mxu0 %v565
        %643 = vmatprep.subr.mxu0 %v568
        %644 = vmatpush1.msra.mxu0 %v567
        %645 = vmatprep.subr.mxu0 %v570
        %646 = vmatpush1.msra.mxu0 %v569
        %647 = vmatprep.subr.mxu0 %v572
        %648 = vmatpush1.msra.mxu0 %v571
        %649 = vmatprep.subr.mxu0 %v574
        %650 = vmatpush1.msra.mxu0 %v573
        %651 = vmatprep.subr.mxu0 %v576
        %652 = vmatpush1.msra.mxu0 %v575
        %653 = vmatprep.subr.mxu0 %v578
        %654 = vmatpush1.msra.mxu0 %v577
        %655 = vmatprep.subr.mxu0 %v580
        %656 = vmatpush1.msra.mxu0 %v579
        %657 = vmatprep.subr.mxu0 %v582
        %658 = vmatpush1.msra.mxu0 %v581
        %659 = vmatprep.subr.mxu0 %v584
        %660 = vmatpush1.msra.mxu0 %v583
        %661 = vmatprep.subr.mxu0 %v586
        %662 = vmatpush1.msra.mxu0 %v585
        %663 = vmatprep.mubr.f32.mxu0 %v520
        %664 = vmatmul.mubr.f32.gmra.mrb[0].mxu0 %v519
        %v665 = vpop.f32.mrb[0].mxu0
        %v666 = vadd.f32 %v592, %v665
        %v667 = vpop.f32.mrb[0].mxu0
        %v668 = vadd.f32 %v596, %v667
        %669 = vmatprep.mubr.f32.mxu0 %v522
        %670 = vmatmul.mubr.f32.gmra.mrb[0].mxu0 %v521
        %v671 = vpop.f32.mrb[0].mxu0
        %v672 = vadd.f32 %v592, %v671
        %v673 = vpop.f32.mrb[0].mxu0
        %v674 = vadd.f32 %v596, %v673
        %675 = vdwg.mxu0
        %v676 = vmax.f32 %v666, 0.0
        %v677 = vmax.f32 %v668, 0.0
        %v678 = vmax.f32 %v672, 0.0
        %v679 = vmax.f32 %v674, 0.0
        %680 = vst [vmem:[#allocation2] sm:$0xff] 0.0
        %681 = vst [vmem:[#allocation2 + $0x8] sm:$0xff] 0.0
        %682 = vst [vmem:[#allocation2 + $0x10] sm:$0xff] 0.0
        %683 = vst [vmem:[#allocation2 + $0x18] sm:$0xff] 0.0
        %684 = vst [vmem:[#allocation2 + $0x20] sm:$0xff] 0.0
        %685 = vst [vmem:[#allocation2 + $0x28] sm:$0xff] 0.0
        %686 = vst [vmem:[#allocation2 + $0x30] sm:$0xff] 0.0
        %687 = vst [vmem:[#allocation2 + $0x38] sm:$0xff] 0.0
        %688 = vst [vmem:[#allocation2 + $0x40] sm:$0xff] 0.0
        %689 = vst [vmem:[#allocation2 + $0x48] sm:$0xff] 0.0
        %690 = vst [vmem:[#allocation2 + $0x50] sm:$0xff] 0.0
        %691 = vst [vmem:[#allocation2 + $0x58] sm:$0xff] 0.0
        %692 = vst [vmem:[#allocation2 + $0x60] sm:$0xff] 0.0
        %693 = vst [vmem:[#allocation2 + $0x68] sm:$0xff] 0.0
        %694 = vst [vmem:[#allocation2 + $0x70] sm:$0xff] 0.0
        %695 = vst [vmem:[#allocation2 + $0x78] sm:$0xff] 0.0
        %696 = vst [vmem:[#allocation2 + $0x80] sm:$0xff] 0.0
        %697 = vst [vmem:[#allocation2 + $0x88] sm:$0xff] 0.0
        %698 = vst [vmem:[#allocation2 + $0x90] sm:$0xff] 0.0
        %699 = vst [vmem:[#allocation2 + $0x98] sm:$0xff] 0.0
        %700 = vst [vmem:[#allocation2 + $0xa0] sm:$0xff] 0.0
        %701 = vst [vmem:[#allocation2 + $0xa8] sm:$0xff] 0.0
        %702 = vst [vmem:[#allocation2 + $0xb0] sm:$0xff] 0.0
        %703 = vst [vmem:[#allocation2 + $0xb8] sm:$0xff] 0.0
        %704 = vst [vmem:[#allocation2 + $0xc0] sm:$0xff] 0.0
        %705 = vst [vmem:[#allocation2 + $0xc8] sm:$0xff] 0.0
        %706 = vst [vmem:[#allocation2 + $0xd0] sm:$0xff] 0.0
        %707 = vst [vmem:[#allocation2 + $0xd8] sm:$0xff] 0.0
        %708 = vst [vmem:[#allocation2 + $0xe0] sm:$0xff] 0.0
        %709 = vst [vmem:[#allocation2 + $0xe8] sm:$0xff] 0.0
        %710 = vst [vmem:[#allocation2 + $0xf0] sm:$0xff] 0.0
        %711 = vst [vmem:[#allocation2 + $0xf8] sm:$0xff] 0.0
        %712 = vst [vmem:[#allocation2 + $0x100] sm:$0xff] 0.0
        %713 = vst [vmem:[#allocation2 + $0x108] sm:$0xff] 0.0
        %714 = vst [vmem:[#allocation2 + $0x110] sm:$0xff] 0.0
        %715 = vst [vmem:[#allocation2 + $0x118] sm:$0xff] 0.0
        %716 = vst [vmem:[#allocation2 + $0x70] sm:$0xff] %v676
        %717 = vst [vmem:[#allocation2 + $0x78] sm:$0xff] %v677
        %718 = vst [vmem:[#allocation2 + $0xa0] sm:$0xff] %v678
        %719 = vst [vmem:[#allocation2 + $0xa8] sm:$0xff] %v679
        %v720 = vld [vmem:[#allocation8] sm:$0xff]
        %v721 = vld [vmem:[#allocation8 + $0x8] sm:$0xff]
        %v722 = vld [vmem:[#allocation8 + $0x10] sm:$0x1]
        %v723 = vld [vmem:[#allocation8 + $0x18] sm:$0x1]
        %v724 = vld [vmem:[#allocation2 + $0x38] sm:$0x80]
        %v725 = vld [vmem:[#allocation2 + $0x40] sm:$0x80]
        %v726 = vld [vmem:[#allocation2 + $0x48] sm:$0x80]
        %v727 = vld [vmem:[#allocation2 + $0x50] sm:$0x80]
        %v728 = vld [vmem:[#allocation2 + $0x68] sm:$0xff]
        %v729 = vld [vmem:[#allocation2 + $0x70] sm:$0xff]
        %v730 = vld [vmem:[#allocation2 + $0x78] sm:$0xff]
        %v731 = vld [vmem:[#allocation2 + $0x80] sm:$0xff]
        %v732 = vld [vmem:[#allocation2 + $0x98] sm:$0x7f]
        %v733 = vld [vmem:[#allocation2 + $0xa0] sm:$0x7f]
        %v734 = vld [vmem:[#allocation2 + $0xa8] sm:$0x7f]
        %v735 = vld [vmem:[#allocation2 + $0xb0] sm:$0x7f]
        %v736 = vlaneseq
        %v737 = vshrl.u32 %v736, 7
        %v738 = vsub.s32 0, %v737
        %v739 = vrot.slane %v720, %v738
        %v740 = vlaneseq
        %v741 = vshrl.u32 %v740, 7
        %v742 = vsub.s32 0, %v741
        %v743 = vrot.slane %v721, %v742
        %746 = vrot.lane.b32.xlu0 %v739, 112
        %v747 = vpop.permute.xlu0 %746
        %748 = vrot.lane.b32.xlu0 %v743, 112
        %v749 = vpop.permute.xlu0 %748
        %vm750 = vcmask 916480
        %v751 = vsel %vm750, %v747, %v749
        %v755 = vmul.f32 %v724, %v747
        %v756 = vmul.f32 %v725, %v751
        %v757 = vmul.f32 %v726, %v749
        %v758 = vmul.f32 %v728, %v747
        %v759 = vmul.f32 %v729, %v751
        %v760 = vmul.f32 %v730, %v749
        %v761 = vmul.f32 %v732, %v747
        %v762 = vmul.f32 %v733, %v751
        %v763 = vmul.f32 %v734, %v749
        %v764 = vadd.f32 %v755, 0.0
        %v765 = vadd.f32 %v756, 0.0
        %v766 = vadd.f32 %v757, 0.0
        %v767 = vadd.f32 %v758, 0.0
        %v768 = vadd.f32 %v759, 0.0
        %v769 = vadd.f32 %v760, 0.0
        %v770 = vadd.f32 %v761, 0.0
        %v771 = vadd.f32 %v762, 0.0
        %v772 = vadd.f32 %v763, 0.0
        %v773 = vlaneseq
        %v774 = vshrl.u32 %v773, 7
        %v775 = vsub.s32 1, %v774
        %v776 = vrot.slane %v720, %v775
        %v777 = vlaneseq
        %v778 = vshrl.u32 %v777, 7
        %v779 = vsub.s32 1, %v778
        %v780 = vrot.slane %v721, %v779
        %v781 = vmul.f32 %v725, %v776
        %v782 = vmul.f32 %v726, %v780
        %v783 = vmul.f32 %v729, %v776
        %v784 = vmul.f32 %v730, %v780
        %v785 = vmul.f32 %v733, %v776
        %v786 = vmul.f32 %v734, %v780
        %793 = vrot.lane.b32.xlu0 %v781, 112
        %v794 = vpop.permute.xlu0 %793
        %795 = vrot.lane.b32.xlu0 %v782, 112
        %v796 = vpop.permute.xlu0 %795
        %797 = vrot.lane.b32.xlu0 %v783, 112
        %v798 = vpop.permute.xlu0 %797
        %799 = vrot.lane.b32.xlu0 %v784, 112
        %v800 = vpop.permute.xlu0 %799
        %801 = vrot.lane.b32.xlu0 %v785, 112
        %v802 = vpop.permute.xlu0 %801
        %803 = vrot.lane.b32.xlu0 %v786, 112
        %v804 = vpop.permute.xlu0 %803
        %v805 = vsel %vm750, %v794, %v796
        %v806 = vsel %vm750, %v798, %v800
        %v807 = vsel %vm750, %v802, %v804
        %v817 = vadd.f32 %v764, %v794
        %v818 = vadd.f32 %v765, %v805
        %v819 = vadd.f32 %v766, %v796
        %v820 = vadd.f32 %v767, %v798
        %v821 = vadd.f32 %v768, %v806
        %v822 = vadd.f32 %v769, %v800
        %v823 = vadd.f32 %v770, %v802
        %v824 = vadd.f32 %v771, %v807
        %v825 = vadd.f32 %v772, %v804
        %v826 = vlaneseq
        %v827 = vshrl.u32 %v826, 7
        %v828 = vsub.s32 2, %v827
        %v829 = vrot.slane %v720, %v828
        %v830 = vlaneseq
        %v831 = vshrl.u32 %v830, 7
        %v832 = vsub.s32 2, %v831
        %v833 = vrot.slane %v721, %v832
        %836 = vrot.lane.b32.xlu0 %v829, 16
        %v837 = vpop.permute.xlu0 %836
        %838 = vrot.lane.b32.xlu0 %v833, 16
        %v839 = vpop.permute.xlu0 %838
        %vm840 = vcmask 130048
        %v841 = vsel %vm840, %v837, %v839
        %v845 = vmul.f32 %v725, %v837
        %v846 = vmul.f32 %v726, %v841
        %v847 = vmul.f32 %v727, %v839
        %v848 = vmul.f32 %v729, %v837
        %v849 = vmul.f32 %v730, %v841
        %v850 = vmul.f32 %v731, %v839
        %v851 = vmul.f32 %v733, %v837
        %v852 = vmul.f32 %v734, %v841
        %v853 = vmul.f32 %v735, %v839
        %863 = vrot.lane.b32.xlu0 %v845, 96
        %v864 = vpop.permute.xlu0 %863
        %865 = vrot.lane.b32.xlu0 %v846, 96
        %v866 = vpop.permute.xlu0 %865
        %867 = vrot.lane.b32.xlu0 %v847, 96
        %v868 = vpop.permute.xlu0 %867
        %869 = vrot.lane.b32.xlu0 %v848, 96
        %v870 = vpop.permute.xlu0 %869
        %871 = vrot.lane.b32.xlu0 %v849, 96
        %v872 = vpop.permute.xlu0 %871
        %873 = vrot.lane.b32.xlu0 %v850, 96
        %v874 = vpop.permute.xlu0 %873
        %875 = vrot.lane.b32.xlu0 %v851, 96
        %v876 = vpop.permute.xlu0 %875
        %877 = vrot.lane.b32.xlu0 %v852, 96
        %v878 = vpop.permute.xlu0 %877
        %879 = vrot.lane.b32.xlu0 %v853, 96
        %v880 = vpop.permute.xlu0 %879
        %vm881 = vcmask 785408
        %v882 = vsel %vm881, %v864, %v866
        %v883 = vsel %vm881, %v866, %v868
        %v884 = vsel %vm881, %v870, %v872
        %v885 = vsel %vm881, %v872, %v874
        %v886 = vsel %vm881, %v876, %v878
        %v887 = vsel %vm881, %v878, %v880
        %v897 = vadd.f32 %v817, %v864
        %v898 = vadd.f32 %v818, %v882
        %v899 = vadd.f32 %v819, %v883
        %v900 = vadd.f32 %v820, %v870
        %v901 = vadd.f32 %v821, %v884
        %v902 = vadd.f32 %v822, %v885
        %v903 = vadd.f32 %v823, %v876
        %v904 = vadd.f32 %v824, %v886
        %v905 = vadd.f32 %v825, %v887
        %v906 = vld [vmem:[#allocation2 + $0x60] sm:$0xff]
        %v907 = vld [vmem:[#allocation2 + $0x88] sm:$0xff]
        %v908 = vld [vmem:[#allocation2 + $0x90] sm:$0xff]
        %v909 = vld [vmem:[#allocation2 + $0x98] sm:$0xff]
        %v910 = vld [vmem:[#allocation2 + $0xa0] sm:$0xff]
        %v911 = vld [vmem:[#allocation2 + $0xa8] sm:$0xff]
        %v912 = vld [vmem:[#allocation2 + $0xb0] sm:$0xff]
        %v913 = vld [vmem:[#allocation2 + $0xb8] sm:$0xff]
        %v914 = vlaneseq
        %v915 = vshrl.u32 %v914, 7
        %v916 = vsub.s32 3, %v915
        %v917 = vrot.slane %v720, %v916
        %v918 = vlaneseq
        %v919 = vshrl.u32 %v918, 7
        %v920 = vsub.s32 3, %v919
        %v921 = vrot.slane %v721, %v920
        %924 = vrot.lane.b32.xlu0 %v917, 112
        %v925 = vpop.permute.xlu0 %924
        %926 = vrot.lane.b32.xlu0 %v921, 112
        %v927 = vpop.permute.xlu0 %926
        %v928 = vsel %vm750, %v925, %v927
        %v932 = vmul.f32 %v728, %v925
        %v933 = vmul.f32 %v729, %v928
        %v934 = vmul.f32 %v730, %v927
        %v935 = vmul.f32 %v909, %v925
        %v936 = vmul.f32 %v910, %v928
        %v937 = vmul.f32 %v911, %v927
        %vm944 = vcmask 1046528
        %v945 = vrot.slane %v932, 1
        %v946 = vrot.slane %v933, 1
        %v947 = vrot.slane %v934, 1
        %v948 = vrot.slane %v935, 1
        %v949 = vsel %vm944, %v945, %v948
        %v950 = vrot.slane %v936, 1
        %v951 = vsel %vm944, %v946, %v950
        %v952 = vrot.slane %v937, 1
        %v953 = vsel %vm944, %v947, %v952
        %v963 = vadd.f32 %v897, %v945
        %v964 = vadd.f32 %v898, %v946
        %v965 = vadd.f32 %v899, %v947
        %v966 = vadd.f32 %v900, %v949
        %v967 = vadd.f32 %v901, %v951
        %v968 = vadd.f32 %v902, %v953
        %v969 = vadd.f32 %v903, %v948
        %v970 = vadd.f32 %v904, %v950
        %v971 = vadd.f32 %v905, %v952
        %v972 = vlaneseq
        %v973 = vshrl.u32 %v972, 7
        %v974 = vsub.s32 4, %v973
        %v975 = vrot.slane %v720, %v974
        %v976 = vlaneseq
        %v977 = vshrl.u32 %v976, 7
        %v978 = vsub.s32 4, %v977
        %v979 = vrot.slane %v721, %v978
        %v980 = vmul.f32 %v729, %v975
        %v981 = vmul.f32 %v730, %v979
        %v982 = vmul.f32 %v910, %v975
        %v983 = vmul.f32 %v911, %v979
        %v988 = vrot.slane %v980, 1
        %v989 = vrot.slane %v981, 1
        %v990 = vrot.slane %v982, 1
        %v991 = vsel %vm944, %v988, %v990
        %v992 = vrot.slane %v983, 1
        %v993 = vsel %vm944, %v989, %v992
        %994 = vrot.lane.b32.xlu0 %v988, 112
        %v995 = vpop.permute.xlu0 %994
        %996 = vrot.lane.b32.xlu0 %v989, 112
        %v997 = vpop.permute.xlu0 %996
        %998 = vrot.lane.b32.xlu0 %v991, 112
        %v999 = vpop.permute.xlu0 %998
        %1000 = vrot.lane.b32.xlu0 %v993, 112
        %v1001 = vpop.permute.xlu0 %1000
        %1002 = vrot.lane.b32.xlu0 %v990, 112
        %v1003 = vpop.permute.xlu0 %1002
        %1004 = vrot.lane.b32.xlu0 %v992, 112
        %v1005 = vpop.permute.xlu0 %1004
        %v1006 = vsel %vm750, %v995, %v997
        %v1007 = vsel %vm750, %v999, %v1001
        %v1008 = vsel %vm750, %v1003, %v1005
        %v1018 = vadd.f32 %v963, %v995
        %v1019 = vadd.f32 %v964, %v1006
        %v1020 = vadd.f32 %v965, %v997
        %v1021 = vadd.f32 %v966, %v999
        %v1022 = vadd.f32 %v967, %v1007
        %v1023 = vadd.f32 %v968, %v1001
        %v1024 = vadd.f32 %v969, %v1003
        %v1025 = vadd.f32 %v970, %v1008
        %v1026 = vadd.f32 %v971, %v1005
        %v1027 = vlaneseq
        %v1028 = vshrl.u32 %v1027, 7
        %v1029 = vsub.s32 5, %v1028
        %v1030 = vrot.slane %v720, %v1029
        %v1031 = vlaneseq
        %v1032 = vshrl.u32 %v1031, 7
        %v1033 = vsub.s32 5, %v1032
        %v1034 = vrot.slane %v721, %v1033
        %1037 = vrot.lane.b32.xlu0 %v1030, 16
        %v1038 = vpop.permute.xlu0 %1037
        %1039 = vrot.lane.b32.xlu0 %v1034, 16
        %v1040 = vpop.permute.xlu0 %1039
        %v1041 = vsel %vm840, %v1038, %v1040
        %v1045 = vmul.f32 %v729, %v1038
        %v1046 = vmul.f32 %v730, %v1041
        %v1047 = vmul.f32 %v731, %v1040
        %v1048 = vmul.f32 %v910, %v1038
        %v1049 = vmul.f32 %v911, %v1041
        %v1050 = vmul.f32 %v912, %v1040
        %v1057 = vrot.slane %v1045, 1
        %v1058 = vrot.slane %v1046, 1
        %v1059 = vrot.slane %v1047, 1
        %v1060 = vrot.slane %v1048, 1
        %v1061 = vsel %vm944, %v1057, %v1060
        %v1062 = vrot.slane %v1049, 1
        %v1063 = vsel %vm944, %v1058, %v1062
        %v1064 = vrot.slane %v1050, 1
        %v1065 = vsel %vm944, %v1059, %v1064
        %1066 = vrot.lane.b32.xlu0 %v1057, 96
        %v1067 = vpop.permute.xlu0 %1066
        %1068 = vrot.lane.b32.xlu0 %v1058, 96
        %v1069 = vpop.permute.xlu0 %1068
        %1070 = vrot.lane.b32.xlu0 %v1059, 96
        %v1071 = vpop.permute.xlu0 %1070
        %1072 = vrot.lane.b32.xlu0 %v1061, 96
        %v1073 = vpop.permute.xlu0 %1072
        %1074 = vrot.lane.b32.xlu0 %v1063, 96
        %v1075 = vpop.permute.xlu0 %1074
        %1076 = vrot.lane.b32.xlu0 %v1065, 96
        %v1077 = vpop.permute.xlu0 %1076
        %1078 = vrot.lane.b32.xlu0 %v1060, 96
        %v1079 = vpop.permute.xlu0 %1078
        %1080 = vrot.lane.b32.xlu0 %v1062, 96
        %v1081 = vpop.permute.xlu0 %1080
        %1082 = vrot.lane.b32.xlu0 %v1064, 96
        %v1083 = vpop.permute.xlu0 %1082
        %v1084 = vsel %vm881, %v1067, %v1069
        %v1085 = vsel %vm881, %v1069, %v1071
        %v1086 = vsel %vm881, %v1073, %v1075
        %v1087 = vsel %vm881, %v1075, %v1077
        %v1088 = vsel %vm881, %v1079, %v1081
        %v1089 = vsel %vm881, %v1081, %v1083
        %v1099 = vadd.f32 %v1018, %v1067
        %v1100 = vadd.f32 %v1019, %v1084
        %v1101 = vadd.f32 %v1020, %v1085
        %v1102 = vadd.f32 %v1021, %v1073
        %v1103 = vadd.f32 %v1022, %v1086
        %v1104 = vadd.f32 %v1023, %v1087
        %v1105 = vadd.f32 %v1024, %v1079
        %v1106 = vadd.f32 %v1025, %v1088
        %v1107 = vadd.f32 %v1026, %v1089
        %v1108 = vld [vmem:[#allocation2 + $0x68] sm:$0xfe]
        %v1109 = vld [vmem:[#allocation2 + $0x70] sm:$0xfe]
        %v1110 = vld [vmem:[#allocation2 + $0x78] sm:$0xfe]
        %v1111 = vld [vmem:[#allocation2 + $0x80] sm:$0xfe]
        %v1112 = vld [vmem:[#allocation2 + $0xc8] sm:$0x1]
        %v1113 = vld [vmem:[#allocation2 + $0xd0] sm:$0x1]
        %v1114 = vld [vmem:[#allocation2 + $0xd8] sm:$0x1]
        %v1115 = vld [vmem:[#allocation2 + $0xe0] sm:$0x1]
        %v1116 = vlaneseq
        %v1117 = vshrl.u32 %v1116, 7
        %v1118 = vsub.s32 6, %v1117
        %v1119 = vrot.slane %v720, %v1118
        %v1120 = vlaneseq
        %v1121 = vshrl.u32 %v1120, 7
        %v1122 = vsub.s32 6, %v1121
        %v1123 = vrot.slane %v721, %v1122
        %1126 = vrot.lane.b32.xlu0 %v1119, 112
        %v1127 = vpop.permute.xlu0 %1126
        %1128 = vrot.lane.b32.xlu0 %v1123, 112
        %v1129 = vpop.permute.xlu0 %1128
        %v1130 = vsel %vm750, %v1127, %v1129
        %v1134 = vmul.f32 %v1108, %v1127
        %v1135 = vmul.f32 %v1109, %v1130
        %v1136 = vmul.f32 %v1110, %v1129
        %v1137 = vmul.f32 %v909, %v1127
        %v1138 = vmul.f32 %v910, %v1130
        %v1139 = vmul.f32 %v911, %v1129
        %v1140 = vmul.f32 %v1112, %v1127
        %v1141 = vmul.f32 %v1113, %v1130
        %v1142 = vmul.f32 %v1114, %v1129
        %vm1152 = vcmask 1045504
        %v1153 = vrot.slane %v1134, 2
        %v1154 = vrot.slane %v1135, 2
        %v1155 = vrot.slane %v1136, 2
        %v1156 = vrot.slane %v1137, 2
        %v1157 = vsel %vm1152, %v1153, %v1156
        %v1158 = vrot.slane %v1138, 2
        %v1159 = vsel %vm1152, %v1154, %v1158
        %v1160 = vrot.slane %v1139, 2
        %v1161 = vsel %vm1152, %v1155, %v1160
        %v1162 = vrot.slane %v1140, 2
        %v1163 = vsel %vm1152, %v1156, %v1162
        %v1164 = vrot.slane %v1141, 2
        %v1165 = vsel %vm1152, %v1158, %v1164
        %v1166 = vrot.slane %v1142, 2
        %v1167 = vsel %vm1152, %v1160, %v1166
        %v1177 = vadd.f32 %v1099, %v1153
        %v1178 = vadd.f32 %v1100, %v1154
        %v1179 = vadd.f32 %v1101, %v1155
        %v1180 = vadd.f32 %v1102, %v1157
        %v1181 = vadd.f32 %v1103, %v1159
        %v1182 = vadd.f32 %v1104, %v1161
        %v1183 = vadd.f32 %v1105, %v1163
        %v1184 = vadd.f32 %v1106, %v1165
        %v1185 = vadd.f32 %v1107, %v1167
        %v1186 = vlaneseq
        %v1187 = vshrl.u32 %v1186, 7
        %v1188 = vsub.s32 7, %v1187
        %v1189 = vrot.slane %v720, %v1188
        %v1190 = vlaneseq
        %v1191 = vshrl.u32 %v1190, 7
        %v1192 = vsub.s32 7, %v1191
        %v1193 = vrot.slane %v721, %v1192
        %v1194 = vmul.f32 %v1109, %v1189
        %v1195 = vmul.f32 %v1110, %v1193
        %v1196 = vmul.f32 %v910, %v1189
        %v1197 = vmul.f32 %v911, %v1193
        %v1198 = vmul.f32 %v1113, %v1189
        %v1199 = vmul.f32 %v1114, %v1193
        %v1206 = vrot.slane %v1194, 2
        %v1207 = vrot.slane %v1195, 2
        %v1208 = vrot.slane %v1196, 2
        %v1209 = vsel %vm1152, %v1206, %v1208
        %v1210 = vrot.slane %v1197, 2
        %v1211 = vsel %vm1152, %v1207, %v1210
        %v1212 = vrot.slane %v1198, 2
        %v1213 = vsel %vm1152, %v1208, %v1212
        %v1214 = vrot.slane %v1199, 2
        %v1215 = vsel %vm1152, %v1210, %v1214
        %1216 = vrot.lane.b32.xlu0 %v1206, 112
        %v1217 = vpop.permute.xlu0 %1216
        %1218 = vrot.lane.b32.xlu0 %v1207, 112
        %v1219 = vpop.permute.xlu0 %1218
        %1220 = vrot.lane.b32.xlu0 %v1209, 112
        %v1221 = vpop.permute.xlu0 %1220
        %1222 = vrot.lane.b32.xlu0 %v1211, 112
        %v1223 = vpop.permute.xlu0 %1222
        %1224 = vrot.lane.b32.xlu0 %v1213, 112
        %v1225 = vpop.permute.xlu0 %1224
        %1226 = vrot.lane.b32.xlu0 %v1215, 112
        %v1227 = vpop.permute.xlu0 %1226
        %v1228 = vsel %vm750, %v1217, %v1219
        %v1229 = vsel %vm750, %v1221, %v1223
        %v1230 = vsel %vm750, %v1225, %v1227
        %v1240 = vadd.f32 %v1177, %v1217
        %v1241 = vadd.f32 %v1178, %v1228
        %v1242 = vadd.f32 %v1179, %v1219
        %v1243 = vadd.f32 %v1180, %v1221
        %v1244 = vadd.f32 %v1181, %v1229
        %v1245 = vadd.f32 %v1182, %v1223
        %v1246 = vadd.f32 %v1183, %v1225
        %v1247 = vadd.f32 %v1184, %v1230
        %v1248 = vadd.f32 %v1185, %v1227
        %v1249 = vlaneseq
        %v1250 = vshrl.u32 %v1249, 7
        %v1251 = vsub.s32 0, %v1250
        %v1252 = vrot.slane %v722, %v1251
        %v1253 = vlaneseq
        %v1254 = vshrl.u32 %v1253, 7
        %v1255 = vsub.s32 0, %v1254
        %v1256 = vrot.slane %v723, %v1255
        %1259 = vrot.lane.b32.xlu0 %v1252, 16
        %v1260 = vpop.permute.xlu0 %1259
        %1261 = vrot.lane.b32.xlu0 %v1256, 16
        %v1262 = vpop.permute.xlu0 %1261
        %v1263 = vsel %vm840, %v1260, %v1262
        %v1267 = vmul.f32 %v1109, %v1260
        %v1268 = vmul.f32 %v1110, %v1263
        %v1269 = vmul.f32 %v1111, %v1262
        %v1270 = vmul.f32 %v910, %v1260
        %v1271 = vmul.f32 %v911, %v1263
        %v1272 = vmul.f32 %v912, %v1262
        %v1273 = vmul.f32 %v1113, %v1260
        %v1274 = vmul.f32 %v1114, %v1263
        %v1275 = vmul.f32 %v1115, %v1262
        %v1285 = vrot.slane %v1267, 2
        %v1286 = vrot.slane %v1268, 2
        %v1287 = vrot.slane %v1269, 2
        %v1288 = vrot.slane %v1270, 2
        %v1289 = vsel %vm1152, %v1285, %v1288
        %v1290 = vrot.slane %v1271, 2
        %v1291 = vsel %vm1152, %v1286, %v1290
        %v1292 = vrot.slane %v1272, 2
        %v1293 = vsel %vm1152, %v1287, %v1292
        %v1294 = vrot.slane %v1273, 2
        %v1295 = vsel %vm1152, %v1288, %v1294
        %v1296 = vrot.slane %v1274, 2
        %v1297 = vsel %vm1152, %v1290, %v1296
        %v1298 = vrot.slane %v1275, 2
        %v1299 = vsel %vm1152, %v1292, %v1298
        %1300 = vrot.lane.b32.xlu0 %v1285, 96
        %v1301 = vpop.permute.xlu0 %1300
        %1302 = vrot.lane.b32.xlu0 %v1286, 96
        %v1303 = vpop.permute.xlu0 %1302
        %1304 = vrot.lane.b32.xlu0 %v1287, 96
        %v1305 = vpop.permute.xlu0 %1304
        %1306 = vrot.lane.b32.xlu0 %v1289, 96
        %v1307 = vpop.permute.xlu0 %1306
        %1308 = vrot.lane.b32.xlu0 %v1291, 96
        %v1309 = vpop.permute.xlu0 %1308
        %1310 = vrot.lane.b32.xlu0 %v1293, 96
        %v1311 = vpop.permute.xlu0 %1310
        %1312 = vrot.lane.b32.xlu0 %v1295, 96
        %v1313 = vpop.permute.xlu0 %1312
        %1314 = vrot.lane.b32.xlu0 %v1297, 96
        %v1315 = vpop.permute.xlu0 %1314
        %1316 = vrot.lane.b32.xlu0 %v1299, 96
        %v1317 = vpop.permute.xlu0 %1316
        %v1318 = vsel %vm881, %v1301, %v1303
        %v1319 = vsel %vm881, %v1303, %v1305
        %v1320 = vsel %vm881, %v1307, %v1309
        %v1321 = vsel %vm881, %v1309, %v1311
        %v1322 = vsel %vm881, %v1313, %v1315
        %v1323 = vsel %vm881, %v1315, %v1317
        %v1333 = vadd.f32 %v1240, %v1301
        %v1334 = vadd.f32 %v1241, %v1318
        %v1335 = vadd.f32 %v1242, %v1319
        %v1336 = vadd.f32 %v1243, %v1307
        %v1337 = vadd.f32 %v1244, %v1320
        %v1338 = vadd.f32 %v1245, %v1321
        %v1339 = vadd.f32 %v1246, %v1313
        %v1340 = vadd.f32 %v1247, %v1322
        %v1341 = vadd.f32 %v1248, %v1323
        %v1342 = vld [vmem:[%s4] sm:$0x3]
        %v1344 = vlaneseq
        %v1345 = vshrl.u32 %v1344, 7
        %v1346 = vsub.s32 0, %v1345
        %v1347 = vrot.slane %v1342, %v1346
        %v1348 = vlaneseq
        %v1349 = vshrl.u32 %v1348, 7
        %v1350 = vsub.s32 1, %v1349
        %v1351 = vrot.slane %v1342, %v1350
        %1352 = vrot.lane.b32.xlu0 %v1347, 112
        %v1353 = vpop.permute.xlu0 %1352
        %1354 = vrot.lane.b32.xlu0 %v1351, 112
        %v1355 = vpop.permute.xlu0 %1354
        %v1356 = vsel %vm750, %v1353, %v1355
        %v1360 = vadd.f32 %v1333, %v1353
        %v1361 = vadd.f32 %v1334, %v1356
        %v1362 = vadd.f32 %v1335, %v1355
        %v1363 = vadd.f32 %v1336, %v1353
        %v1364 = vadd.f32 %v1337, %v1356
        %v1365 = vadd.f32 %v1338, %v1355
        %v1366 = vadd.f32 %v1339, %v1353
        %v1367 = vadd.f32 %v1340, %v1356
        %v1368 = vadd.f32 %v1341, %v1355
        %v1369 = vld [vmem:[#allocation9] sm:$0xff]
        %v1370 = vld [vmem:[#allocation9 + $0x8] sm:$0xff]
        %v1371 = vld [vmem:[#allocation9 + $0x10] sm:$0xff]
        %v1372 = vld [vmem:[#allocation9 + $0x18] sm:$0xff]
        %v1373 = vld [vmem:[#allocation9 + $0x20] sm:$0xff]
        %v1374 = vld [vmem:[#allocation9 + $0x28] sm:$0xff]
        %v1375 = vld [vmem:[#allocation9 + $0x30] sm:$0xff]
        %v1376 = vld [vmem:[#allocation9 + $0x38] sm:$0xff]
        %v1377 = vld [vmem:[#allocation9 + $0x40] sm:$0xff]
        %v1378 = vld [vmem:[#allocation9 + $0x48] sm:$0xff]
        %v1379 = vld [vmem:[#allocation9 + $0x50] sm:$0xff]
        %v1380 = vld [vmem:[#allocation9 + $0x58] sm:$0xff]
        %v1381 = vld [vmem:[#allocation9 + $0x60] sm:$0xff]
        %v1382 = vld [vmem:[#allocation9 + $0x68] sm:$0xff]
        %v1383 = vld [vmem:[#allocation9 + $0x70] sm:$0xff]
        %v1384 = vld [vmem:[#allocation9 + $0x78] sm:$0xff]
        %v1385 = vld [vmem:[#allocation9 + $0x80] sm:$0xff]
        %v1386 = vld [vmem:[#allocation9 + $0x88] sm:$0xff]
        %v1387 = vld [vmem:[#allocation9 + $0x90] sm:$0xff]
        %v1388 = vld [vmem:[#allocation9 + $0x98] sm:$0xff]
        %v1389 = vld [vmem:[#allocation9 + $0xa0] sm:$0xff]
        %v1390 = vld [vmem:[#allocation9 + $0xa8] sm:$0xff]
        %v1391 = vld [vmem:[#allocation9 + $0xb0] sm:$0xff]
        %v1392 = vld [vmem:[#allocation9 + $0xb8] sm:$0xff]
        %v1393 = vld [vmem:[#allocation9 + $0xc0] sm:$0xff]
        %v1394 = vld [vmem:[#allocation9 + $0xc8] sm:$0xff]
        %v1395 = vld [vmem:[#allocation9 + $0xd0] sm:$0xff]
        %v1396 = vld [vmem:[#allocation9 + $0xd8] sm:$0xff]
        %v1397 = vld [vmem:[#allocation9 + $0xe0] sm:$0xff]
        %v1398 = vld [vmem:[#allocation9 + $0xe8] sm:$0xff]
        %v1399 = vld [vmem:[#allocation9 + $0xf0] sm:$0xff]
        %v1400 = vld [vmem:[#allocation9 + $0xf8] sm:$0xff]
        %v1401 = vld [vmem:[#allocation9 + $0x100] sm:$0xff]
        %v1402 = vld [vmem:[#allocation9 + $0x108] sm:$0xff]
        %v1403 = vld [vmem:[#allocation9 + $0x110] sm:$0xff]
        %v1404 = vld [vmem:[#allocation9 + $0x118] sm:$0xff]
        %v1405 = vld [vmem:[#allocation9 + $0x120] sm:$0xff]
        %v1406 = vld [vmem:[#allocation9 + $0x128] sm:$0xff]
        %v1407 = vld [vmem:[#allocation9 + $0x130] sm:$0xff]
        %v1408 = vld [vmem:[#allocation9 + $0x138] sm:$0xff]
        %v1409 = vld [vmem:[#allocation9 + $0x140] sm:$0xff]
        %v1410 = vld [vmem:[#allocation9 + $0x148] sm:$0xff]
        %v1411 = vld [vmem:[#allocation9 + $0x150] sm:$0xff]
        %v1412 = vld [vmem:[#allocation9 + $0x158] sm:$0xff]
        %v1413 = vld [vmem:[#allocation9 + $0x160] sm:$0xff]
        %v1414 = vld [vmem:[#allocation9 + $0x168] sm:$0xff]
        %v1415 = vld [vmem:[#allocation9 + $0x170] sm:$0xff]
        %v1416 = vld [vmem:[#allocation9 + $0x178] sm:$0xff]
        %v1417 = vld [vmem:[#allocation9 + $0x180] sm:$0xff]
        %v1418 = vld [vmem:[#allocation9 + $0x188] sm:$0xff]
        %v1419 = vld [vmem:[#allocation9 + $0x190] sm:$0xff]
        %v1420 = vld [vmem:[#allocation9 + $0x198] sm:$0xff]
        %v1421 = vld [vmem:[#allocation9 + $0x1a0] sm:$0xff]
        %v1422 = vld [vmem:[#allocation9 + $0x1a8] sm:$0xff]
        %v1423 = vld [vmem:[#allocation9 + $0x1b0] sm:$0xff]
        %v1424 = vld [vmem:[#allocation9 + $0x1b8] sm:$0xff]
        %v1425 = vld [vmem:[#allocation9 + $0x1c0] sm:$0xff]
        %v1426 = vld [vmem:[#allocation9 + $0x1c8] sm:$0xff]
        %v1427 = vld [vmem:[#allocation9 + $0x1d0] sm:$0xff]
        %v1428 = vld [vmem:[#allocation9 + $0x1d8] sm:$0xff]
        %v1429 = vld [vmem:[#allocation9 + $0x1e0] sm:$0xff]
        %v1430 = vld [vmem:[#allocation9 + $0x1e8] sm:$0xff]
        %v1431 = vld [vmem:[#allocation9 + $0x1f0] sm:$0xff]
        %v1432 = vld [vmem:[#allocation9 + $0x1f8] sm:$0xff]
        %v1433 = vld [vmem:[%s6] sm:$0x3]
        %v1435 = vlaneseq
        %v1436 = vshrl.u32 %v1435, 7
        %v1437 = vsub.s32 0, %v1436
        %v1438 = vrot.slane %v1433, %v1437
        %v1439 = vlaneseq
        %v1440 = vshrl.u32 %v1439, 7
        %v1441 = vsub.s32 1, %v1440
        %v1442 = vrot.slane %v1433, %v1441
        %vm1454 = vcmask 1040384
        %v1455 = vrot.slane %v1360, 7
        %v1456 = vrot.slane %v1363, 7
        %v1457 = vsel %vm1454, %v1455, %v1456
        %v1458 = vrot.slane %v1361, 7
        %v1459 = vrot.slane %v1364, 7
        %v1460 = vsel %vm1454, %v1458, %v1459
        %v1461 = vrot.slane %v1362, 7
        %v1462 = vrot.slane %v1365, 7
        %v1463 = vsel %vm1454, %v1461, %v1462
        %v1464 = vrot.slane %v1366, 7
        %v1465 = vsel %vm1454, %v1456, %v1464
        %v1466 = vrot.slane %v1367, 7
        %v1467 = vsel %vm1454, %v1459, %v1466
        %v1468 = vrot.slane %v1368, 7
        %v1469 = vsel %vm1454, %v1462, %v1468
        %1470 = vrot.lane.b32.xlu0 %v1457, 16
        %v1471 = vpop.permute.xlu0 %1470
        %1472 = vrot.lane.b32.xlu0 %v1460, 16
        %v1473 = vpop.permute.xlu0 %1472
        %1474 = vrot.lane.b32.xlu0 %v1463, 16
        %v1475 = vpop.permute.xlu0 %1474
        %1476 = vrot.lane.b32.xlu0 %v1465, 16
        %v1477 = vpop.permute.xlu0 %1476
        %1478 = vrot.lane.b32.xlu0 %v1467, 16
        %v1479 = vpop.permute.xlu0 %1478
        %1480 = vrot.lane.b32.xlu0 %v1469, 16
        %v1481 = vpop.permute.xlu0 %1480
        %v1482 = vsel %vm840, %v1471, %v1473
        %v1483 = vsel %vm840, %v1473, %v1475
        %v1484 = vsel %vm840, %v1477, %v1479
        %v1485 = vsel %vm840, %v1479, %v1481
        %1490 = vmatprep.subr.mxu0 %v1370
        %1491 = vmatpush1.msra.mxu0 %v1369
        %1492 = vmatprep.subr.mxu0 %v1372
        %1493 = vmatpush1.msra.mxu0 %v1371
        %1494 = vmatprep.subr.mxu0 %v1374
        %1495 = vmatpush1.msra.mxu0 %v1373
        %1496 = vmatprep.subr.mxu0 %v1376
        %1497 = vmatpush1.msra.mxu0 %v1375
        %1498 = vmatprep.subr.mxu0 %v1378
        %1499 = vmatpush1.msra.mxu0 %v1377
        %1500 = vmatprep.subr.mxu0 %v1380
        %1501 = vmatpush1.msra.mxu0 %v1379
        %1502 = vmatprep.subr.mxu0 %v1382
        %1503 = vmatpush1.msra.mxu0 %v1381
        %1504 = vmatprep.subr.mxu0 %v1384
        %1505 = vmatpush1.msra.mxu0 %v1383
        %1506 = vmatprep.subr.mxu0 %v1386
        %1507 = vmatpush1.msra.mxu0 %v1385
        %1508 = vmatprep.subr.mxu0 %v1388
        %1509 = vmatpush1.msra.mxu0 %v1387
        %1510 = vmatprep.subr.mxu0 %v1390
        %1511 = vmatpush1.msra.mxu0 %v1389
        %1512 = vmatprep.subr.mxu0 %v1392
        %1513 = vmatpush1.msra.mxu0 %v1391
        %1514 = vmatprep.subr.mxu0 %v1394
        %1515 = vmatpush1.msra.mxu0 %v1393
        %1516 = vmatprep.subr.mxu0 %v1396
        %1517 = vmatpush1.msra.mxu0 %v1395
        %1518 = vmatprep.subr.mxu0 %v1398
        %1519 = vmatpush1.msra.mxu0 %v1397
        %1520 = vmatprep.subr.mxu0 %v1400
        %1521 = vmatpush1.msra.mxu0 %v1399
        %1522 = vmatprep.subr.mxu0 %v1402
        %1523 = vmatpush1.msra.mxu0 %v1401
        %1524 = vmatprep.subr.mxu0 %v1404
        %1525 = vmatpush1.msra.mxu0 %v1403
        %1526 = vmatprep.subr.mxu0 %v1406
        %1527 = vmatpush1.msra.mxu0 %v1405
        %1528 = vmatprep.subr.mxu0 %v1408
        %1529 = vmatpush1.msra.mxu0 %v1407
        %1530 = vmatprep.subr.mxu0 %v1410
        %1531 = vmatpush1.msra.mxu0 %v1409
        %1532 = vmatprep.subr.mxu0 %v1412
        %1533 = vmatpush1.msra.mxu0 %v1411
        %1534 = vmatprep.subr.mxu0 %v1414
        %1535 = vmatpush1.msra.mxu0 %v1413
        %1536 = vmatprep.subr.mxu0 %v1416
        %1537 = vmatpush1.msra.mxu0 %v1415
        %1538 = vmatprep.subr.mxu0 %v1418
        %1539 = vmatpush1.msra.mxu0 %v1417
        %1540 = vmatprep.subr.mxu0 %v1420
        %1541 = vmatpush1.msra.mxu0 %v1419
        %1542 = vmatprep.subr.mxu0 %v1422
        %1543 = vmatpush1.msra.mxu0 %v1421
        %1544 = vmatprep.subr.mxu0 %v1424
        %1545 = vmatpush1.msra.mxu0 %v1423
        %1546 = vmatprep.subr.mxu0 %v1426
        %1547 = vmatpush1.msra.mxu0 %v1425
        %1548 = vmatprep.subr.mxu0 %v1428
        %1549 = vmatpush1.msra.mxu0 %v1427
        %1550 = vmatprep.subr.mxu0 %v1430
        %1551 = vmatpush1.msra.mxu0 %v1429
        %1552 = vmatprep.subr.mxu0 %v1432
        %1553 = vmatpush1.msra.mxu0 %v1431
        %1554 = vmatprep.mubr.f32.mxu0 %v1483
        %1555 = vmatmul.mubr.f32.gmra.mrb[0].mxu0 %v1482
        %v1556 = vpop.f32.mrb[0].mxu0
        %v1557 = vadd.f32 %v1438, %v1556
        %v1558 = vpop.f32.mrb[0].mxu0
        %v1559 = vadd.f32 %v1442, %v1558
        %1560 = vmatprep.mubr.f32.mxu0 %v1485
        %1561 = vmatmul.mubr.f32.gmra.mrb[0].mxu0 %v1484
        %v1562 = vpop.f32.mrb[0].mxu0
        %v1563 = vadd.f32 %v1438, %v1562
        %v1564 = vpop.f32.mrb[0].mxu0
        %v1565 = vadd.f32 %v1442, %v1564
        %1566 = vdwg.mxu0
        %v1567 = vsub.f32 0.0, %v1557
        %v1568 = vsub.f32 0.0, %v1559
        %v1569 = vsub.f32 0.0, %v1563
        %v1570 = vsub.f32 0.0, %v1565
        %v1571 = vmul.f32 %v1567, 1.442695
        %v1572 = vpow.pop %v1571
        %v1573 = vmul.f32 %v1568, 1.442695
        %v1574 = vpow.pop %v1573
        %v1575 = vmul.f32 %v1569, 1.442695
        %v1576 = vpow.pop %v1575
        %v1577 = vmul.f32 %v1570, 1.442695
        %v1578 = vpow.pop %v1577
        %v1579 = vadd.f32 %v1572, 1.0
        %v1580 = vadd.f32 %v1574, 1.0
        %v1581 = vadd.f32 %v1576, 1.0
        %v1582 = vadd.f32 %v1578, 1.0
        %v1583 = vrcp.pop %v1579
        %v1584 = vrcp.pop %v1580
        %v1585 = vrcp.pop %v1581
        %v1586 = vrcp.pop %v1582
        %v1591 = vrot.slane %v1583, 1
        %v1592 = vrot.slane %v1584, 1
        %v1593 = vrot.slane %v1585, 1
        %v1594 = vsel %vm944, %v1591, %v1593
        %v1595 = vrot.slane %v1586, 1
        %v1596 = vsel %vm944, %v1592, %v1595
        %1597 = vrot.lane.b32.xlu0 %v1591, 112
        %v1598 = vpop.permute.xlu0 %1597
        %1599 = vrot.lane.b32.xlu0 %v1592, 112
        %v1600 = vpop.permute.xlu0 %1599
        %1601 = vrot.lane.b32.xlu0 %v1594, 112
        %v1602 = vpop.permute.xlu0 %1601
        %1603 = vrot.lane.b32.xlu0 %v1596, 112
        %v1604 = vpop.permute.xlu0 %1603
        %1605 = vrot.lane.b32.xlu0 %v1593, 112
        %v1606 = vpop.permute.xlu0 %1605
        %1607 = vrot.lane.b32.xlu0 %v1595, 112
        %v1608 = vpop.permute.xlu0 %1607
        %v1609 = vsel %vm750, %v1598, %v1600
        %v1610 = vsel %vm750, %v1602, %v1604
        %v1611 = vsel %vm750, %v1606, %v1608
        %v1621 = vmul.f32 %v1360, %v1598
        %v1622 = vmul.f32 %v1361, %v1609
        %v1623 = vmul.f32 %v1362, %v1600
        %v1624 = vmul.f32 %v1363, %v1602
        %v1625 = vmul.f32 %v1364, %v1610
        %v1626 = vmul.f32 %v1365, %v1604
        %v1627 = vmul.f32 %v1366, %v1606
        %v1628 = vmul.f32 %v1367, %v1611
        %v1629 = vmul.f32 %v1368, %v1608
        %v1630 = vld [vmem:[#allocation11] sm:$0xff]
        %v1631 = vld [vmem:[#allocation11 + $0x8] sm:$0xff]
        %v1632 = vld [vmem:[#allocation11 + $0x10] sm:$0xff]
        %v1633 = vld [vmem:[#allocation11 + $0x18] sm:$0xff]
        %v1634 = vld [vmem:[#allocation11 + $0x20] sm:$0xff]
        %v1635 = vld [vmem:[#allocation11 + $0x28] sm:$0xff]
        %v1636 = vld [vmem:[#allocation2] sm:$0xf0]
        %v1637 = vld [vmem:[#allocation2 + $0x8] sm:$0xf0]
        %v1638 = vld [vmem:[#allocation2 + $0x10] sm:$0xf0]
        %v1639 = vld [vmem:[#allocation2 + $0x18] sm:$0xf0]
        %v1640 = vld [vmem:[#allocation2 + $0x20] sm:$0xf0]
        %v1641 = vld [vmem:[#allocation2 + $0x28] sm:$0xf0]
        %v1642 = vld [vmem:[#allocation2 + $0x30] sm:$0xff]
        %v1643 = vld [vmem:[#allocation2 + $0x38] sm:$0xff]
        %v1644 = vld [vmem:[#allocation2 + $0x40] sm:$0xff]
        %v1645 = vld [vmem:[#allocation2 + $0x48] sm:$0xff]
        %v1646 = vld [vmem:[#allocation2 + $0x50] sm:$0xff]
        %v1647 = vld [vmem:[#allocation2 + $0x58] sm:$0xff]
        %v1648 = vld [vmem:[#allocation2 + $0x60] sm:$0xf]
        %v1649 = vld [vmem:[#allocation2 + $0x68] sm:$0xf]
        %v1650 = vld [vmem:[#allocation2 + $0x70] sm:$0xf]
        %v1651 = vld [vmem:[#allocation2 + $0x78] sm:$0xf]
        %v1652 = vld [vmem:[#allocation2 + $0x80] sm:$0xf]
        %v1653 = vld [vmem:[#allocation2 + $0x88] sm:$0xf]
        %v1654 = vlaneseq
        %v1655 = vshrl.u32 %v1654, 7
        %v1656 = vsub.s32 1, %v1655
        %v1657 = vrot.slane %v1632, %v1656
        %v1658 = vlaneseq
        %v1659 = vshrl.u32 %v1658, 7
        %v1660 = vsub.s32 1, %v1659
        %v1661 = vrot.slane %v1633, %v1660
        %1664 = vrot.lane.b32.xlu0 %v1657, 64
        %v1665 = vpop.permute.xlu0 %1664
        %1666 = vrot.lane.b32.xlu0 %v1661, 64
        %v1667 = vpop.permute.xlu0 %1666
        %vm1668 = vcmask 523264
        %v1669 = vsel %vm1668, %v1665, %v1667
        %v1673 = vmul.f32 %v1636, %v1665
        %v1674 = vmul.f32 %v1637, %v1669
        %v1675 = vmul.f32 %v1638, %v1667
        %v1676 = vmul.f32 %v1642, %v1665
        %v1677 = vmul.f32 %v1643, %v1669
        %v1678 = vmul.f32 %v1644, %v1667
        %v1679 = vmul.f32 %v1648, %v1665
        %v1680 = vmul.f32 %v1649, %v1669
        %v1681 = vmul.f32 %v1650, %v1667
        %v1682 = vadd.f32 %v1673, 0.0
        %v1683 = vadd.f32 %v1674, 0.0
        %v1684 = vadd.f32 %v1675, 0.0
        %v1685 = vadd.f32 %v1676, 0.0
        %v1686 = vadd.f32 %v1677, 0.0
        %v1687 = vadd.f32 %v1678, 0.0
        %v1688 = vadd.f32 %v1679, 0.0
        %v1689 = vadd.f32 %v1680, 0.0
        %v1690 = vadd.f32 %v1681, 0.0
        %v1691 = vlaneseq
        %v1692 = vshrl.u32 %v1691, 7
        %v1693 = vsub.s32 2, %v1692
        %v1694 = vrot.slane %v1632, %v1693
        %v1695 = vlaneseq
        %v1696 = vshrl.u32 %v1695, 7
        %v1697 = vsub.s32 2, %v1696
        %v1698 = vrot.slane %v1633, %v1697
        %v1699 = vmul.f32 %v1638, %v1694
        %v1700 = vmul.f32 %v1639, %v1698
        %v1701 = vmul.f32 %v1644, %v1694
        %v1702 = vmul.f32 %v1645, %v1698
        %v1703 = vmul.f32 %v1650, %v1694
        %v1704 = vmul.f32 %v1651, %v1698
        %1711 = vrot.lane.b32.xlu0 %v1699, 64
        %v1712 = vpop.permute.xlu0 %1711
        %1713 = vrot.lane.b32.xlu0 %v1700, 64
        %v1714 = vpop.permute.xlu0 %1713
        %1715 = vrot.lane.b32.xlu0 %v1701, 64
        %v1716 = vpop.permute.xlu0 %1715
        %1717 = vrot.lane.b32.xlu0 %v1702, 64
        %v1718 = vpop.permute.xlu0 %1717
        %1719 = vrot.lane.b32.xlu0 %v1703, 64
        %v1720 = vpop.permute.xlu0 %1719
        %1721 = vrot.lane.b32.xlu0 %v1704, 64
        %v1722 = vpop.permute.xlu0 %1721
        %v1723 = vsel %vm1668, %v1712, %v1714
        %v1724 = vsel %vm1668, %v1716, %v1718
        %v1725 = vsel %vm1668, %v1720, %v1722
        %v1735 = vadd.f32 %v1682, %v1712
        %v1736 = vadd.f32 %v1683, %v1723
        %v1737 = vadd.f32 %v1684, %v1714
        %v1738 = vadd.f32 %v1685, %v1716
        %v1739 = vadd.f32 %v1686, %v1724
        %v1740 = vadd.f32 %v1687, %v1718
        %v1741 = vadd.f32 %v1688, %v1720
        %v1742 = vadd.f32 %v1689, %v1725
        %v1743 = vadd.f32 %v1690, %v1722
        %v1744 = vlaneseq
        %v1745 = vshrl.u32 %v1744, 7
        %v1746 = vsub.s32 3, %v1745
        %v1747 = vrot.slane %v1632, %v1746
        %v1748 = vlaneseq
        %v1749 = vshrl.u32 %v1748, 7
        %v1750 = vsub.s32 3, %v1749
        %v1751 = vrot.slane %v1633, %v1750
        %1754 = vrot.lane.b32.xlu0 %v1747, 64
        %v1755 = vpop.permute.xlu0 %1754
        %1756 = vrot.lane.b32.xlu0 %v1751, 64
        %v1757 = vpop.permute.xlu0 %1756
        %v1758 = vsel %vm1668, %v1755, %v1757
        %v1762 = vmul.f32 %v1639, %v1755
        %v1763 = vmul.f32 %v1640, %v1758
        %v1764 = vmul.f32 %v1641, %v1757
        %v1765 = vmul.f32 %v1645, %v1755
        %v1766 = vmul.f32 %v1646, %v1758
        %v1767 = vmul.f32 %v1647, %v1757
        %v1768 = vmul.f32 %v1651, %v1755
        %v1769 = vmul.f32 %v1652, %v1758
        %v1770 = vmul.f32 %v1653, %v1757
        %v1771 = vadd.f32 %v1735, %v1762
        %v1772 = vadd.f32 %v1736, %v1763
        %v1773 = vadd.f32 %v1737, %v1764
        %v1774 = vadd.f32 %v1738, %v1765
        %v1775 = vadd.f32 %v1739, %v1766
        %v1776 = vadd.f32 %v1740, %v1767
        %v1777 = vadd.f32 %v1741, %v1768
        %v1778 = vadd.f32 %v1742, %v1769
        %v1779 = vadd.f32 %v1743, %v1770
        %v1780 = vld [vmem:[#allocation2 + $0x38] sm:$0xfc]
        %v1781 = vld [vmem:[#allocation2 + $0x40] sm:$0xfc]
        %v1782 = vld [vmem:[#allocation2 + $0x48] sm:$0xfc]
        %v1783 = vld [vmem:[#allocation2 + $0x50] sm:$0xfc]
        %v1784 = vld [vmem:[#allocation2 + $0x98] sm:$0x3]
        %v1785 = vld [vmem:[#allocation2 + $0xa0] sm:$0x3]
        %v1786 = vld [vmem:[#allocation2 + $0xa8] sm:$0x3]
        %v1787 = vld [vmem:[#allocation2 + $0xb0] sm:$0x3]
        %v1788 = vlaneseq
        %v1789 = vshrl.u32 %v1788, 7
        %v1790 = vsub.s32 0, %v1789
        %v1791 = vrot.slane %v1630, %v1790
        %v1792 = vlaneseq
        %v1793 = vshrl.u32 %v1792, 7
        %v1794 = vsub.s32 0, %v1793
        %v1795 = vrot.slane %v1631, %v1794
        %1798 = vrot.lane.b32.xlu0 %v1791, 32
        %v1799 = vpop.permute.xlu0 %1798
        %1800 = vrot.lane.b32.xlu0 %v1795, 32
        %v1801 = vpop.permute.xlu0 %1800
        %vm1802 = vcmask 261120
        %v1803 = vsel %vm1802, %v1799, %v1801
        %v1807 = vmul.f32 %v1780, %v1799
        %v1808 = vmul.f32 %v1781, %v1803
        %v1809 = vmul.f32 %v1782, %v1801
        %v1810 = vmul.f32 %v728, %v1799
        %v1811 = vmul.f32 %v729, %v1803
        %v1812 = vmul.f32 %v730, %v1801
        %v1813 = vmul.f32 %v1784, %v1799
        %v1814 = vmul.f32 %v1785, %v1803
        %v1815 = vmul.f32 %v1786, %v1801
        %vm1825 = vcmask 1041408
        %v1826 = vrot.slane %v1807, 6
        %v1827 = vrot.slane %v1808, 6
        %v1828 = vrot.slane %v1809, 6
        %v1829 = vrot.slane %v1810, 6
        %v1830 = vsel %vm1825, %v1826, %v1829
        %v1831 = vrot.slane %v1811, 6
        %v1832 = vsel %vm1825, %v1827, %v1831
        %v1833 = vrot.slane %v1812, 6
        %v1834 = vsel %vm1825, %v1828, %v1833
        %v1835 = vrot.slane %v1813, 6
        %v1836 = vsel %vm1825, %v1829, %v1835
        %v1837 = vrot.slane %v1814, 6
        %v1838 = vsel %vm1825, %v1831, %v1837
        %v1839 = vrot.slane %v1815, 6
        %v1840 = vsel %vm1825, %v1833, %v1839
        %1841 = vrot.lane.b32.xlu0 %v1826, 32
        %v1842 = vpop.permute.xlu0 %1841
        %1843 = vrot.lane.b32.xlu0 %v1827, 32
        %v1844 = vpop.permute.xlu0 %1843
        %1845 = vrot.lane.b32.xlu0 %v1828, 32
        %v1846 = vpop.permute.xlu0 %1845
        %1847 = vrot.lane.b32.xlu0 %v1830, 32
        %v1848 = vpop.permute.xlu0 %1847
        %1849 = vrot.lane.b32.xlu0 %v1832, 32
        %v1850 = vpop.permute.xlu0 %1849
        %1851 = vrot.lane.b32.xlu0 %v1834, 32
        %v1852 = vpop.permute.xlu0 %1851
        %1853 = vrot.lane.b32.xlu0 %v1836, 32
        %v1854 = vpop.permute.xlu0 %1853
        %1855 = vrot.lane.b32.xlu0 %v1838, 32
        %v1856 = vpop.permute.xlu0 %1855
        %1857 = vrot.lane.b32.xlu0 %v1840, 32
        %v1858 = vpop.permute.xlu0 %1857
        %v1859 = vsel %vm1802, %v1842, %v1844
        %v1860 = vsel %vm1802, %v1844, %v1846
        %v1861 = vsel %vm1802, %v1848, %v1850
        %v1862 = vsel %vm1802, %v1850, %v1852
        %v1863 = vsel %vm1802, %v1854, %v1856
        %v1864 = vsel %vm1802, %v1856, %v1858
        %v1874 = vadd.f32 %v1771, %v1842
        %v1875 = vadd.f32 %v1772, %v1859
        %v1876 = vadd.f32 %v1773, %v1860
        %v1877 = vadd.f32 %v1774, %v1848
        %v1878 = vadd.f32 %v1775, %v1861
        %v1879 = vadd.f32 %v1776, %v1862
        %v1880 = vadd.f32 %v1777, %v1854
        %v1881 = vadd.f32 %v1778, %v1863
        %v1882 = vadd.f32 %v1779, %v1864
        %v1883 = vlaneseq
        %v1884 = vshrl.u32 %v1883, 7
        %v1885 = vsub.s32 1, %v1884
        %v1886 = vrot.slane %v1630, %v1885
        %v1887 = vlaneseq
        %v1888 = vshrl.u32 %v1887, 7
        %v1889 = vsub.s32 1, %v1888
        %v1890 = vrot.slane %v1631, %v1889
        %v1891 = vmul.f32 %v1781, %v1886
        %v1892 = vmul.f32 %v1782, %v1890
        %v1893 = vmul.f32 %v729, %v1886
        %v1894 = vmul.f32 %v730, %v1890
        %v1895 = vmul.f32 %v1785, %v1886
        %v1896 = vmul.f32 %v1786, %v1890
        %v1903 = vrot.slane %v1891, 6
        %v1904 = vrot.slane %v1892, 6
        %v1905 = vrot.slane %v1893, 6
        %v1906 = vsel %vm1825, %v1903, %v1905
        %v1907 = vrot.slane %v1894, 6
        %v1908 = vsel %vm1825, %v1904, %v1907
        %v1909 = vrot.slane %v1895, 6
        %v1910 = vsel %vm1825, %v1905, %v1909
        %v1911 = vrot.slane %v1896, 6
        %v1912 = vsel %vm1825, %v1907, %v1911
        %1913 = vrot.lane.b32.xlu0 %v1903, 64
        %v1914 = vpop.permute.xlu0 %1913
        %1915 = vrot.lane.b32.xlu0 %v1904, 64
        %v1916 = vpop.permute.xlu0 %1915
        %1917 = vrot.lane.b32.xlu0 %v1906, 64
        %v1918 = vpop.permute.xlu0 %1917
        %1919 = vrot.lane.b32.xlu0 %v1908, 64
        %v1920 = vpop.permute.xlu0 %1919
        %1921 = vrot.lane.b32.xlu0 %v1910, 64
        %v1922 = vpop.permute.xlu0 %1921
        %1923 = vrot.lane.b32.xlu0 %v1912, 64
        %v1924 = vpop.permute.xlu0 %1923
        %v1925 = vsel %vm1668, %v1914, %v1916
        %v1926 = vsel %vm1668, %v1918, %v1920
        %v1927 = vsel %vm1668, %v1922, %v1924
        %v1937 = vadd.f32 %v1874, %v1914
        %v1938 = vadd.f32 %v1875, %v1925
        %v1939 = vadd.f32 %v1876, %v1916
        %v1940 = vadd.f32 %v1877, %v1918
        %v1941 = vadd.f32 %v1878, %v1926
        %v1942 = vadd.f32 %v1879, %v1920
        %v1943 = vadd.f32 %v1880, %v1922
        %v1944 = vadd.f32 %v1881, %v1927
        %v1945 = vadd.f32 %v1882, %v1924
        %v1946 = vlaneseq
        %v1947 = vshrl.u32 %v1946, 7
        %v1948 = vsub.s32 2, %v1947
        %v1949 = vrot.slane %v1630, %v1948
        %v1950 = vlaneseq
        %v1951 = vshrl.u32 %v1950, 7
        %v1952 = vsub.s32 2, %v1951
        %v1953 = vrot.slane %v1631, %v1952
        %1956 = vrot.lane.b32.xlu0 %v1949, 96
        %v1957 = vpop.permute.xlu0 %1956
        %1958 = vrot.lane.b32.xlu0 %v1953, 96
        %v1959 = vpop.permute.xlu0 %1958
        %v1960 = vsel %vm881, %v1957, %v1959
        %v1964 = vmul.f32 %v1781, %v1957
        %v1965 = vmul.f32 %v1782, %v1960
        %v1966 = vmul.f32 %v1783, %v1959
        %v1967 = vmul.f32 %v729, %v1957
        %v1968 = vmul.f32 %v730, %v1960
        %v1969 = vmul.f32 %v731, %v1959
        %v1970 = vmul.f32 %v1785, %v1957
        %v1971 = vmul.f32 %v1786, %v1960
        %v1972 = vmul.f32 %v1787, %v1959
        %v1982 = vrot.slane %v1964, 6
        %v1983 = vrot.slane %v1965, 6
        %v1984 = vrot.slane %v1966, 6
        %v1985 = vrot.slane %v1967, 6
        %v1986 = vsel %vm1825, %v1982, %v1985
        %v1987 = vrot.slane %v1968, 6
        %v1988 = vsel %vm1825, %v1983, %v1987
        %v1989 = vrot.slane %v1969, 6
        %v1990 = vsel %vm1825, %v1984, %v1989
        %v1991 = vrot.slane %v1970, 6
        %v1992 = vsel %vm1825, %v1985, %v1991
        %v1993 = vrot.slane %v1971, 6
        %v1994 = vsel %vm1825, %v1987, %v1993
        %v1995 = vrot.slane %v1972, 6
        %v1996 = vsel %vm1825, %v1989, %v1995
        %1997 = vrot.lane.b32.xlu0 %v1982, 96
        %v1998 = vpop.permute.xlu0 %1997
        %1999 = vrot.lane.b32.xlu0 %v1983, 96
        %v2000 = vpop.permute.xlu0 %1999
        %2001 = vrot.lane.b32.xlu0 %v1984, 96
        %v2002 = vpop.permute.xlu0 %2001
        %2003 = vrot.lane.b32.xlu0 %v1986, 96
        %v2004 = vpop.permute.xlu0 %2003
        %2005 = vrot.lane.b32.xlu0 %v1988, 96
        %v2006 = vpop.permute.xlu0 %2005
        %2007 = vrot.lane.b32.xlu0 %v1990, 96
        %v2008 = vpop.permute.xlu0 %2007
        %2009 = vrot.lane.b32.xlu0 %v1992, 96
        %v2010 = vpop.permute.xlu0 %2009
        %2011 = vrot.lane.b32.xlu0 %v1994, 96
        %v2012 = vpop.permute.xlu0 %2011
        %2013 = vrot.lane.b32.xlu0 %v1996, 96
        %v2014 = vpop.permute.xlu0 %2013
        %v2015 = vsel %vm881, %v1998, %v2000
        %v2016 = vsel %vm881, %v2000, %v2002
        %v2017 = vsel %vm881, %v2004, %v2006
        %v2018 = vsel %vm881, %v2006, %v2008
        %v2019 = vsel %vm881, %v2010, %v2012
        %v2020 = vsel %vm881, %v2012, %v2014
        %v2030 = vadd.f32 %v1937, %v2015
        %v2031 = vadd.f32 %v1938, %v2016
        %v2032 = vadd.f32 %v1939, %v2002
        %v2033 = vadd.f32 %v1940, %v2017
        %v2034 = vadd.f32 %v1941, %v2018
        %v2035 = vadd.f32 %v1942, %v2008
        %v2036 = vadd.f32 %v1943, %v2019
        %v2037 = vadd.f32 %v1944, %v2020
        %v2038 = vadd.f32 %v1945, %v2014
        %v2039 = vlaneseq
        %v2040 = vshrl.u32 %v2039, 7
        %v2041 = vsub.s32 3, %v2040
        %v2042 = vrot.slane %v1630, %v2041
        %v2043 = vlaneseq
        %v2044 = vshrl.u32 %v2043, 7
        %v2045 = vsub.s32 3, %v2044
        %v2046 = vrot.slane %v1631, %v2045
        %2049 = vrot.lane.b32.xlu0 %v2042, 32
        %v2050 = vpop.permute.xlu0 %2049
        %2051 = vrot.lane.b32.xlu0 %v2046, 32
        %v2052 = vpop.permute.xlu0 %2051
        %v2053 = vsel %vm1802, %v2050, %v2052
        %v2057 = vmul.f32 %v728, %v2050
        %v2058 = vmul.f32 %v729, %v2053
        %v2059 = vmul.f32 %v730, %v2052
        %v2060 = vmul.f32 %v909, %v2050
        %v2061 = vmul.f32 %v910, %v2053
        %v2062 = vmul.f32 %v911, %v2052
        %vm2069 = vcmask 1043456
        %v2070 = vrot.slane %v2057, 4
        %v2071 = vrot.slane %v2058, 4
        %v2072 = vrot.slane %v2059, 4
        %v2073 = vrot.slane %v2060, 4
        %v2074 = vsel %vm2069, %v2070, %v2073
        %v2075 = vrot.slane %v2061, 4
        %v2076 = vsel %vm2069, %v2071, %v2075
        %v2077 = vrot.slane %v2062, 4
        %v2078 = vsel %vm2069, %v2072, %v2077
        %2079 = vrot.lane.b32.xlu0 %v2070, 32
        %v2080 = vpop.permute.xlu0 %2079
        %2081 = vrot.lane.b32.xlu0 %v2071, 32
        %v2082 = vpop.permute.xlu0 %2081
        %2083 = vrot.lane.b32.xlu0 %v2072, 32
        %v2084 = vpop.permute.xlu0 %2083
        %2085 = vrot.lane.b32.xlu0 %v2074, 32
        %v2086 = vpop.permute.xlu0 %2085
        %2087 = vrot.lane.b32.xlu0 %v2076, 32
        %v2088 = vpop.permute.xlu0 %2087
        %2089 = vrot.lane.b32.xlu0 %v2078, 32
        %v2090 = vpop.permute.xlu0 %2089
        %2091 = vrot.lane.b32.xlu0 %v2073, 32
        %v2092 = vpop.permute.xlu0 %2091
        %2093 = vrot.lane.b32.xlu0 %v2075, 32
        %v2094 = vpop.permute.xlu0 %2093
        %2095 = vrot.lane.b32.xlu0 %v2077, 32
        %v2096 = vpop.permute.xlu0 %2095
        %v2097 = vsel %vm1802, %v2080, %v2082
        %v2098 = vsel %vm1802, %v2082, %v2084
        %v2099 = vsel %vm1802, %v2086, %v2088
        %v2100 = vsel %vm1802, %v2088, %v2090
        %v2101 = vsel %vm1802, %v2092, %v2094
        %v2102 = vsel %vm1802, %v2094, %v2096
        %v2112 = vadd.f32 %v2030, %v2080
        %v2113 = vadd.f32 %v2031, %v2097
        %v2114 = vadd.f32 %v2032, %v2098
        %v2115 = vadd.f32 %v2033, %v2086
        %v2116 = vadd.f32 %v2034, %v2099
        %v2117 = vadd.f32 %v2035, %v2100
        %v2118 = vadd.f32 %v2036, %v2092
        %v2119 = vadd.f32 %v2037, %v2101
        %v2120 = vadd.f32 %v2038, %v2102
        %v2121 = vlaneseq
        %v2122 = vshrl.u32 %v2121, 7
        %v2123 = vsub.s32 4, %v2122
        %v2124 = vrot.slane %v1630, %v2123
        %v2125 = vlaneseq
        %v2126 = vshrl.u32 %v2125, 7
        %v2127 = vsub.s32 4, %v2126
        %v2128 = vrot.slane %v1631, %v2127
        %v2129 = vmul.f32 %v729, %v2124
        %v2130 = vmul.f32 %v730, %v2128
        %v2131 = vmul.f32 %v910, %v2124
        %v2132 = vmul.f32 %v911, %v2128
        %v2137 = vrot.slane %v2129, 4
        %v2138 = vrot.slane %v2130, 4
        %v2139 = vrot.slane %v2131, 4
        %v2140 = vsel %vm2069, %v2137, %v2139
        %v2141 = vrot.slane %v2132, 4
        %v2142 = vsel %vm2069, %v2138, %v2141
        %2143 = vrot.lane.b32.xlu0 %v2137, 64
        %v2144 = vpop.permute.xlu0 %2143
        %2145 = vrot.lane.b32.xlu0 %v2138, 64
        %v2146 = vpop.permute.xlu0 %2145
        %2147 = vrot.lane.b32.xlu0 %v2140, 64
        %v2148 = vpop.permute.xlu0 %2147
        %2149 = vrot.lane.b32.xlu0 %v2142, 64
        %v2150 = vpop.permute.xlu0 %2149
        %2151 = vrot.lane.b32.xlu0 %v2139, 64
        %v2152 = vpop.permute.xlu0 %2151
        %2153 = vrot.lane.b32.xlu0 %v2141, 64
        %v2154 = vpop.permute.xlu0 %2153
        %v2155 = vsel %vm1668, %v2144, %v2146
        %v2156 = vsel %vm1668, %v2148, %v2150
        %v2157 = vsel %vm1668, %v2152, %v2154
        %v2167 = vadd.f32 %v2112, %v2144
        %v2168 = vadd.f32 %v2113, %v2155
        %v2169 = vadd.f32 %v2114, %v2146
        %v2170 = vadd.f32 %v2115, %v2148
        %v2171 = vadd.f32 %v2116, %v2156
        %v2172 = vadd.f32 %v2117, %v2150
        %v2173 = vadd.f32 %v2118, %v2152
        %v2174 = vadd.f32 %v2119, %v2157
        %v2175 = vadd.f32 %v2120, %v2154
        %v2176 = vlaneseq
        %v2177 = vshrl.u32 %v2176, 7
        %v2178 = vsub.s32 5, %v2177
        %v2179 = vrot.slane %v1630, %v2178
        %v2180 = vlaneseq
        %v2181 = vshrl.u32 %v2180, 7
        %v2182 = vsub.s32 5, %v2181
        %v2183 = vrot.slane %v1631, %v2182
        %2186 = vrot.lane.b32.xlu0 %v2179, 96
        %v2187 = vpop.permute.xlu0 %2186
        %2188 = vrot.lane.b32.xlu0 %v2183, 96
        %v2189 = vpop.permute.xlu0 %2188
        %v2190 = vsel %vm881, %v2187, %v2189
        %v2194 = vmul.f32 %v729, %v2187
        %v2195 = vmul.f32 %v730, %v2190
        %v2196 = vmul.f32 %v731, %v2189
        %v2197 = vmul.f32 %v910, %v2187
        %v2198 = vmul.f32 %v911, %v2190
        %v2199 = vmul.f32 %v912, %v2189
        %v2206 = vrot.slane %v2194, 4
        %v2207 = vrot.slane %v2195, 4
        %v2208 = vrot.slane %v2196, 4
        %v2209 = vrot.slane %v2197, 4
        %v2210 = vsel %vm2069, %v2206, %v2209
        %v2211 = vrot.slane %v2198, 4
        %v2212 = vsel %vm2069, %v2207, %v2211
        %v2213 = vrot.slane %v2199, 4
        %v2214 = vsel %vm2069, %v2208, %v2213
        %2215 = vrot.lane.b32.xlu0 %v2206, 96
        %v2216 = vpop.permute.xlu0 %2215
        %2217 = vrot.lane.b32.xlu0 %v2207, 96
        %v2218 = vpop.permute.xlu0 %2217
        %2219 = vrot.lane.b32.xlu0 %v2208, 96
        %v2220 = vpop.permute.xlu0 %2219
        %2221 = vrot.lane.b32.xlu0 %v2210, 96
        %v2222 = vpop.permute.xlu0 %2221
        %2223 = vrot.lane.b32.xlu0 %v2212, 96
        %v2224 = vpop.permute.xlu0 %2223
        %2225 = vrot.lane.b32.xlu0 %v2214, 96
        %v2226 = vpop.permute.xlu0 %2225
        %2227 = vrot.lane.b32.xlu0 %v2209, 96
        %v2228 = vpop.permute.xlu0 %2227
        %2229 = vrot.lane.b32.xlu0 %v2211, 96
        %v2230 = vpop.permute.xlu0 %2229
        %2231 = vrot.lane.b32.xlu0 %v2213, 96
        %v2232 = vpop.permute.xlu0 %2231
        %v2233 = vsel %vm881, %v2216, %v2218
        %v2234 = vsel %vm881, %v2218, %v2220
        %v2235 = vsel %vm881, %v2222, %v2224
        %v2236 = vsel %vm881, %v2224, %v2226
        %v2237 = vsel %vm881, %v2228, %v2230
        %v2238 = vsel %vm881, %v2230, %v2232
        %v2248 = vadd.f32 %v2167, %v2233
        %v2249 = vadd.f32 %v2168, %v2234
        %v2250 = vadd.f32 %v2169, %v2220
        %v2251 = vadd.f32 %v2170, %v2235
        %v2252 = vadd.f32 %v2171, %v2236
        %v2253 = vadd.f32 %v2172, %v2226
        %v2254 = vadd.f32 %v2173, %v2237
        %v2255 = vadd.f32 %v2174, %v2238
        %v2256 = vadd.f32 %v2175, %v2232
        %v2257 = vlaneseq
        %v2258 = vshrl.u32 %v2257, 7
        %v2259 = vsub.s32 4, %v2258
        %v2260 = vrot.slane %v1632, %v2259
        %v2261 = vlaneseq
        %v2262 = vshrl.u32 %v2261, 7
        %v2263 = vsub.s32 4, %v2262
        %v2264 = vrot.slane %v1633, %v2263
        %2267 = vrot.lane.b32.xlu0 %v2260, 64
        %v2268 = vpop.permute.xlu0 %2267
        %2269 = vrot.lane.b32.xlu0 %v2264, 64
        %v2270 = vpop.permute.xlu0 %2269
        %v2271 = vsel %vm1668, %v2268, %v2270
        %v2275 = vmul.f32 %v906, %v2268
        %v2276 = vmul.f32 %v728, %v2271
        %v2277 = vmul.f32 %v729, %v2270
        %v2278 = vmul.f32 %v908, %v2268
        %v2279 = vmul.f32 %v909, %v2271
        %v2280 = vmul.f32 %v910, %v2270
        %v2287 = vrot.slane %v2275, 4
        %v2288 = vrot.slane %v2276, 4
        %v2289 = vrot.slane %v2277, 4
        %v2290 = vrot.slane %v2278, 4
        %v2291 = vsel %vm2069, %v2287, %v2290
        %v2292 = vrot.slane %v2279, 4
        %v2293 = vsel %vm2069, %v2288, %v2292
        %v2294 = vrot.slane %v2280, 4
        %v2295 = vsel %vm2069, %v2289, %v2294
        %v2305 = vadd.f32 %v2248, %v2287
        %v2306 = vadd.f32 %v2249, %v2288
        %v2307 = vadd.f32 %v2250, %v2289
        %v2308 = vadd.f32 %v2251, %v2291
        %v2309 = vadd.f32 %v2252, %v2293
        %v2310 = vadd.f32 %v2253, %v2295
        %v2311 = vadd.f32 %v2254, %v2290
        %v2312 = vadd.f32 %v2255, %v2292
        %v2313 = vadd.f32 %v2256, %v2294
        %v2314 = vlaneseq
        %v2315 = vshrl.u32 %v2314, 7
        %v2316 = vsub.s32 5, %v2315
        %v2317 = vrot.slane %v1632, %v2316
        %v2318 = vlaneseq
        %v2319 = vshrl.u32 %v2318, 7
        %v2320 = vsub.s32 5, %v2319
        %v2321 = vrot.slane %v1633, %v2320
        %v2322 = vmul.f32 %v729, %v2317
        %v2323 = vmul.f32 %v730, %v2321
        %v2324 = vmul.f32 %v910, %v2317
        %v2325 = vmul.f32 %v911, %v2321
        %v2330 = vrot.slane %v2322, 4
        %v2331 = vrot.slane %v2323, 4
        %v2332 = vrot.slane %v2324, 4
        %v2333 = vsel %vm2069, %v2330, %v2332
        %v2334 = vrot.slane %v2325, 4
        %v2335 = vsel %vm2069, %v2331, %v2334
        %2336 = vrot.lane.b32.xlu0 %v2330, 64
        %v2337 = vpop.permute.xlu0 %2336
        %2338 = vrot.lane.b32.xlu0 %v2331, 64
        %v2339 = vpop.permute.xlu0 %2338
        %2340 = vrot.lane.b32.xlu0 %v2333, 64
        %v2341 = vpop.permute.xlu0 %2340
        %2342 = vrot.lane.b32.xlu0 %v2335, 64
        %v2343 = vpop.permute.xlu0 %2342
        %2344 = vrot.lane.b32.xlu0 %v2332, 64
        %v2345 = vpop.permute.xlu0 %2344
        %2346 = vrot.lane.b32.xlu0 %v2334, 64
        %v2347 = vpop.permute.xlu0 %2346
        %v2348 = vsel %vm1668, %v2337, %v2339
        %v2349 = vsel %vm1668, %v2341, %v2343
        %v2350 = vsel %vm1668, %v2345, %v2347
        %v2360 = vadd.f32 %v2305, %v2337
        %v2361 = vadd.f32 %v2306, %v2348
        %v2362 = vadd.f32 %v2307, %v2339
        %v2363 = vadd.f32 %v2308, %v2341
        %v2364 = vadd.f32 %v2309, %v2349
        %v2365 = vadd.f32 %v2310, %v2343
        %v2366 = vadd.f32 %v2311, %v2345
        %v2367 = vadd.f32 %v2312, %v2350
        %v2368 = vadd.f32 %v2313, %v2347
        %v2369 = vlaneseq
        %v2370 = vshrl.u32 %v2369, 7
        %v2371 = vsub.s32 6, %v2370
        %v2372 = vrot.slane %v1632, %v2371
        %v2373 = vlaneseq
        %v2374 = vshrl.u32 %v2373, 7
        %v2375 = vsub.s32 6, %v2374
        %v2376 = vrot.slane %v1633, %v2375
        %2379 = vrot.lane.b32.xlu0 %v2372, 64
        %v2380 = vpop.permute.xlu0 %2379
        %2381 = vrot.lane.b32.xlu0 %v2376, 64
        %v2382 = vpop.permute.xlu0 %2381
        %v2383 = vsel %vm1668, %v2380, %v2382
        %v2387 = vmul.f32 %v730, %v2380
        %v2388 = vmul.f32 %v731, %v2383
        %v2389 = vmul.f32 %v907, %v2382
        %v2390 = vmul.f32 %v911, %v2380
        %v2391 = vmul.f32 %v912, %v2383
        %v2392 = vmul.f32 %v913, %v2382
        %v2399 = vrot.slane %v2387, 4
        %v2400 = vrot.slane %v2388, 4
        %v2401 = vrot.slane %v2389, 4
        %v2402 = vrot.slane %v2390, 4
        %v2403 = vsel %vm2069, %v2399, %v2402
        %v2404 = vrot.slane %v2391, 4
        %v2405 = vsel %vm2069, %v2400, %v2404
        %v2406 = vrot.slane %v2392, 4
        %v2407 = vsel %vm2069, %v2401, %v2406
        %v2417 = vadd.f32 %v2360, %v2399
        %v2418 = vadd.f32 %v2361, %v2400
        %v2419 = vadd.f32 %v2362, %v2401
        %v2420 = vadd.f32 %v2363, %v2403
        %v2421 = vadd.f32 %v2364, %v2405
        %v2422 = vadd.f32 %v2365, %v2407
        %v2423 = vadd.f32 %v2366, %v2402
        %v2424 = vadd.f32 %v2367, %v2404
        %v2425 = vadd.f32 %v2368, %v2406
        %v2426 = vlaneseq
        %v2427 = vshrl.u32 %v2426, 7
        %v2428 = vsub.s32 6, %v2427
        %v2429 = vrot.slane %v1634, %v2428
        %v2430 = vlaneseq
        %v2431 = vshrl.u32 %v2430, 7
        %v2432 = vsub.s32 6, %v2431
        %v2433 = vrot.slane %v1635, %v2432
        %v2434 = vmul.f32 %v729, %v2429
        %v2435 = vmul.f32 %v730, %v2433
        %v2436 = vmul.f32 %v910, %v2429
        %v2437 = vmul.f32 %v911, %v2433
        %v2442 = vrot.slane %v2434, 4
        %v2443 = vrot.slane %v2435, 4
        %v2444 = vrot.slane %v2436, 4
        %v2445 = vsel %vm2069, %v2442, %v2444
        %v2446 = vrot.slane %v2437, 4
        %v2447 = vsel %vm2069, %v2443, %v2446
        %2448 = vrot.lane.b32.xlu0 %v2442, 64
        %v2449 = vpop.permute.xlu0 %2448
        %2450 = vrot.lane.b32.xlu0 %v2443, 64
        %v2451 = vpop.permute.xlu0 %2450
        %2452 = vrot.lane.b32.xlu0 %v2445, 64
        %v2453 = vpop.permute.xlu0 %2452
        %2454 = vrot.lane.b32.xlu0 %v2447, 64
        %v2455 = vpop.permute.xlu0 %2454
        %2456 = vrot.lane.b32.xlu0 %v2444, 64
        %v2457 = vpop.permute.xlu0 %2456
        %2458 = vrot.lane.b32.xlu0 %v2446, 64
        %v2459 = vpop.permute.xlu0 %2458
        %v2460 = vsel %vm1668, %v2449, %v2451
        %v2461 = vsel %vm1668, %v2453, %v2455
        %v2462 = vsel %vm1668, %v2457, %v2459
        %v2472 = vadd.f32 %v2417, %v2449
        %v2473 = vadd.f32 %v2418, %v2460
        %v2474 = vadd.f32 %v2419, %v2451
        %v2475 = vadd.f32 %v2420, %v2453
        %v2476 = vadd.f32 %v2421, %v2461
        %v2477 = vadd.f32 %v2422, %v2455
        %v2478 = vadd.f32 %v2423, %v2457
        %v2479 = vadd.f32 %v2424, %v2462
        %v2480 = vadd.f32 %v2425, %v2459
        %v2481 = vld [vmem:[#allocation2 + $0x68] sm:$0xc0]
        %v2482 = vld [vmem:[#allocation2 + $0x70] sm:$0xc0]
        %v2483 = vld [vmem:[#allocation2 + $0x78] sm:$0xc0]
        %v2484 = vld [vmem:[#allocation2 + $0x80] sm:$0xc0]
        %v2485 = vld [vmem:[#allocation2 + $0xc8] sm:$0x3f]
        %v2486 = vld [vmem:[#allocation2 + $0xd0] sm:$0x3f]
        %v2487 = vld [vmem:[#allocation2 + $0xd8] sm:$0x3f]
        %v2488 = vld [vmem:[#allocation2 + $0xe0] sm:$0x3f]
        %v2489 = vlaneseq
        %v2490 = vshrl.u32 %v2489, 7
        %v2491 = vsub.s32 6, %v2490
        %v2492 = vrot.slane %v1630, %v2491
        %v2493 = vlaneseq
        %v2494 = vshrl.u32 %v2493, 7
        %v2495 = vsub.s32 6, %v2494
        %v2496 = vrot.slane %v1631, %v2495
        %2499 = vrot.lane.b32.xlu0 %v2492, 32
        %v2500 = vpop.permute.xlu0 %2499
        %2501 = vrot.lane.b32.xlu0 %v2496, 32
        %v2502 = vpop.permute.xlu0 %2501
        %v2503 = vsel %vm1802, %v2500, %v2502
        %v2507 = vmul.f32 %v2481, %v2500
        %v2508 = vmul.f32 %v2482, %v2503
        %v2509 = vmul.f32 %v2483, %v2502
        %v2510 = vmul.f32 %v909, %v2500
        %v2511 = vmul.f32 %v910, %v2503
        %v2512 = vmul.f32 %v911, %v2502
        %v2513 = vmul.f32 %v2485, %v2500
        %v2514 = vmul.f32 %v2486, %v2503
        %v2515 = vmul.f32 %v2487, %v2502
        %v2525 = vrot.slane %v2507, 2
        %v2526 = vrot.slane %v2510, 2
        %v2527 = vsel %vm1152, %v2525, %v2526
        %v2528 = vrot.slane %v2508, 2
        %v2529 = vrot.slane %v2511, 2
        %v2530 = vsel %vm1152, %v2528, %v2529
        %v2531 = vrot.slane %v2509, 2
        %v2532 = vrot.slane %v2512, 2
        %v2533 = vsel %vm1152, %v2531, %v2532
        %v2534 = vrot.slane %v2513, 2
        %v2535 = vsel %vm1152, %v2526, %v2534
        %v2536 = vrot.slane %v2514, 2
        %v2537 = vsel %vm1152, %v2529, %v2536
        %v2538 = vrot.slane %v2515, 2
        %v2539 = vsel %vm1152, %v2532, %v2538
        %2540 = vrot.lane.b32.xlu0 %v2527, 32
        %v2541 = vpop.permute.xlu0 %2540
        %2542 = vrot.lane.b32.xlu0 %v2530, 32
        %v2543 = vpop.permute.xlu0 %2542
        %2544 = vrot.lane.b32.xlu0 %v2533, 32
        %v2545 = vpop.permute.xlu0 %2544
        %2546 = vrot.lane.b32.xlu0 %v2535, 32
        %v2547 = vpop.permute.xlu0 %2546
        %2548 = vrot.lane.b32.xlu0 %v2537, 32
        %v2549 = vpop.permute.xlu0 %2548
        %2550 = vrot.lane.b32.xlu0 %v2539, 32
        %v2551 = vpop.permute.xlu0 %2550
        %2552 = vrot.lane.b32.xlu0 %v2534, 32
        %v2553 = vpop.permute.xlu0 %2552
        %2554 = vrot.lane.b32.xlu0 %v2536, 32
        %v2555 = vpop.permute.xlu0 %2554
        %2556 = vrot.lane.b32.xlu0 %v2538, 32
        %v2557 = vpop.permute.xlu0 %2556
        %v2558 = vsel %vm1802, %v2541, %v2543
        %v2559 = vsel %vm1802, %v2543, %v2545
        %v2560 = vsel %vm1802, %v2547, %v2549
        %v2561 = vsel %vm1802, %v2549, %v2551
        %v2562 = vsel %vm1802, %v2553, %v2555
        %v2563 = vsel %vm1802, %v2555, %v2557
        %v2573 = vadd.f32 %v2472, %v2541
        %v2574 = vadd.f32 %v2473, %v2558
        %v2575 = vadd.f32 %v2474, %v2559
        %v2576 = vadd.f32 %v2475, %v2547
        %v2577 = vadd.f32 %v2476, %v2560
        %v2578 = vadd.f32 %v2477, %v2561
        %v2579 = vadd.f32 %v2478, %v2553
        %v2580 = vadd.f32 %v2479, %v2562
        %v2581 = vadd.f32 %v2480, %v2563
        %v2582 = vlaneseq
        %v2583 = vshrl.u32 %v2582, 7
        %v2584 = vsub.s32 7, %v2583
        %v2585 = vrot.slane %v1630, %v2584
        %v2586 = vlaneseq
        %v2587 = vshrl.u32 %v2586, 7
        %v2588 = vsub.s32 7, %v2587
        %v2589 = vrot.slane %v1631, %v2588
        %v2590 = vmul.f32 %v2482, %v2585
        %v2591 = vmul.f32 %v2483, %v2589
        %v2592 = vmul.f32 %v910, %v2585
        %v2593 = vmul.f32 %v911, %v2589
        %v2594 = vmul.f32 %v2486, %v2585
        %v2595 = vmul.f32 %v2487, %v2589
        %v2602 = vrot.slane %v2590, 2
        %v2603 = vrot.slane %v2592, 2
        %v2604 = vsel %vm1152, %v2602, %v2603
        %v2605 = vrot.slane %v2591, 2
        %v2606 = vrot.slane %v2593, 2
        %v2607 = vsel %vm1152, %v2605, %v2606
        %v2608 = vrot.slane %v2594, 2
        %v2609 = vsel %vm1152, %v2603, %v2608
        %v2610 = vrot.slane %v2595, 2
        %v2611 = vsel %vm1152, %v2606, %v2610
        %2612 = vrot.lane.b32.xlu0 %v2604, 64
        %v2613 = vpop.permute.xlu0 %2612
        %2614 = vrot.lane.b32.xlu0 %v2607, 64
        %v2615 = vpop.permute.xlu0 %2614
        %2616 = vrot.lane.b32.xlu0 %v2609, 64
        %v2617 = vpop.permute.xlu0 %2616
        %2618 = vrot.lane.b32.xlu0 %v2611, 64
        %v2619 = vpop.permute.xlu0 %2618
        %2620 = vrot.lane.b32.xlu0 %v2608, 64
        %v2621 = vpop.permute.xlu0 %2620
        %2622 = vrot.lane.b32.xlu0 %v2610, 64
        %v2623 = vpop.permute.xlu0 %2622
        %v2624 = vsel %vm1668, %v2613, %v2615
        %v2625 = vsel %vm1668, %v2617, %v2619
        %v2626 = vsel %vm1668, %v2621, %v2623
        %v2636 = vadd.f32 %v2573, %v2613
        %v2637 = vadd.f32 %v2574, %v2624
        %v2638 = vadd.f32 %v2575, %v2615
        %v2639 = vadd.f32 %v2576, %v2617
        %v2640 = vadd.f32 %v2577, %v2625
        %v2641 = vadd.f32 %v2578, %v2619
        %v2642 = vadd.f32 %v2579, %v2621
        %v2643 = vadd.f32 %v2580, %v2626
        %v2644 = vadd.f32 %v2581, %v2623
        %v2645 = vlaneseq
        %v2646 = vshrl.u32 %v2645, 7
        %v2647 = vsub.s32 0, %v2646
        %v2648 = vrot.slane %v1632, %v2647
        %v2649 = vlaneseq
        %v2650 = vshrl.u32 %v2649, 7
        %v2651 = vsub.s32 0, %v2650
        %v2652 = vrot.slane %v1633, %v2651
        %2655 = vrot.lane.b32.xlu0 %v2648, 96
        %v2656 = vpop.permute.xlu0 %2655
        %2657 = vrot.lane.b32.xlu0 %v2652, 96
        %v2658 = vpop.permute.xlu0 %2657
        %v2659 = vsel %vm881, %v2656, %v2658
        %v2663 = vmul.f32 %v2482, %v2656
        %v2664 = vmul.f32 %v2483, %v2659
        %v2665 = vmul.f32 %v2484, %v2658
        %v2666 = vmul.f32 %v910, %v2656
        %v2667 = vmul.f32 %v911, %v2659
        %v2668 = vmul.f32 %v912, %v2658
        %v2669 = vmul.f32 %v2486, %v2656
        %v2670 = vmul.f32 %v2487, %v2659
        %v2671 = vmul.f32 %v2488, %v2658
        %v2681 = vrot.slane %v2663, 2
        %v2682 = vrot.slane %v2666, 2
        %v2683 = vsel %vm1152, %v2681, %v2682
        %v2684 = vrot.slane %v2664, 2
        %v2685 = vrot.slane %v2667, 2
        %v2686 = vsel %vm1152, %v2684, %v2685
        %v2687 = vrot.slane %v2665, 2
        %v2688 = vrot.slane %v2668, 2
        %v2689 = vsel %vm1152, %v2687, %v2688
        %v2690 = vrot.slane %v2669, 2
        %v2691 = vsel %vm1152, %v2682, %v2690
        %v2692 = vrot.slane %v2670, 2
        %v2693 = vsel %vm1152, %v2685, %v2692
        %v2694 = vrot.slane %v2671, 2
        %v2695 = vsel %vm1152, %v2688, %v2694
        %2696 = vrot.lane.b32.xlu0 %v2683, 96
        %v2697 = vpop.permute.xlu0 %2696
        %2698 = vrot.lane.b32.xlu0 %v2686, 96
        %v2699 = vpop.permute.xlu0 %2698
        %2700 = vrot.lane.b32.xlu0 %v2689, 96
        %v2701 = vpop.permute.xlu0 %2700
        %2702 = vrot.lane.b32.xlu0 %v2691, 96
        %v2703 = vpop.permute.xlu0 %2702
        %2704 = vrot.lane.b32.xlu0 %v2693, 96
        %v2705 = vpop.permute.xlu0 %2704
        %2706 = vrot.lane.b32.xlu0 %v2695, 96
        %v2707 = vpop.permute.xlu0 %2706
        %2708 = vrot.lane.b32.xlu0 %v2690, 96
        %v2709 = vpop.permute.xlu0 %2708
        %2710 = vrot.lane.b32.xlu0 %v2692, 96
        %v2711 = vpop.permute.xlu0 %2710
        %2712 = vrot.lane.b32.xlu0 %v2694, 96
        %v2713 = vpop.permute.xlu0 %2712
        %v2714 = vsel %vm881, %v2697, %v2699
        %v2715 = vsel %vm881, %v2699, %v2701
        %v2716 = vsel %vm881, %v2703, %v2705
        %v2717 = vsel %vm881, %v2705, %v2707
        %v2718 = vsel %vm881, %v2709, %v2711
        %v2719 = vsel %vm881, %v2711, %v2713
        %v2729 = vadd.f32 %v2636, %v2714
        %v2730 = vadd.f32 %v2637, %v2715
        %v2731 = vadd.f32 %v2638, %v2701
        %v2732 = vadd.f32 %v2639, %v2716
        %v2733 = vadd.f32 %v2640, %v2717
        %v2734 = vadd.f32 %v2641, %v2707
        %v2735 = vadd.f32 %v2642, %v2718
        %v2736 = vadd.f32 %v2643, %v2719
        %v2737 = vadd.f32 %v2644, %v2713
        %v2738 = vld [vmem:[#allocation2 + $0x90] sm:$0xf0]
        %v2739 = vld [vmem:[#allocation2 + $0x98] sm:$0xf0]
        %v2740 = vld [vmem:[#allocation2 + $0xa0] sm:$0xf0]
        %v2741 = vld [vmem:[#allocation2 + $0xa8] sm:$0xf0]
        %v2742 = vld [vmem:[#allocation2 + $0xb0] sm:$0xf0]
        %v2743 = vld [vmem:[#allocation2 + $0xb8] sm:$0xf0]
        %v2744 = vld [vmem:[#allocation2 + $0xc0] sm:$0xff]
        %v2745 = vld [vmem:[#allocation2 + $0xc8] sm:$0xff]
        %v2746 = vld [vmem:[#allocation2 + $0xd0] sm:$0xff]
        %v2747 = vld [vmem:[#allocation2 + $0xd8] sm:$0xff]
        %v2748 = vld [vmem:[#allocation2 + $0xe0] sm:$0xff]
        %v2749 = vld [vmem:[#allocation2 + $0xe8] sm:$0xff]
        %v2750 = vld [vmem:[#allocation2 + $0xf0] sm:$0xf]
        %v2751 = vld [vmem:[#allocation2 + $0xf8] sm:$0xf]
        %v2752 = vld [vmem:[#allocation2 + $0x100] sm:$0xf]
        %v2753 = vld [vmem:[#allocation2 + $0x108] sm:$0xf]
        %v2754 = vld [vmem:[#allocation2 + $0x110] sm:$0xf]
        %v2755 = vld [vmem:[#allocation2 + $0x118] sm:$0xf]
        %v2756 = vlaneseq
        %v2757 = vshrl.u32 %v2756, 7
        %v2758 = vsub.s32 7, %v2757
        %v2759 = vrot.slane %v1632, %v2758
        %v2760 = vlaneseq
        %v2761 = vshrl.u32 %v2760, 7
        %v2762 = vsub.s32 7, %v2761
        %v2763 = vrot.slane %v1633, %v2762
        %2766 = vrot.lane.b32.xlu0 %v2759, 64
        %v2767 = vpop.permute.xlu0 %2766
        %2768 = vrot.lane.b32.xlu0 %v2763, 64
        %v2769 = vpop.permute.xlu0 %2768
        %v2770 = vsel %vm1668, %v2767, %v2769
        %v2774 = vmul.f32 %v2738, %v2767
        %v2775 = vmul.f32 %v2739, %v2770
        %v2776 = vmul.f32 %v2740, %v2769
        %v2777 = vmul.f32 %v2744, %v2767
        %v2778 = vmul.f32 %v2745, %v2770
        %v2779 = vmul.f32 %v2746, %v2769
        %v2780 = vmul.f32 %v2750, %v2767
        %v2781 = vmul.f32 %v2751, %v2770
        %v2782 = vmul.f32 %v2752, %v2769
        %v2783 = vadd.f32 %v2729, %v2774
        %v2784 = vadd.f32 %v2730, %v2775
        %v2785 = vadd.f32 %v2731, %v2776
        %v2786 = vadd.f32 %v2732, %v2777
        %v2787 = vadd.f32 %v2733, %v2778
        %v2788 = vadd.f32 %v2734, %v2779
        %v2789 = vadd.f32 %v2735, %v2780
        %v2790 = vadd.f32 %v2736, %v2781
        %v2791 = vadd.f32 %v2737, %v2782
        %v2792 = vlaneseq
        %v2793 = vshrl.u32 %v2792, 7
        %v2794 = vsub.s32 0, %v2793
        %v2795 = vrot.slane %v1634, %v2794
        %v2796 = vlaneseq
        %v2797 = vshrl.u32 %v2796, 7
        %v2798 = vsub.s32 0, %v2797
        %v2799 = vrot.slane %v1635, %v2798
        %v2800 = vmul.f32 %v2740, %v2795
        %v2801 = vmul.f32 %v2741, %v2799
        %v2802 = vmul.f32 %v2746, %v2795
        %v2803 = vmul.f32 %v2747, %v2799
        %v2804 = vmul.f32 %v2752, %v2795
        %v2805 = vmul.f32 %v2753, %v2799
        %2812 = vrot.lane.b32.xlu0 %v2800, 64
        %v2813 = vpop.permute.xlu0 %2812
        %2814 = vrot.lane.b32.xlu0 %v2801, 64
        %v2815 = vpop.permute.xlu0 %2814
        %2816 = vrot.lane.b32.xlu0 %v2802, 64
        %v2817 = vpop.permute.xlu0 %2816
        %2818 = vrot.lane.b32.xlu0 %v2803, 64
        %v2819 = vpop.permute.xlu0 %2818
        %2820 = vrot.lane.b32.xlu0 %v2804, 64
        %v2821 = vpop.permute.xlu0 %2820
        %2822 = vrot.lane.b32.xlu0 %v2805, 64
        %v2823 = vpop.permute.xlu0 %2822
        %v2824 = vsel %vm1668, %v2813, %v2815
        %v2825 = vsel %vm1668, %v2817, %v2819
        %v2826 = vsel %vm1668, %v2821, %v2823
        %v2836 = vadd.f32 %v2783, %v2813
        %v2837 = vadd.f32 %v2784, %v2824
        %v2838 = vadd.f32 %v2785, %v2815
        %v2839 = vadd.f32 %v2786, %v2817
        %v2840 = vadd.f32 %v2787, %v2825
        %v2841 = vadd.f32 %v2788, %v2819
        %v2842 = vadd.f32 %v2789, %v2821
        %v2843 = vadd.f32 %v2790, %v2826
        %v2844 = vadd.f32 %v2791, %v2823
        %v2845 = vlaneseq
        %v2846 = vshrl.u32 %v2845, 7
        %v2847 = vsub.s32 1, %v2846
        %v2848 = vrot.slane %v1634, %v2847
        %v2849 = vlaneseq
        %v2850 = vshrl.u32 %v2849, 7
        %v2851 = vsub.s32 1, %v2850
        %v2852 = vrot.slane %v1635, %v2851
        %2855 = vrot.lane.b32.xlu0 %v2848, 64
        %v2856 = vpop.permute.xlu0 %2855
        %2857 = vrot.lane.b32.xlu0 %v2852, 64
        %v2858 = vpop.permute.xlu0 %2857
        %v2859 = vsel %vm1668, %v2856, %v2858
        %v2863 = vmul.f32 %v2741, %v2856
        %v2864 = vmul.f32 %v2742, %v2859
        %v2865 = vmul.f32 %v2743, %v2858
        %v2866 = vmul.f32 %v2747, %v2856
        %v2867 = vmul.f32 %v2748, %v2859
        %v2868 = vmul.f32 %v2749, %v2858
        %v2869 = vmul.f32 %v2753, %v2856
        %v2870 = vmul.f32 %v2754, %v2859
        %v2871 = vmul.f32 %v2755, %v2858
        %v2872 = vadd.f32 %v2836, %v2863
        %v2873 = vadd.f32 %v2837, %v2864
        %v2874 = vadd.f32 %v2838, %v2865
        %v2875 = vadd.f32 %v2839, %v2866
        %v2876 = vadd.f32 %v2840, %v2867
        %v2877 = vadd.f32 %v2841, %v2868
        %v2878 = vadd.f32 %v2842, %v2869
        %v2879 = vadd.f32 %v2843, %v2870
        %v2880 = vadd.f32 %v2844, %v2871
        %v2881 = vld [vmem:[#allocation12] sm:$0xff]
        %v2882 = vld [vmem:[#allocation12 + $0x8] sm:$0xff]
        %v2883 = vld [vmem:[#allocation12 + $0x10] sm:$0xff]
        %v2884 = vld [vmem:[#allocation12 + $0x18] sm:$0xff]
        %v2885 = vld [vmem:[#allocation12 + $0x20] sm:$0xff]
        %v2886 = vld [vmem:[#allocation12 + $0x28] sm:$0xff]
        %v2887 = vld [vmem:[#allocation12 + $0x30] sm:$0xff]
        %v2888 = vld [vmem:[#allocation12 + $0x38] sm:$0xff]
        %v2889 = vld [vmem:[#allocation12 + $0x40] sm:$0xff]
        %v2890 = vld [vmem:[#allocation12 + $0x48] sm:$0xff]
        %v2891 = vld [vmem:[#allocation12 + $0x50] sm:$0xff]
        %v2892 = vld [vmem:[#allocation12 + $0x58] sm:$0xff]
        %v2893 = vld [vmem:[#allocation12 + $0x60] sm:$0xff]
        %v2894 = vld [vmem:[#allocation12 + $0x68] sm:$0xff]
        %v2895 = vld [vmem:[#allocation12 + $0x70] sm:$0xff]
        %v2896 = vld [vmem:[#allocation12 + $0x78] sm:$0xff]
        %v2897 = vld [vmem:[#allocation12 + $0x80] sm:$0xff]
        %v2898 = vld [vmem:[#allocation12 + $0x88] sm:$0xff]
        %v2899 = vld [vmem:[#allocation12 + $0x90] sm:$0xff]
        %v2900 = vld [vmem:[#allocation12 + $0x98] sm:$0xff]
        %v2901 = vld [vmem:[#allocation12 + $0xa0] sm:$0xff]
        %v2902 = vld [vmem:[#allocation12 + $0xa8] sm:$0xff]
        %v2903 = vld [vmem:[#allocation12 + $0xb0] sm:$0xff]
        %v2904 = vld [vmem:[#allocation12 + $0xb8] sm:$0xff]
        %v2905 = vld [vmem:[#allocation12 + $0xc0] sm:$0xff]
        %v2906 = vld [vmem:[#allocation12 + $0xc8] sm:$0xff]
        %v2907 = vld [vmem:[#allocation12 + $0xd0] sm:$0xff]
        %v2908 = vld [vmem:[#allocation12 + $0xd8] sm:$0xff]
        %v2909 = vld [vmem:[#allocation12 + $0xe0] sm:$0xff]
        %v2910 = vld [vmem:[#allocation12 + $0xe8] sm:$0xff]
        %v2911 = vld [vmem:[#allocation12 + $0xf0] sm:$0xff]
        %v2912 = vld [vmem:[#allocation12 + $0xf8] sm:$0xff]
        %v2913 = vld [vmem:[#allocation12 + $0x100] sm:$0xff]
        %v2914 = vld [vmem:[#allocation12 + $0x108] sm:$0xff]
        %v2915 = vld [vmem:[#allocation12 + $0x110] sm:$0xff]
        %v2916 = vld [vmem:[#allocation12 + $0x118] sm:$0xff]
        %v2917 = vld [vmem:[#allocation12 + $0x120] sm:$0xff]
        %v2918 = vld [vmem:[#allocation12 + $0x128] sm:$0xff]
        %v2919 = vld [vmem:[#allocation12 + $0x130] sm:$0xff]
        %v2920 = vld [vmem:[#allocation12 + $0x138] sm:$0xff]
        %v2921 = vld [vmem:[#allocation12 + $0x140] sm:$0xff]
        %v2922 = vld [vmem:[#allocation12 + $0x148] sm:$0xff]
        %v2923 = vld [vmem:[#allocation12 + $0x150] sm:$0xff]
        %v2924 = vld [vmem:[#allocation12 + $0x158] sm:$0xff]
        %v2925 = vld [vmem:[#allocation12 + $0x160] sm:$0xff]
        %v2926 = vld [vmem:[#allocation12 + $0x168] sm:$0xff]
        %v2927 = vld [vmem:[#allocation12 + $0x170] sm:$0xff]
        %v2928 = vld [vmem:[#allocation12 + $0x178] sm:$0xff]
        %v2929 = vld [vmem:[#allocation12 + $0x180] sm:$0xff]
        %v2930 = vld [vmem:[#allocation12 + $0x188] sm:$0xff]
        %v2931 = vld [vmem:[#allocation12 + $0x190] sm:$0xff]
        %v2932 = vld [vmem:[#allocation12 + $0x198] sm:$0xff]
        %v2933 = vld [vmem:[#allocation12 + $0x1a0] sm:$0xff]
        %v2934 = vld [vmem:[#allocation12 + $0x1a8] sm:$0xff]
        %v2935 = vld [vmem:[#allocation12 + $0x1b0] sm:$0xff]
        %v2936 = vld [vmem:[#allocation12 + $0x1b8] sm:$0xff]
        %v2937 = vld [vmem:[#allocation12 + $0x1c0] sm:$0xff]
        %v2938 = vld [vmem:[#allocation12 + $0x1c8] sm:$0xff]
        %v2939 = vld [vmem:[#allocation12 + $0x1d0] sm:$0xff]
        %v2940 = vld [vmem:[#allocation12 + $0x1d8] sm:$0xff]
        %v2941 = vld [vmem:[#allocation12 + $0x1e0] sm:$0xff]
        %v2942 = vld [vmem:[#allocation12 + $0x1e8] sm:$0xff]
        %v2943 = vld [vmem:[#allocation12 + $0x1f0] sm:$0xff]
        %v2944 = vld [vmem:[#allocation12 + $0x1f8] sm:$0xff]
        %v2945 = vld [vmem:[%s9] sm:$0x3]
        %v2947 = vlaneseq
        %v2948 = vshrl.u32 %v2947, 7
        %v2949 = vsub.s32 0, %v2948
        %v2950 = vrot.slane %v2945, %v2949
        %v2951 = vlaneseq
        %v2952 = vshrl.u32 %v2951, 7
        %v2953 = vsub.s32 1, %v2952
        %v2954 = vrot.slane %v2945, %v2953
        %v2966 = vrot.slane %v2872, 4
        %v2967 = vrot.slane %v2875, 4
        %v2968 = vsel %vm2069, %v2966, %v2967
        %v2969 = vrot.slane %v2873, 4
        %v2970 = vrot.slane %v2876, 4
        %v2971 = vsel %vm2069, %v2969, %v2970
        %v2972 = vrot.slane %v2874, 4
        %v2973 = vrot.slane %v2877, 4
        %v2974 = vsel %vm2069, %v2972, %v2973
        %v2975 = vrot.slane %v2878, 4
        %v2976 = vsel %vm2069, %v2967, %v2975
        %v2977 = vrot.slane %v2879, 4
        %v2978 = vsel %vm2069, %v2970, %v2977
        %v2979 = vrot.slane %v2880, 4
        %v2980 = vsel %vm2069, %v2973, %v2979
        %2981 = vrot.lane.b32.xlu0 %v2968, 64
        %v2982 = vpop.permute.xlu0 %2981
        %2983 = vrot.lane.b32.xlu0 %v2971, 64
        %v2984 = vpop.permute.xlu0 %2983
        %2985 = vrot.lane.b32.xlu0 %v2974, 64
        %v2986 = vpop.permute.xlu0 %2985
        %2987 = vrot.lane.b32.xlu0 %v2976, 64
        %v2988 = vpop.permute.xlu0 %2987
        %2989 = vrot.lane.b32.xlu0 %v2978, 64
        %v2990 = vpop.permute.xlu0 %2989
        %2991 = vrot.lane.b32.xlu0 %v2980, 64
        %v2992 = vpop.permute.xlu0 %2991
        %v2993 = vsel %vm1668, %v2982, %v2984
        %v2994 = vsel %vm1668, %v2984, %v2986
        %v2995 = vsel %vm1668, %v2988, %v2990
        %v2996 = vsel %vm1668, %v2990, %v2992
        %3001 = vmatprep.subr.mxu0 %v2882
        %3002 = vmatpush1.msra.mxu0 %v2881
        %3003 = vmatprep.subr.mxu0 %v2884
        %3004 = vmatpush1.msra.mxu0 %v2883
        %3005 = vmatprep.subr.mxu0 %v2886
        %3006 = vmatpush1.msra.mxu0 %v2885
        %3007 = vmatprep.subr.mxu0 %v2888
        %3008 = vmatpush1.msra.mxu0 %v2887
        %3009 = vmatprep.subr.mxu0 %v2890
        %3010 = vmatpush1.msra.mxu0 %v2889
        %3011 = vmatprep.subr.mxu0 %v2892
        %3012 = vmatpush1.msra.mxu0 %v2891
        %3013 = vmatprep.subr.mxu0 %v2894
        %3014 = vmatpush1.msra.mxu0 %v2893
        %3015 = vmatprep.subr.mxu0 %v2896
        %3016 = vmatpush1.msra.mxu0 %v2895
        %3017 = vmatprep.subr.mxu0 %v2898
        %3018 = vmatpush1.msra.mxu0 %v2897
        %3019 = vmatprep.subr.mxu0 %v2900
        %3020 = vmatpush1.msra.mxu0 %v2899
        %3021 = vmatprep.subr.mxu0 %v2902
        %3022 = vmatpush1.msra.mxu0 %v2901
        %3023 = vmatprep.subr.mxu0 %v2904
        %3024 = vmatpush1.msra.mxu0 %v2903
        %3025 = vmatprep.subr.mxu0 %v2906
        %3026 = vmatpush1.msra.mxu0 %v2905
        %3027 = vmatprep.subr.mxu0 %v2908
        %3028 = vmatpush1.msra.mxu0 %v2907
        %3029 = vmatprep.subr.mxu0 %v2910
        %3030 = vmatpush1.msra.mxu0 %v2909
        %3031 = vmatprep.subr.mxu0 %v2912
        %3032 = vmatpush1.msra.mxu0 %v2911
        %3033 = vmatprep.subr.mxu0 %v2914
        %3034 = vmatpush1.msra.mxu0 %v2913
        %3035 = vmatprep.subr.mxu0 %v2916
        %3036 = vmatpush1.msra.mxu0 %v2915
        %3037 = vmatprep.subr.mxu0 %v2918
        %3038 = vmatpush1.msra.mxu0 %v2917
        %3039 = vmatprep.subr.mxu0 %v2920
        %3040 = vmatpush1.msra.mxu0 %v2919
        %3041 = vmatprep.subr.mxu0 %v2922
        %3042 = vmatpush1.msra.mxu0 %v2921
        %3043 = vmatprep.subr.mxu0 %v2924
        %3044 = vmatpush1.msra.mxu0 %v2923
        %3045 = vmatprep.subr.mxu0 %v2926
        %3046 = vmatpush1.msra.mxu0 %v2925
        %3047 = vmatprep.subr.mxu0 %v2928
        %3048 = vmatpush1.msra.mxu0 %v2927
        %3049 = vmatprep.subr.mxu0 %v2930
        %3050 = vmatpush1.msra.mxu0 %v2929
        %3051 = vmatprep.subr.mxu0 %v2932
        %3052 = vmatpush1.msra.mxu0 %v2931
        %3053 = vmatprep.subr.mxu0 %v2934
        %3054 = vmatpush1.msra.mxu0 %v2933
        %3055 = vmatprep.subr.mxu0 %v2936
        %3056 = vmatpush1.msra.mxu0 %v2935
        %3057 = vmatprep.subr.mxu0 %v2938
        %3058 = vmatpush1.msra.mxu0 %v2937
        %3059 = vmatprep.subr.mxu0 %v2940
        %3060 = vmatpush1.msra.mxu0 %v2939
        %3061 = vmatprep.subr.mxu0 %v2942
        %3062 = vmatpush1.msra.mxu0 %v2941
        %3063 = vmatprep.subr.mxu0 %v2944
        %3064 = vmatpush1.msra.mxu0 %v2943
        %3065 = vmatprep.mubr.f32.mxu0 %v2994
        %3066 = vmatmul.mubr.f32.gmra.mrb[0].mxu0 %v2993
        %v3067 = vpop.f32.mrb[0].mxu0
        %v3068 = vadd.f32 %v2950, %v3067
        %v3069 = vpop.f32.mrb[0].mxu0
        %v3070 = vadd.f32 %v2954, %v3069
        %3071 = vmatprep.mubr.f32.mxu0 %v2996
        %3072 = vmatmul.mubr.f32.gmra.mrb[0].mxu0 %v2995
        %v3073 = vpop.f32.mrb[0].mxu0
        %v3074 = vadd.f32 %v2950, %v3073
        %v3075 = vpop.f32.mrb[0].mxu0
        %v3076 = vadd.f32 %v2954, %v3075
        %3077 = vdwg.mxu0
        %v3078 = vld [vmem:[#allocation2 + $0x70] sm:$0xff]
        %v3079 = vld [vmem:[#allocation2 + $0x78] sm:$0xff]
        %v3080 = vld [vmem:[#allocation2 + $0xa0] sm:$0xff]
        %v3081 = vld [vmem:[#allocation2 + $0xa8] sm:$0xff]
        %v3082 = vmul.f32 %v3078, %v3068
        %v3083 = vmul.f32 %v3079, %v3070
        %v3084 = vmul.f32 %v3080, %v3074
        %v3085 = vmul.f32 %v3081, %v3076
        %3095 = vrot.lane.b32.xlu0 %v1621, 16
        %v3096 = vpop.permute.xlu0 %3095
        %3097 = vrot.lane.b32.xlu0 %v1622, 16
        %v3098 = vpop.permute.xlu0 %3097
        %3099 = vrot.lane.b32.xlu0 %v1623, 16
        %v3100 = vpop.permute.xlu0 %3099
        %3101 = vrot.lane.b32.xlu0 %v1624, 16
        %v3102 = vpop.permute.xlu0 %3101
        %3103 = vrot.lane.b32.xlu0 %v1625, 16
        %v3104 = vpop.permute.xlu0 %3103
        %3105 = vrot.lane.b32.xlu0 %v1626, 16
        %v3106 = vpop.permute.xlu0 %3105
        %3107 = vrot.lane.b32.xlu0 %v1627, 16
        %v3108 = vpop.permute.xlu0 %3107
        %3109 = vrot.lane.b32.xlu0 %v1628, 16
        %v3110 = vpop.permute.xlu0 %3109
        %3111 = vrot.lane.b32.xlu0 %v1629, 16
        %v3112 = vpop.permute.xlu0 %3111
        %v3113 = vsel %vm840, %v3096, %v3098
        %v3114 = vsel %vm840, %v3098, %v3100
        %v3115 = vsel %vm840, %v3102, %v3104
        %v3116 = vsel %vm840, %v3104, %v3106
        %v3117 = vsel %vm840, %v3108, %v3110
        %v3118 = vsel %vm840, %v3110, %v3112
        %v3123 = vrot.slane %v3082, 1
        %v3124 = vrot.slane %v3083, 1
        %v3125 = vrot.slane %v3084, 1
        %v3126 = vsel %vm944, %v3123, %v3125
        %v3127 = vrot.slane %v3085, 1
        %v3128 = vsel %vm944, %v3124, %v3127
        %v3129 = vld [vmem:[#allocation14] sm:$0xff]
        %v3130 = vld [vmem:[#allocation14 + $0x8] sm:$0xff]
        %v3131 = vld [vmem:[#allocation14 + $0x10] sm:$0xff]
        %v3132 = vld [vmem:[#allocation14 + $0x18] sm:$0xff]
        %v3133 = vld [vmem:[#allocation14 + $0x20] sm:$0xff]
        %v3134 = vld [vmem:[#allocation14 + $0x28] sm:$0xff]
        %v3135 = vld [vmem:[#allocation14 + $0x30] sm:$0xff]
        %v3136 = vld [vmem:[#allocation14 + $0x38] sm:$0xff]
        %v3137 = vld [vmem:[#allocation14 + $0x40] sm:$0xff]
        %v3138 = vld [vmem:[#allocation14 + $0x48] sm:$0xff]
        %v3139 = vld [vmem:[#allocation14 + $0x50] sm:$0xff]
        %v3140 = vld [vmem:[#allocation14 + $0x58] sm:$0xff]
        %v3141 = vld [vmem:[#allocation14 + $0x60] sm:$0xff]
        %v3142 = vld [vmem:[#allocation14 + $0x68] sm:$0xff]
        %v3143 = vld [vmem:[#allocation14 + $0x70] sm:$0xff]
        %v3144 = vld [vmem:[#allocation14 + $0x78] sm:$0xff]
        %v3145 = vld [vmem:[#allocation14 + $0x80] sm:$0xff]
        %v3146 = vld [vmem:[#allocation14 + $0x88] sm:$0xff]
        %v3147 = vld [vmem:[#allocation14 + $0x90] sm:$0xff]
        %v3148 = vld [vmem:[#allocation14 + $0x98] sm:$0xff]
        %v3149 = vld [vmem:[#allocation14 + $0xa0] sm:$0xff]
        %v3150 = vld [vmem:[#allocation14 + $0xa8] sm:$0xff]
        %v3151 = vld [vmem:[#allocation14 + $0xb0] sm:$0xff]
        %v3152 = vld [vmem:[#allocation14 + $0xb8] sm:$0xff]
        %v3153 = vld [vmem:[#allocation14 + $0xc0] sm:$0xff]
        %v3154 = vld [vmem:[#allocation14 + $0xc8] sm:$0xff]
        %v3155 = vld [vmem:[#allocation14 + $0xd0] sm:$0xff]
        %v3156 = vld [vmem:[#allocation14 + $0xd8] sm:$0xff]
        %v3157 = vld [vmem:[#allocation14 + $0xe0] sm:$0xff]
        %v3158 = vld [vmem:[#allocation14 + $0xe8] sm:$0xff]
        %v3159 = vld [vmem:[#allocation14 + $0xf0] sm:$0xff]
        %v3160 = vld [vmem:[#allocation14 + $0xf8] sm:$0xff]
        %v3161 = vld [vmem:[#allocation14 + $0x100] sm:$0xff]
        %v3162 = vld [vmem:[#allocation14 + $0x108] sm:$0xff]
        %v3163 = vld [vmem:[#allocation14 + $0x110] sm:$0xff]
        %v3164 = vld [vmem:[#allocation14 + $0x118] sm:$0xff]
        %v3165 = vld [vmem:[#allocation14 + $0x120] sm:$0xff]
        %v3166 = vld [vmem:[#allocation14 + $0x128] sm:$0xff]
        %v3167 = vld [vmem:[#allocation14 + $0x130] sm:$0xff]
        %v3168 = vld [vmem:[#allocation14 + $0x138] sm:$0xff]
        %v3169 = vld [vmem:[#allocation14 + $0x140] sm:$0xff]
        %v3170 = vld [vmem:[#allocation14 + $0x148] sm:$0xff]
        %v3171 = vld [vmem:[#allocation14 + $0x150] sm:$0xff]
        %v3172 = vld [vmem:[#allocation14 + $0x158] sm:$0xff]
        %v3173 = vld [vmem:[#allocation14 + $0x160] sm:$0xff]
        %v3174 = vld [vmem:[#allocation14 + $0x168] sm:$0xff]
        %v3175 = vld [vmem:[#allocation14 + $0x170] sm:$0xff]
        %v3176 = vld [vmem:[#allocation14 + $0x178] sm:$0xff]
        %v3177 = vld [vmem:[#allocation14 + $0x180] sm:$0xff]
        %v3178 = vld [vmem:[#allocation14 + $0x188] sm:$0xff]
        %v3179 = vld [vmem:[#allocation14 + $0x190] sm:$0xff]
        %v3180 = vld [vmem:[#allocation14 + $0x198] sm:$0xff]
        %v3181 = vld [vmem:[#allocation14 + $0x1a0] sm:$0xff]
        %v3182 = vld [vmem:[#allocation14 + $0x1a8] sm:$0xff]
        %v3183 = vld [vmem:[#allocation14 + $0x1b0] sm:$0xff]
        %v3184 = vld [vmem:[#allocation14 + $0x1b8] sm:$0xff]
        %v3185 = vld [vmem:[#allocation14 + $0x1c0] sm:$0xff]
        %v3186 = vld [vmem:[#allocation14 + $0x1c8] sm:$0xff]
        %v3187 = vld [vmem:[#allocation14 + $0x1d0] sm:$0xff]
        %v3188 = vld [vmem:[#allocation14 + $0x1d8] sm:$0xff]
        %v3189 = vld [vmem:[#allocation14 + $0x1e0] sm:$0xff]
        %v3190 = vld [vmem:[#allocation14 + $0x1e8] sm:$0xff]
        %v3191 = vld [vmem:[#allocation14 + $0x1f0] sm:$0xff]
        %v3192 = vld [vmem:[#allocation14 + $0x1f8] sm:$0xff]
        %v3193 = vld [vmem:[#allocation14 + $0x200] sm:$0xff]
        %v3194 = vld [vmem:[#allocation14 + $0x208] sm:$0xff]
        %v3195 = vld [vmem:[#allocation14 + $0x210] sm:$0xff]
        %v3196 = vld [vmem:[#allocation14 + $0x218] sm:$0xff]
        %v3197 = vld [vmem:[#allocation14 + $0x220] sm:$0xff]
        %v3198 = vld [vmem:[#allocation14 + $0x228] sm:$0xff]
        %v3199 = vld [vmem:[#allocation14 + $0x230] sm:$0xff]
        %v3200 = vld [vmem:[#allocation14 + $0x238] sm:$0xff]
        %v3201 = vld [vmem:[#allocation14 + $0x240] sm:$0xff]
        %v3202 = vld [vmem:[#allocation14 + $0x248] sm:$0xff]
        %v3203 = vld [vmem:[#allocation14 + $0x250] sm:$0xff]
        %v3204 = vld [vmem:[#allocation14 + $0x258] sm:$0xff]
        %v3205 = vld [vmem:[#allocation14 + $0x260] sm:$0xff]
        %v3206 = vld [vmem:[#allocation14 + $0x268] sm:$0xff]
        %v3207 = vld [vmem:[#allocation14 + $0x270] sm:$0xff]
        %v3208 = vld [vmem:[#allocation14 + $0x278] sm:$0xff]
        %v3209 = vld [vmem:[#allocation14 + $0x280] sm:$0xff]
        %v3210 = vld [vmem:[#allocation14 + $0x288] sm:$0xff]
        %v3211 = vld [vmem:[#allocation14 + $0x290] sm:$0xff]
        %v3212 = vld [vmem:[#allocation14 + $0x298] sm:$0xff]
        %v3213 = vld [vmem:[#allocation14 + $0x2a0] sm:$0xff]
        %v3214 = vld [vmem:[#allocation14 + $0x2a8] sm:$0xff]
        %v3215 = vld [vmem:[#allocation14 + $0x2b0] sm:$0xff]
        %v3216 = vld [vmem:[#allocation14 + $0x2b8] sm:$0xff]
        %v3217 = vld [vmem:[#allocation14 + $0x2c0] sm:$0xff]
        %v3218 = vld [vmem:[#allocation14 + $0x2c8] sm:$0xff]
        %v3219 = vld [vmem:[#allocation14 + $0x2d0] sm:$0xff]
        %v3220 = vld [vmem:[#allocation14 + $0x2d8] sm:$0xff]
        %v3221 = vld [vmem:[#allocation14 + $0x2e0] sm:$0xff]
        %v3222 = vld [vmem:[#allocation14 + $0x2e8] sm:$0xff]
        %v3223 = vld [vmem:[#allocation14 + $0x2f0] sm:$0xff]
        %v3224 = vld [vmem:[#allocation14 + $0x2f8] sm:$0xff]
        %v3225 = vld [vmem:[#allocation14 + $0x300] sm:$0xff]
        %v3226 = vld [vmem:[#allocation14 + $0x308] sm:$0xff]
        %v3227 = vld [vmem:[#allocation14 + $0x310] sm:$0xff]
        %v3228 = vld [vmem:[#allocation14 + $0x318] sm:$0xff]
        %v3229 = vld [vmem:[#allocation14 + $0x320] sm:$0xff]
        %v3230 = vld [vmem:[#allocation14 + $0x328] sm:$0xff]
        %v3231 = vld [vmem:[#allocation14 + $0x330] sm:$0xff]
        %v3232 = vld [vmem:[#allocation14 + $0x338] sm:$0xff]
        %v3233 = vld [vmem:[#allocation14 + $0x340] sm:$0xff]
        %v3234 = vld [vmem:[#allocation14 + $0x348] sm:$0xff]
        %v3235 = vld [vmem:[#allocation14 + $0x350] sm:$0xff]
        %v3236 = vld [vmem:[#allocation14 + $0x358] sm:$0xff]
        %v3237 = vld [vmem:[#allocation14 + $0x360] sm:$0xff]
        %v3238 = vld [vmem:[#allocation14 + $0x368] sm:$0xff]
        %v3239 = vld [vmem:[#allocation14 + $0x370] sm:$0xff]
        %v3240 = vld [vmem:[#allocation14 + $0x378] sm:$0xff]
        %v3241 = vld [vmem:[#allocation14 + $0x380] sm:$0xff]
        %v3242 = vld [vmem:[#allocation14 + $0x388] sm:$0xff]
        %v3243 = vld [vmem:[#allocation14 + $0x390] sm:$0xff]
        %v3244 = vld [vmem:[#allocation14 + $0x398] sm:$0xff]
        %v3245 = vld [vmem:[#allocation14 + $0x3a0] sm:$0xff]
        %v3246 = vld [vmem:[#allocation14 + $0x3a8] sm:$0xff]
        %v3247 = vld [vmem:[#allocation14 + $0x3b0] sm:$0xff]
        %v3248 = vld [vmem:[#allocation14 + $0x3b8] sm:$0xff]
        %v3249 = vld [vmem:[#allocation14 + $0x3c0] sm:$0xff]
        %v3250 = vld [vmem:[#allocation14 + $0x3c8] sm:$0xff]
        %v3251 = vld [vmem:[#allocation14 + $0x3d0] sm:$0xff]
        %v3252 = vld [vmem:[#allocation14 + $0x3d8] sm:$0xff]
        %v3253 = vld [vmem:[#allocation14 + $0x3e0] sm:$0xff]
        %v3254 = vld [vmem:[#allocation14 + $0x3e8] sm:$0xff]
        %v3255 = vld [vmem:[#allocation14 + $0x3f0] sm:$0xff]
        %v3256 = vld [vmem:[#allocation14 + $0x3f8] sm:$0xff]
        %v3257 = vld [vmem:[%s11] sm:$0x3]
        %v3259 = vlaneseq
        %v3260 = vshrl.u32 %v3259, 7
        %v3261 = vsub.s32 0, %v3260
        %v3262 = vrot.slane %v3257, %v3261
        %v3263 = vlaneseq
        %v3264 = vshrl.u32 %v3263, 7
        %v3265 = vsub.s32 1, %v3264
        %v3266 = vrot.slane %v3257, %v3265
        %v3269 = vrot.slane %v3113, 7
        %v3270 = vrot.slane %v3115, 7
        %v3271 = vsel %vm1454, %v3269, %v3270
        %v3272 = vrot.slane %v3114, 7
        %v3273 = vrot.slane %v3116, 7
        %v3274 = vsel %vm1454, %v3272, %v3273
        %v3275 = vrot.slane %v3123, 7
        %v3276 = vrot.slane %v3126, 7
        %v3277 = vsel %vm1454, %v3275, %v3276
        %v3278 = vrot.slane %v3124, 7
        %v3279 = vrot.slane %v3128, 7
        %v3280 = vsel %vm1454, %v3278, %v3279
        %v3281 = vrot.slane %v3117, 7
        %v3282 = vsel %vm1454, %v3270, %v3281
        %v3283 = vrot.slane %v3118, 7
        %v3284 = vsel %vm1454, %v3273, %v3283
        %v3285 = vrot.slane %v3125, 7
        %v3286 = vsel %vm1454, %v3276, %v3285
        %v3287 = vrot.slane %v3127, 7
        %v3288 = vsel %vm1454, %v3279, %v3287
        %3297 = vmatprep.subr.mxu0 %v3130
        %3298 = vmatpush1.msra.mxu0 %v3129
        %3299 = vmatprep.subr.mxu0 %v3132
        %3300 = vmatpush1.msra.mxu0 %v3131
        %3301 = vmatprep.subr.mxu0 %v3134
        %3302 = vmatpush1.msra.mxu0 %v3133
        %3303 = vmatprep.subr.mxu0 %v3136
        %3304 = vmatpush1.msra.mxu0 %v3135
        %3305 = vmatprep.subr.mxu0 %v3138
        %3306 = vmatpush1.msra.mxu0 %v3137
        %3307 = vmatprep.subr.mxu0 %v3140
        %3308 = vmatpush1.msra.mxu0 %v3139
        %3309 = vmatprep.subr.mxu0 %v3142
        %3310 = vmatpush1.msra.mxu0 %v3141
        %3311 = vmatprep.subr.mxu0 %v3144
        %3312 = vmatpush1.msra.mxu0 %v3143
        %3313 = vmatprep.subr.mxu0 %v3146
        %3314 = vmatpush1.msra.mxu0 %v3145
        %3315 = vmatprep.subr.mxu0 %v3148
        %3316 = vmatpush1.msra.mxu0 %v3147
        %3317 = vmatprep.subr.mxu0 %v3150
        %3318 = vmatpush1.msra.mxu0 %v3149
        %3319 = vmatprep.subr.mxu0 %v3152
        %3320 = vmatpush1.msra.mxu0 %v3151
        %3321 = vmatprep.subr.mxu0 %v3154
        %3322 = vmatpush1.msra.mxu0 %v3153
        %3323 = vmatprep.subr.mxu0 %v3156
        %3324 = vmatpush1.msra.mxu0 %v3155
        %3325 = vmatprep.subr.mxu0 %v3158
        %3326 = vmatpush1.msra.mxu0 %v3157
        %3327 = vmatprep.subr.mxu0 %v3160
        %3328 = vmatpush1.msra.mxu0 %v3159
        %3329 = vmatprep.subr.mxu0 %v3162
        %3330 = vmatpush1.msra.mxu0 %v3161
        %3331 = vmatprep.subr.mxu0 %v3164
        %3332 = vmatpush1.msra.mxu0 %v3163
        %3333 = vmatprep.subr.mxu0 %v3166
        %3334 = vmatpush1.msra.mxu0 %v3165
        %3335 = vmatprep.subr.mxu0 %v3168
        %3336 = vmatpush1.msra.mxu0 %v3167
        %3337 = vmatprep.subr.mxu0 %v3170
        %3338 = vmatpush1.msra.mxu0 %v3169
        %3339 = vmatprep.subr.mxu0 %v3172
        %3340 = vmatpush1.msra.mxu0 %v3171
        %3341 = vmatprep.subr.mxu0 %v3174
        %3342 = vmatpush1.msra.mxu0 %v3173
        %3343 = vmatprep.subr.mxu0 %v3176
        %3344 = vmatpush1.msra.mxu0 %v3175
        %3345 = vmatprep.subr.mxu0 %v3178
        %3346 = vmatpush1.msra.mxu0 %v3177
        %3347 = vmatprep.subr.mxu0 %v3180
        %3348 = vmatpush1.msra.mxu0 %v3179
        %3349 = vmatprep.subr.mxu0 %v3182
        %3350 = vmatpush1.msra.mxu0 %v3181
        %3351 = vmatprep.subr.mxu0 %v3184
        %3352 = vmatpush1.msra.mxu0 %v3183
        %3353 = vmatprep.subr.mxu0 %v3186
        %3354 = vmatpush1.msra.mxu0 %v3185
        %3355 = vmatprep.subr.mxu0 %v3188
        %3356 = vmatpush1.msra.mxu0 %v3187
        %3357 = vmatprep.subr.mxu0 %v3190
        %3358 = vmatpush1.msra.mxu0 %v3189
        %3359 = vmatprep.subr.mxu0 %v3192
        %3360 = vmatpush1.msra.mxu0 %v3191
        %3361 = vmatprep.mubr.f32.mxu0 %v3274
        %3362 = vmatmul.mubr.f32.gmra.mrb[0].mxu0 %v3271
        %v3363 = vpop.f32.mrb[0].mxu0
        %v3364 = vadd.f32 %v3262, %v3363
        %v3365 = vpop.f32.mrb[0].mxu0
        %v3366 = vadd.f32 %v3266, %v3365
        %3367 = vmatprep.mubr.f32.mxu0 %v3284
        %3368 = vmatmul.mubr.f32.gmra.mrb[0].mxu0 %v3282
        %v3369 = vpop.f32.mrb[0].mxu0
        %v3370 = vadd.f32 %v3262, %v3369
        %v3371 = vpop.f32.mrb[0].mxu0
        %v3372 = vadd.f32 %v3266, %v3371
        %3373 = vdwg.mxu0
        %3374 = vmatprep.subr.mxu0 %v3194
        %3375 = vmatpush1.msra.mxu0 %v3193
        %3376 = vmatprep.subr.mxu0 %v3196
        %3377 = vmatpush1.msra.mxu0 %v3195
        %3378 = vmatprep.subr.mxu0 %v3198
        %3379 = vmatpush1.msra.mxu0 %v3197
        %3380 = vmatprep.subr.mxu0 %v3200
        %3381 = vmatpush1.msra.mxu0 %v3199
        %3382 = vmatprep.subr.mxu0 %v3202
        %3383 = vmatpush1.msra.mxu0 %v3201
        %3384 = vmatprep.subr.mxu0 %v3204
        %3385 = vmatpush1.msra.mxu0 %v3203
        %3386 = vmatprep.subr.mxu0 %v3206
        %3387 = vmatpush1.msra.mxu0 %v3205
        %3388 = vmatprep.subr.mxu0 %v3208
        %3389 = vmatpush1.msra.mxu0 %v3207
        %3390 = vmatprep.subr.mxu0 %v3210
        %3391 = vmatpush1.msra.mxu0 %v3209
        %3392 = vmatprep.subr.mxu0 %v3212
        %3393 = vmatpush1.msra.mxu0 %v3211
        %3394 = vmatprep.subr.mxu0 %v3214
        %3395 = vmatpush1.msra.mxu0 %v3213
        %3396 = vmatprep.subr.mxu0 %v3216
        %3397 = vmatpush1.msra.mxu0 %v3215
        %3398 = vmatprep.subr.mxu0 %v3218
        %3399 = vmatpush1.msra.mxu0 %v3217
        %3400 = vmatprep.subr.mxu0 %v3220
        %3401 = vmatpush1.msra.mxu0 %v3219
        %3402 = vmatprep.subr.mxu0 %v3222
        %3403 = vmatpush1.msra.mxu0 %v3221
        %3404 = vmatprep.subr.mxu0 %v3224
        %3405 = vmatpush1.msra.mxu0 %v3223
        %3406 = vmatprep.subr.mxu0 %v3226
        %3407 = vmatpush1.msra.mxu0 %v3225
        %3408 = vmatprep.subr.mxu0 %v3228
        %3409 = vmatpush1.msra.mxu0 %v3227
        %3410 = vmatprep.subr.mxu0 %v3230
        %3411 = vmatpush1.msra.mxu0 %v3229
        %3412 = vmatprep.subr.mxu0 %v3232
        %3413 = vmatpush1.msra.mxu0 %v3231
        %3414 = vmatprep.subr.mxu0 %v3234
        %3415 = vmatpush1.msra.mxu0 %v3233
        %3416 = vmatprep.subr.mxu0 %v3236
        %3417 = vmatpush1.msra.mxu0 %v3235
        %3418 = vmatprep.subr.mxu0 %v3238
        %3419 = vmatpush1.msra.mxu0 %v3237
        %3420 = vmatprep.subr.mxu0 %v3240
        %3421 = vmatpush1.msra.mxu0 %v3239
        %3422 = vmatprep.subr.mxu0 %v3242
        %3423 = vmatpush1.msra.mxu0 %v3241
        %3424 = vmatprep.subr.mxu0 %v3244
        %3425 = vmatpush1.msra.mxu0 %v3243
        %3426 = vmatprep.subr.mxu0 %v3246
        %3427 = vmatpush1.msra.mxu0 %v3245
        %3428 = vmatprep.subr.mxu0 %v3248
        %3429 = vmatpush1.msra.mxu0 %v3247
        %3430 = vmatprep.subr.mxu0 %v3250
        %3431 = vmatpush1.msra.mxu0 %v3249
        %3432 = vmatprep.subr.mxu0 %v3252
        %3433 = vmatpush1.msra.mxu0 %v3251
        %3434 = vmatprep.subr.mxu0 %v3254
        %3435 = vmatpush1.msra.mxu0 %v3253
        %3436 = vmatprep.subr.mxu0 %v3256
        %3437 = vmatpush1.msra.mxu0 %v3255
        %3438 = vmatprep.mubr.f32.mxu0 %v3280
        %3439 = vmatmul.mubr.f32.gmra.mrb[0].mxu0 %v3277
        %v3440 = vpop.f32.mrb[0].mxu0
        %v3441 = vadd.f32 %v3364, %v3440
        %v3442 = vpop.f32.mrb[0].mxu0
        %v3443 = vadd.f32 %v3366, %v3442
        %3444 = vmatprep.mubr.f32.mxu0 %v3288
        %3445 = vmatmul.mubr.f32.gmra.mrb[0].mxu0 %v3286
        %v3446 = vpop.f32.mrb[0].mxu0
        %v3447 = vadd.f32 %v3370, %v3446
        %v3448 = vpop.f32.mrb[0].mxu0
        %v3449 = vadd.f32 %v3372, %v3448
        %3450 = vdwg.mxu0
        %v3451 = vld [vmem:[%s454] sm:$0xff]
        %v3452 = vld [vmem:[%s454 + $0x8] sm:$0xff]
        %v3453 = vld [vmem:[%s454 + $0x10] sm:$0xff]
        %v3454 = vld [vmem:[%s454 + $0x18] sm:$0xff]
        %v3455 = vadd.f32 %v3441, %v3451
        %v3456 = vadd.f32 %v3443, %v3452
        %v3457 = vadd.f32 %v3447, %v3453
        %v3458 = vadd.f32 %v3449, %v3454
        %3459 = vst [vmem:[%s518] sm:$0xff] %v3455
        %3460 = vst [vmem:[%s518 + $0x8] sm:$0xff] %v3456
        %3461 = vst [vmem:[%s518 + $0x10] sm:$0xff] %v3457
        %3462 = vst [vmem:[%s518 + $0x18] sm:$0xff] %v3458
        %s3463 = sand.u32 %s297, 1
        %s3464 = scalar_lea.sflag [#allocation5], %s3463
        %s3465 = sand.u32 %s297, 1
        %s3466 = smul.addr %s3465, 32
        %s3467 = scalar_lea.vmem [#allocation15], %s3466
        // Predicated region
        $region97: #{tpu_custom_call.1} parent=67 // pred_check
          %p3468 = pneg %p307
        $region98: #{tpu_custom_call.1} parent=67 // pred_check_branch
          %3470 = sbr.rel (%p3468) target = $region100
        $region99: #{tpu_custom_call.1} parent=67 // pred_region
          %s3472 = ssub.s32 512, 512
          %3473 = vsyncadd %s3464, %s3472
          %s3474 = smul.addr %s32, 4
          %s3475 = smul.addr %s3474, 128
          %s3476 = scalar_lea.hbm %s12, %s3475
          %s3477 = sshll.u32 %s3467, 4
          %s3478 = int_to_ptr.vmem [resolvable:$true] %s3477
          %3483 = dma.vmem_to_hbm [thread:$0]  %s3478, 512, %s3476, %s3464, 256, 256, 16
        $region100: #{tpu_custom_call.1} parent=67 // pred_fallthru
          _
      $region68: #{tpu_custom_call.1} parent=5 // pred_fallthru
        _
      %p3484 = scmp.le.s32.totalorder 2, %s27
      // Predicated region
      $region101: #{tpu_custom_call.1} parent=5 // pred_check
        %p3485 = pneg %p3484
      $region102: #{tpu_custom_call.1} parent=5 // pred_check_branch
        %3487 = sbr.rel (%p3485) target = $region104
      $region103: #{tpu_custom_call.1} parent=5 // pred_region
        %s3488 = ssub.s32 %s27, 2
        // Predicated region
        $region105: #{tpu_custom_call.1} parent=103 // pred_check
          %p3489 = pneg %p313
        $region106: #{tpu_custom_call.1} parent=103 // pred_check_branch
          %3491 = sbr.rel (%p3489) target = $region108
        $region107: #{tpu_custom_call.1} parent=103 // pred_region
          %s3492 = sand.u32 %s298, 1
          %s3493 = scalar_lea.sflag [#allocation5], %s3492
          %s3494 = sand.u32 %s298, 1
          %s3495 = smul.addr %s3494, 32
          %s3496 = scalar_lea.vmem [#allocation15], %s3495
          %3497 = dma.done %s3493, 512
        $region108: #{tpu_custom_call.1} parent=103 // pred_fallthru
          _
      $region104: #{tpu_custom_call.1} parent=5 // pred_fallthru
        _
    $region6: #{tpu_custom_call.1} parent=1 // loop_footer
      %s31 = sadd.s32 1, %s27
    $region7: #{tpu_custom_call.1} parent=1 // loop_footer_branch
      %26 = sbr.rel target = $region3
    $region8: #{tpu_custom_call.1} parent=1 // loop_exit
      _
    %3498 = vsyncpa [#allocation4], 1
    %s3499 = scalar_lea.sflag [#allocation4], 1
    %3500 = vsyncpa %s3499, 1
    %3501 = vsyncpa [#allocation7], 1
    %3502 = vsyncpa [#allocation10], 1
    %3503 = vsyncpa [#allocation13], 1
    %3504 = vsyncpa [#allocation5], 1
    %s3505 = scalar_lea.sflag [#allocation5], 1
    %3506 = vsyncpa %s3505, 1

</llo_original>
